<compile_context>
chip_gen: v7x
topology: tpu7x:2x2x1
jax: 0.10.0
libtpu: 0.0.40
codegen_flags: <defaults>
</compile_context>

<pallas_src>
import jax
import jax.numpy as jnp
from jax import lax
from jax.experimental import pallas as pl
from jax.experimental.pallas import tpu as pltpu

# ----------------------------- model config (small, synthetic) ---------------
B          = 2           # batch
C_IN       = 3           # RGB
IMG_SIZE   = 32          # stand-in for the 224 of the real transform
PATCH      = 8           # DINO ViT-S/8 style patch size
HP         = IMG_SIZE // PATCH          # patches per side  (4)
NTOK       = HP * HP                    # tokens            (16)
KIN        = C_IN * PATCH * PATCH       # patch dim         (192)
KTOT       = KIN + NTOK                 # patch dim + one-hot token cols (208)
D          = 32          # hidden size
NHEADS     = 2
DH         = D // NHEADS
DM         = 64          # MLP hidden
NLAYERS    = 2           # transformer depth
RANK       = 4           # LoRA rank (on q and v projections)
ALPHA      = 4
LORA_SCALE = ALPHA / RANK
CODE_DIM   = 16          # STEGO segmentation-head code dim
OUT_LANES  = 128         # lane-dense (unmasked) output width
NVEC       = 10          # packed per-layer vector rows

IMAGENET_MEAN = jnp.array([0.485, 0.456, 0.406], jnp.float32)
IMAGENET_STD  = jnp.array([0.229, 0.224, 0.225], jnp.float32)


# ----------------------------- the fused Pallas kernel -----------------------
def make_kernel(bt):
    """Kernel closed over the per-grid-step image count (device dependent)."""
    rows = bt * NTOK

    def dino_code_kernel(patches_ref, wpe_ref,
                         wqkv_ref, wo_ref, w1_ref, w2_ref, lvec_ref,
                         wc1_ref, wn1_ref, wn2_ref, hvec_ref,
                         out_ref):
        f32, bf16 = jnp.float32, jnp.bfloat16

        def mm(a, b):
            # bf16 operands, f32 accumulation on the MXU
            return jnp.dot(a, b, preferred_element_type=f32)

        def layer_norm(v, g, b):
            # DINO / timm ViT uses LayerNorm(eps=1e-6)
            mu = jnp.mean(v, axis=-1, keepdims=True)
            var = jnp.mean((v - mu) ** 2, axis=-1, keepdims=True)
            return (v - mu) * lax.rsqrt(var + 1e-6) * g + b

        # --- patch embedding. ImageNet normalization, the embed bias and the
        #     positional embedding are all folded into wpe (one-hot token
        #     columns in `patches` select the pos rows appended to wpe).
        x = mm(patches_ref[...], wpe_ref[...])                    # (rows, D) f32

        # --- transformer blocks (LoRA already merged into wqkv on the host)
        for l in range(NLAYERS):                                  # static unroll
            lv = lvec_ref[l]                                      # (NVEC, DM) f32
            ln1_g, ln1_b = lv[0:1, :D], lv[1:2, :D]
            bq, bk, bv   = lv[2:3, :D], lv[3:4, :D], lv[4:5, :D]
            bo           = lv[5:6, :D]
            ln2_g, ln2_b = lv[6:7, :D], lv[7:8, :D]
            b1, b2       = lv[8:9, :], lv[9:10, :D]

            h = layer_norm(x, ln1_g, ln1_b).astype(bf16)          # cast once
            # fused q|k|v projection: one 96-lane MXU push
            qkv = mm(h, wqkv_ref[l])                              # (rows, 3D) f32
            q = qkv[:, 0 * D:1 * D] + bq
            k = qkv[:, 1 * D:2 * D] + bk
            v = qkv[:, 2 * D:3 * D] + bv

            # (rows, D) -> (bt, NTOK, D): per-sample attention, batched over bt
            q3 = q.astype(bf16).reshape(bt, NTOK, D)
            k3 = k.astype(bf16).reshape(bt, NTOK, D)
            v3 = v.astype(bf16).reshape(bt, NTOK, D)

            heads = []
            for hh in range(NHEADS):                              # static unroll
                sl = slice(hh * DH, (hh + 1) * DH)
                s = jnp.einsum('bqd,bkd->bqk', q3[..., sl], k3[..., sl],
                               preferred_element_type=f32)
                s = s - jnp.max(s, axis=-1, keepdims=True)
                e = jnp.exp(s)
                p = e * pl.reciprocal(jnp.sum(e, axis=-1, keepdims=True),
                                      approx=True)
                heads.append(jnp.einsum('bqk,bkd->bqd', p.astype(bf16),
                                        v3[..., sl],
                                        preferred_element_type=f32))
            o = jnp.concatenate(heads, axis=-1).reshape(rows, D).astype(bf16)
            x = x + mm(o, wo_ref[l]) + bo

            h2 = layer_norm(x, ln2_g, ln2_b).astype(bf16)
            # TODO(synk): PyTorch nn.GELU uses exact erf; tanh approximation here.
            m = jax.nn.gelu(mm(h2, w1_ref[l]) + b1, approximate=True).astype(bf16)
            x = x + mm(m, w2_ref[l]) + b2

        # --- final LayerNorm (DINO) + STEGO seg head (linear + nonlinear branch)
        hv = hvec_ref[...]                                        # (5, 128) f32
        lnf_g, lnf_b = hv[0:1, :D], hv[1:2, :D]
        bn1          = hv[2:3, :D]
        bc1, bn2     = hv[3:4, :], hv[4:5, :]

        feats = layer_norm(x, lnf_g, lnf_b).astype(bf16)
        c1 = mm(feats, wc1_ref[...]) + bc1
        hn = jnp.maximum(mm(feats, wn1_ref[...]) + bn1, 0.0).astype(bf16)
        c2 = mm(hn, wn2_ref[...]) + bn2
        # head weights are zero-padded to 128 lanes -> unmasked 128-lane stores
        out_ref[...] = (c1 + c2).astype(out_ref.dtype)

    return dino_code_kernel


# ----------------------------- glue ------------------------------------------
def _rep_spec(shape):
    """Full-array block, replicated across the batch grid axis."""
    nd = len(shape)
    return pl.BlockSpec(shape, lambda i: (0,) * nd)


def _grid_steps(nimg):
    """Single fat step on single-TC chips (v5e/v6e); 2 parallel steps on v7x."""
    try:
        kind = jax.devices()[0].device_kind.lower()
    except Exception:
        kind = ""
    if "v7" in kind and nimg % 2 == 0:
        return 2
    return 1


def run_code(params, imgs):
    """imgs: (N, 3, S, S) NCHW float32 -> code (N, CODE_DIM, HP, HP)."""
    nimg = imgs.shape[0]
    steps = _grid_steps(nimg)
    bt = nimg // steps
    rows = bt * NTOK

    # im2col patch extraction (pure reshuffle -> host glue), token-major rows;
    # append one-hot token columns that select the pos-embedding rows of wpe.
    patches = (imgs.reshape(nimg, C_IN, HP, PATCH, HP, PATCH)
                   .transpose(0, 2, 4, 1, 3, 5)
                   .reshape(nimg * NTOK, KIN))
    onehot = jnp.tile(jnp.eye(NTOK, dtype=patches.dtype), (nimg, 1))
    patches_aug = jnp.concatenate([patches, onehot], axis=1).astype(jnp.bfloat16)

    args = [patches_aug,
            params["w_pe_aug"],
            params["wqkv"], params["wo"], params["w1"], params["w2"],
            params["lvecs"],
            params["wc1"], params["wn1"], params["wn2"], params["hvecs"]]

    in_specs = ([pl.BlockSpec((rows, KTOT), lambda i: (i, 0))]
                + [_rep_spec(a.shape) for a in args[1:]])

    out = pl.pallas_call(
        make_kernel(bt),
        out_shape=jax.ShapeDtypeStruct((nimg * NTOK, OUT_LANES), jnp.float32),
        grid=(steps,),
        in_specs=in_specs,
        out_specs=pl.BlockSpec((rows, OUT_LANES), lambda i: (i, 0)),
        compiler_params=pltpu.CompilerParams(
            dimension_semantics=("parallel",)),   # shards across v7x's 2 TCs
    )(*args)

    # lane-dense slab -> (N, CODE_DIM, HP, HP) NCHW code map (host glue)
    code = out[:, :CODE_DIM].reshape(nimg, HP, HP, CODE_DIM)
    return code.transpose(0, 3, 1, 2)


def transform(x, size=IMG_SIZE):
    """T.Resize(size, NEAREST) + T.CenterCrop(size); Normalize is folded into weights."""
    _, _, h, w = x.shape
    if min(h, w) != size:
        # torchvision tensor-path nearest: short side == size, src = floor(dst*in/out)
        if h <= w:
            nh, nw = size, int(size * w / h)
        else:
            nh, nw = int(size * h / w), size
        ri = (jnp.arange(nh) * h // nh).astype(jnp.int32)
        ci = (jnp.arange(nw) * w // nw).astype(jnp.int32)
        x = x[:, :, ri, :][:, :, :, ci]
        h, w = nh, nw
    top, left = (h - size) // 2, (w - size) // 2
    return x[:, :, top:top + size, left:left + size]


def dino_with_lora_forward(params, x):
    """DINOWithLoRA.forward: transform -> Stego.get_code (flip-averaged code).

    The un-flipped and flipped passes are stacked along batch so the whole
    forward is a single pallas_call."""
    xr = transform(x)
    xs = jnp.concatenate([xr, xr[:, :, :, ::-1]], axis=0)   # [x, x.flip(dims=[3])]
    codes = run_code(params, xs)
    b = x.shape[0]
    return 0.5 * (codes[:b] + codes[b:, :, :, ::-1])


# ----------------------------- parameters ------------------------------------
def init_params(key):
    """Deterministic stand-in for Stego.load_from_checkpoint (raw f32 params)."""
    def nrm(k, shape, std=0.02):
        return std * jax.random.normal(k, shape, jnp.float32)

    ks = iter(jax.random.split(key, 24))
    p = {}
    p["w_pe"] = nrm(next(ks), (KIN, D)); p["b_pe"] = jnp.zeros((1, D))
    p["pos"]  = nrm(next(ks), (NTOK, D))
    p["ln1_g"] = jnp.ones((NLAYERS, 1, D)); p["ln1_b"] = jnp.zeros((NLAYERS, 1, D))
    p["wq"] = nrm(next(ks), (NLAYERS, D, D)); p["bq"] = jnp.zeros((NLAYERS, 1, D))
    # real LoRA inits B to zero; random here so the adapter path is exercised
    p["aq"] = nrm(next(ks), (NLAYERS, D, RANK)); p["bqu"] = nrm(next(ks), (NLAYERS, RANK, D))
    p["wk"] = nrm(next(ks), (NLAYERS, D, D)); p["bk"] = jnp.zeros((NLAYERS, 1, D))
    p["wv"] = nrm(next(ks), (NLAYERS, D, D)); p["bv"] = jnp.zeros((NLAYERS, 1, D))
    p["av"] = nrm(next(ks), (NLAYERS, D, RANK)); p["bvu"] = nrm(next(ks), (NLAYERS, RANK, D))
    p["wo"] = nrm(next(ks), (NLAYERS, D, D)); p["bo"] = jnp.zeros((NLAYERS, 1, D))
    p["ln2_g"] = jnp.ones((NLAYERS, 1, D)); p["ln2_b"] = jnp.zeros((NLAYERS, 1, D))
    p["w1"] = nrm(next(ks), (NLAYERS, D, DM)); p["b1"] = jnp.zeros((NLAYERS, 1, DM))
    p["w2"] = nrm(next(ks), (NLAYERS, DM, D)); p["b2"] = jnp.zeros((NLAYERS, 1, D))
    p["lnf_g"] = jnp.ones((1, D)); p["lnf_b"] = jnp.zeros((1, D))
    p["wc1"] = nrm(next(ks), (D, CODE_DIM)); p["bc1"] = jnp.zeros((1, CODE_DIM))
    p["wn1"] = nrm(next(ks), (D, D));        p["bn1"] = jnp.zeros((1, D))
    p["wn2"] = nrm(next(ks), (D, CODE_DIM)); p["bn2"] = jnp.zeros((1, CODE_DIM))
    return p


def fold_params(p):
    """Host-side folding: LoRA merge, QKV fusion, normalization / attention /
    LoRA scales, pos-embed fused into patch-embed, small-vector packing,
    lane-padded seg head, bf16 matmul weights."""
    bf16 = jnp.bfloat16
    mean = jnp.repeat(IMAGENET_MEAN, PATCH * PATCH)          # (KIN,)
    istd = 1.0 / jnp.repeat(IMAGENET_STD, PATCH * PATCH)     # (KIN,)
    inv_sqrt_dh = 1.0 / (DH ** 0.5)

    q = {}
    # --- patch embed: fold ImageNet norm into W; fold (bias + pos) into extra
    #     rows selected by the one-hot token columns appended to the patches.
    w_pe_norm = istd[:, None] * p["w_pe"]                     # (KIN, D)
    b_pe_eff = p["b_pe"] - (mean * istd) @ p["w_pe"]          # (1, D)
    pos_eff = p["pos"] + b_pe_eff                             # (NTOK, D)
    q["w_pe_aug"] = jnp.concatenate([w_pe_norm, pos_eff], axis=0).astype(bf16)

    # --- merge LoRA adapters into base q/v weights; fold 1/sqrt(DH) into q.
    wq_eff = (p["wq"] + LORA_SCALE * jnp.einsum('ldr,lre->lde', p["aq"], p["bqu"]))
    wq_eff = wq_eff * inv_sqrt_dh
    wv_eff = p["wv"] + LORA_SCALE * jnp.einsum('ldr,lre->lde', p["av"], p["bvu"])
    bq_eff = p["bq"] * inv_sqrt_dh

    # --- fuse q|k|v into one (D, 3D) weight per layer
    q["wqkv"] = jnp.concatenate([wq_eff, p["wk"], wv_eff], axis=-1).astype(bf16)
    q["wo"] = p["wo"].astype(bf16)
    q["w1"] = p["w1"].astype(bf16)
    q["w2"] = p["w2"].astype(bf16)

    # --- pack all per-layer small vectors into one (NLAYERS, NVEC, DM) slab
    def pad_row(v):                                           # (NLAYERS,1,w)->(NLAYERS,1,DM)
        return jnp.pad(v, ((0, 0), (0, 0), (0, DM - v.shape[-1])))
    lvec_rows = [p["ln1_g"], p["ln1_b"], bq_eff, p["bk"], p["bv"], p["bo"],
                 p["ln2_g"], p["ln2_b"], p["b1"], p["b2"]]
    q["lvecs"] = jnp.concatenate([pad_row(r) for r in lvec_rows], axis=1)

    # --- seg head: zero-pad output columns to 128 lanes -> unmasked stores
    def pad_lanes(w):
        return jnp.pad(w, ((0, 0), (0, OUT_LANES - w.shape[-1])))
    q["wc1"] = pad_lanes(p["wc1"]).astype(bf16)
    q["wn1"] = p["wn1"].astype(bf16)
    q["wn2"] = pad_lanes(p["wn2"]).astype(bf16)

    # --- pack final-LN / seg-head vectors into one (5, 128) slab
    hvec_rows = [p["lnf_g"], p["lnf_b"], p["bn1"], p["bc1"], p["bn2"]]
    q["hvecs"] = jnp.concatenate([pad_lanes(r) for r in hvec_rows], axis=0)
    return q


# ----------------------------- main -------------------------------------------
if __name__ == "__main__":
    key = jax.random.PRNGKey(0)
    kx, kp = jax.random.split(key)
    x = jax.random.uniform(kx, (B, C_IN, IMG_SIZE, IMG_SIZE), jnp.float32)
    params = fold_params(init_params(kp))

    fwd = jax.jit(dino_with_lora_forward)
    code = fwd(params, x)
    code = jax.block_until_ready(code)

    assert code.shape == (B, CODE_DIM, HP, HP), code.shape
    assert code.dtype == jnp.float32
    assert bool(jnp.all(jnp.isfinite(code)))
    print("KERNEL_OK")
</pallas_src>

<mosaic_0001>
module attributes {stable_mosaic.version = 11 : i64} {
  func.func @dino_code_kernel(%arg0: i32, %arg1: memref<64x208xbf16, #tpu.memory_space<vmem>>, %arg2: memref<208x32xbf16, #tpu.memory_space<vmem>>, %arg3: memref<2x32x96xbf16, #tpu.memory_space<vmem>>, %arg4: memref<2x32x32xbf16, #tpu.memory_space<vmem>>, %arg5: memref<2x32x64xbf16, #tpu.memory_space<vmem>>, %arg6: memref<2x64x32xbf16, #tpu.memory_space<vmem>>, %arg7: memref<2x10x64xf32, #tpu.memory_space<vmem>>, %arg8: memref<32x128xbf16, #tpu.memory_space<vmem>>, %arg9: memref<32x32xbf16, #tpu.memory_space<vmem>>, %arg10: memref<32x128xbf16, #tpu.memory_space<vmem>>, %arg11: memref<5x128xf32, #tpu.memory_space<vmem>>, %arg12: memref<64x128xf32, #tpu.memory_space<vmem>>) attributes {dimension_semantics = [#tpu.dimension_semantics<parallel>], iteration_bounds = array<i64: 1>, scalar_prefetch = 0 : i64, scratch_operands = 0 : i64, tpu.core_type = #tpu.core_type<tc>, window_params = [{transform_indices = @transform_0, window_bounds = array<i64: 64, 208>}, {pipeline_mode = #tpu.pipeline_mode<synchronous>, transform_indices = @transform_1, window_bounds = array<i64: 208, 32>}, {pipeline_mode = #tpu.pipeline_mode<synchronous>, transform_indices = @transform_2, window_bounds = array<i64: 2, 32, 96>}, {pipeline_mode = #tpu.pipeline_mode<synchronous>, transform_indices = @transform_3, window_bounds = array<i64: 2, 32, 32>}, {pipeline_mode = #tpu.pipeline_mode<synchronous>, transform_indices = @transform_4, window_bounds = array<i64: 2, 32, 64>}, {pipeline_mode = #tpu.pipeline_mode<synchronous>, transform_indices = @transform_5, window_bounds = array<i64: 2, 64, 32>}, {pipeline_mode = #tpu.pipeline_mode<synchronous>, transform_indices = @transform_6, window_bounds = array<i64: 2, 10, 64>}, {pipeline_mode = #tpu.pipeline_mode<synchronous>, transform_indices = @transform_7, window_bounds = array<i64: 32, 128>}, {pipeline_mode = #tpu.pipeline_mode<synchronous>, transform_indices = @transform_8, window_bounds = array<i64: 32, 32>}, {pipeline_mode = #tpu.pipeline_mode<synchronous>, transform_indices = @transform_9, window_bounds = array<i64: 32, 128>}, {pipeline_mode = #tpu.pipeline_mode<synchronous>, transform_indices = @transform_10, window_bounds = array<i64: 5, 128>}, {transform_indices = @transform_11, window_bounds = array<i64: 64, 128>}]} {
    %c0 = arith.constant 0 : index
    %c0_0 = arith.constant 0 : index
    %0 = vector.load %arg1[%c0, %c0_0] : memref<64x208xbf16, #tpu.memory_space<vmem>>, vector<64x208xbf16>
    %c0_1 = arith.constant 0 : index
    %c0_2 = arith.constant 0 : index
    %1 = vector.load %arg2[%c0_1, %c0_2] : memref<208x32xbf16, #tpu.memory_space<vmem>>, vector<208x32xbf16>
    %cst = arith.constant dense<0.000000e+00> : vector<64x32xf32>
    %2 = tpu.matmul %0, %1, %cst {dimension_numbers = #tpu.dot_dimension_numbers<[1], [0], [0], [1], [0, 0, 1, 1], [], []>} : vector<64x208xbf16>, vector<208x32xbf16>, vector<64x32xf32> -> vector<64x32xf32>
    %c0_3 = arith.constant 0 : index
    %c0_4 = arith.constant 0 : index
    %c0_5 = arith.constant 0 : index
    %3 = vector.load %arg7[%c0_3, %c0_4, %c0_5] : memref<2x10x64xf32, #tpu.memory_space<vmem>>, vector<1x10x64xf32>
    %4 = vector.shape_cast %3 : vector<1x10x64xf32> to vector<10x64xf32>
    %5 = vector.extract_strided_slice %4 {offsets = [0, 0], sizes = [1, 32], strides = [1, 1]} : vector<10x64xf32> to vector<1x32xf32>
    %6 = vector.extract_strided_slice %4 {offsets = [1, 0], sizes = [1, 32], strides = [1, 1]} : vector<10x64xf32> to vector<1x32xf32>
    %7 = vector.extract_strided_slice %4 {offsets = [2, 0], sizes = [1, 32], strides = [1, 1]} : vector<10x64xf32> to vector<1x32xf32>
    %8 = vector.extract_strided_slice %4 {offsets = [3, 0], sizes = [1, 32], strides = [1, 1]} : vector<10x64xf32> to vector<1x32xf32>
    %9 = vector.extract_strided_slice %4 {offsets = [4, 0], sizes = [1, 32], strides = [1, 1]} : vector<10x64xf32> to vector<1x32xf32>
    %10 = vector.extract_strided_slice %4 {offsets = [5, 0], sizes = [1, 32], strides = [1, 1]} : vector<10x64xf32> to vector<1x32xf32>
    %11 = vector.extract_strided_slice %4 {offsets = [6, 0], sizes = [1, 32], strides = [1, 1]} : vector<10x64xf32> to vector<1x32xf32>
    %12 = vector.extract_strided_slice %4 {offsets = [7, 0], sizes = [1, 32], strides = [1, 1]} : vector<10x64xf32> to vector<1x32xf32>
    %13 = vector.extract_strided_slice %4 {offsets = [8, 0], sizes = [1, 64], strides = [1, 1]} : vector<10x64xf32> to vector<1x64xf32>
    %14 = vector.extract_strided_slice %4 {offsets = [9, 0], sizes = [1, 32], strides = [1, 1]} : vector<10x64xf32> to vector<1x32xf32>
    %cst_6 = arith.constant dense<0.000000e+00> : vector<64xf32>
    %15 = vector.multi_reduction <add>, %2, %cst_6 [1] : vector<64x32xf32> to vector<64xf32>
    %16 = vector.shape_cast %15 : vector<64xf32> to vector<64x1xf32>
    %cst_7 = arith.constant 3.200000e+01 : f32
    %17 = vector.broadcast %cst_7 : f32 to vector<64x1xf32>
    %18 = arith.divf %16, %17 : vector<64x1xf32>
    %19 = vector.broadcast %18 : vector<64x1xf32> to vector<64x32xf32>
    %20 = arith.subf %2, %19 : vector<64x32xf32>
    %21 = arith.mulf %20, %20 : vector<64x32xf32>
    %cst_8 = arith.constant dense<0.000000e+00> : vector<64xf32>
    %22 = vector.multi_reduction <add>, %21, %cst_8 [1] : vector<64x32xf32> to vector<64xf32>
    %23 = vector.shape_cast %22 : vector<64xf32> to vector<64x1xf32>
    %cst_9 = arith.constant 3.200000e+01 : f32
    %24 = vector.broadcast %cst_9 : f32 to vector<64x1xf32>
    %25 = arith.divf %23, %24 : vector<64x1xf32>
    %26 = vector.broadcast %18 : vector<64x1xf32> to vector<64x32xf32>
    %27 = arith.subf %2, %26 : vector<64x32xf32>
    %cst_10 = arith.constant 9.99999997E-7 : f32
    %28 = vector.broadcast %cst_10 : f32 to vector<64x1xf32>
    %29 = arith.addf %25, %28 : vector<64x1xf32>
    %30 = math.rsqrt %29 : vector<64x1xf32>
    %31 = vector.broadcast %30 : vector<64x1xf32> to vector<64x32xf32>
    %32 = arith.mulf %27, %31 : vector<64x32xf32>
    %33 = vector.broadcast %5 : vector<1x32xf32> to vector<64x32xf32>
    %34 = arith.mulf %32, %33 : vector<64x32xf32>
    %35 = vector.broadcast %6 : vector<1x32xf32> to vector<64x32xf32>
    %36 = arith.addf %34, %35 : vector<64x32xf32>
    %37 = arith.truncf %36 : vector<64x32xf32> to vector<64x32xbf16>
    %c0_11 = arith.constant 0 : index
    %c0_12 = arith.constant 0 : index
    %c0_13 = arith.constant 0 : index
    %38 = vector.load %arg3[%c0_11, %c0_12, %c0_13] : memref<2x32x96xbf16, #tpu.memory_space<vmem>>, vector<1x32x96xbf16>
    %39 = vector.shape_cast %38 : vector<1x32x96xbf16> to vector<32x96xbf16>
    %cst_14 = arith.constant dense<0.000000e+00> : vector<64x96xf32>
    %40 = tpu.matmul %37, %39, %cst_14 {dimension_numbers = #tpu.dot_dimension_numbers<[1], [0], [0], [1], [0, 0, 1, 1], [], []>} : vector<64x32xbf16>, vector<32x96xbf16>, vector<64x96xf32> -> vector<64x96xf32>
    %41 = vector.extract_strided_slice %40 {offsets = [0, 0], sizes = [64, 32], strides = [1, 1]} : vector<64x96xf32> to vector<64x32xf32>
    %42 = vector.broadcast %7 : vector<1x32xf32> to vector<64x32xf32>
    %43 = arith.addf %41, %42 : vector<64x32xf32>
    %44 = vector.extract_strided_slice %40 {offsets = [0, 32], sizes = [64, 32], strides = [1, 1]} : vector<64x96xf32> to vector<64x32xf32>
    %45 = vector.broadcast %8 : vector<1x32xf32> to vector<64x32xf32>
    %46 = arith.addf %44, %45 : vector<64x32xf32>
    %47 = vector.extract_strided_slice %40 {offsets = [0, 64], sizes = [64, 32], strides = [1, 1]} : vector<64x96xf32> to vector<64x32xf32>
    %48 = vector.broadcast %9 : vector<1x32xf32> to vector<64x32xf32>
    %49 = arith.addf %47, %48 : vector<64x32xf32>
    %50 = arith.truncf %43 : vector<64x32xf32> to vector<64x32xbf16>
    %51 = vector.shape_cast %50 : vector<64x32xbf16> to vector<4x16x32xbf16>
    %52 = arith.truncf %46 : vector<64x32xf32> to vector<64x32xbf16>
    %53 = vector.shape_cast %52 : vector<64x32xbf16> to vector<4x16x32xbf16>
    %54 = arith.truncf %49 : vector<64x32xf32> to vector<64x32xbf16>
    %55 = vector.shape_cast %54 : vector<64x32xbf16> to vector<4x16x32xbf16>
    %56 = vector.extract_strided_slice %51 {offsets = [0, 0, 0], sizes = [4, 16, 16], strides = [1, 1, 1]} : vector<4x16x32xbf16> to vector<4x16x16xbf16>
    %57 = vector.extract_strided_slice %53 {offsets = [0, 0, 0], sizes = [4, 16, 16], strides = [1, 1, 1]} : vector<4x16x32xbf16> to vector<4x16x16xbf16>
    "tpu.trace_start"() <{level = 10 : i32, message = "bqd,bkd->bqk"}> : () -> ()
    %cst_15 = arith.constant dense<0.000000e+00> : vector<4x16x16xf32>
    %58 = tpu.matmul %56, %57, %cst_15 {dimension_numbers = #tpu.dot_dimension_numbers<[2], [2], [1], [1], [0, 0, 0, 1, 1, 1], [0], [0]>} : vector<4x16x16xbf16>, vector<4x16x16xbf16>, vector<4x16x16xf32> -> vector<4x16x16xf32>
    "tpu.trace_stop"() : () -> ()
    %cst_16 = arith.constant dense<0xFF800000> : vector<4x16xf32>
    %59 = vector.multi_reduction <maximumf>, %58, %cst_16 [2] : vector<4x16x16xf32> to vector<4x16xf32>
    %60 = vector.shape_cast %59 : vector<4x16xf32> to vector<4x16x1xf32>
    %61 = vector.broadcast %60 : vector<4x16x1xf32> to vector<4x16x16xf32>
    %62 = arith.subf %58, %61 : vector<4x16x16xf32>
    %63 = math.exp %62 : vector<4x16x16xf32>
    %cst_17 = arith.constant dense<0.000000e+00> : vector<4x16xf32>
    %64 = vector.multi_reduction <add>, %63, %cst_17 [2] : vector<4x16x16xf32> to vector<4x16xf32>
    %65 = vector.shape_cast %64 : vector<4x16xf32> to vector<4x16x1xf32>
    %66 = tpu.reciprocal %65 {approx = true} : vector<4x16x1xf32> -> vector<4x16x1xf32>
    %67 = vector.broadcast %66 : vector<4x16x1xf32> to vector<4x16x16xf32>
    %68 = arith.mulf %63, %67 : vector<4x16x16xf32>
    %69 = arith.truncf %68 : vector<4x16x16xf32> to vector<4x16x16xbf16>
    %70 = vector.extract_strided_slice %55 {offsets = [0, 0, 0], sizes = [4, 16, 16], strides = [1, 1, 1]} : vector<4x16x32xbf16> to vector<4x16x16xbf16>
    "tpu.trace_start"() <{level = 10 : i32, message = "bqk,bkd->bqd"}> : () -> ()
    %cst_18 = arith.constant dense<0.000000e+00> : vector<4x16x16xf32>
    %71 = tpu.matmul %69, %70, %cst_18 {dimension_numbers = #tpu.dot_dimension_numbers<[2], [1], [1], [2], [0, 0, 0, 1, 1, 2], [0], [0]>} : vector<4x16x16xbf16>, vector<4x16x16xbf16>, vector<4x16x16xf32> -> vector<4x16x16xf32>
    "tpu.trace_stop"() : () -> ()
    %72 = vector.extract_strided_slice %51 {offsets = [0, 0, 16], sizes = [4, 16, 16], strides = [1, 1, 1]} : vector<4x16x32xbf16> to vector<4x16x16xbf16>
    %73 = vector.extract_strided_slice %53 {offsets = [0, 0, 16], sizes = [4, 16, 16], strides = [1, 1, 1]} : vector<4x16x32xbf16> to vector<4x16x16xbf16>
    "tpu.trace_start"() <{level = 10 : i32, message = "bqd,bkd->bqk"}> : () -> ()
    %cst_19 = arith.constant dense<0.000000e+00> : vector<4x16x16xf32>
    %74 = tpu.matmul %72, %73, %cst_19 {dimension_numbers = #tpu.dot_dimension_numbers<[2], [2], [1], [1], [0, 0, 0, 1, 1, 1], [0], [0]>} : vector<4x16x16xbf16>, vector<4x16x16xbf16>, vector<4x16x16xf32> -> vector<4x16x16xf32>
    "tpu.trace_stop"() : () -> ()
    %cst_20 = arith.constant dense<0xFF800000> : vector<4x16xf32>
    %75 = vector.multi_reduction <maximumf>, %74, %cst_20 [2] : vector<4x16x16xf32> to vector<4x16xf32>
    %76 = vector.shape_cast %75 : vector<4x16xf32> to vector<4x16x1xf32>
    %77 = vector.broadcast %76 : vector<4x16x1xf32> to vector<4x16x16xf32>
    %78 = arith.subf %74, %77 : vector<4x16x16xf32>
    %79 = math.exp %78 : vector<4x16x16xf32>
    %cst_21 = arith.constant dense<0.000000e+00> : vector<4x16xf32>
    %80 = vector.multi_reduction <add>, %79, %cst_21 [2] : vector<4x16x16xf32> to vector<4x16xf32>
    %81 = vector.shape_cast %80 : vector<4x16xf32> to vector<4x16x1xf32>
    %82 = tpu.reciprocal %81 {approx = true} : vector<4x16x1xf32> -> vector<4x16x1xf32>
    %83 = vector.broadcast %82 : vector<4x16x1xf32> to vector<4x16x16xf32>
    %84 = arith.mulf %79, %83 : vector<4x16x16xf32>
    %85 = arith.truncf %84 : vector<4x16x16xf32> to vector<4x16x16xbf16>
    %86 = vector.extract_strided_slice %55 {offsets = [0, 0, 16], sizes = [4, 16, 16], strides = [1, 1, 1]} : vector<4x16x32xbf16> to vector<4x16x16xbf16>
    "tpu.trace_start"() <{level = 10 : i32, message = "bqk,bkd->bqd"}> : () -> ()
    %cst_22 = arith.constant dense<0.000000e+00> : vector<4x16x16xf32>
    %87 = tpu.matmul %85, %86, %cst_22 {dimension_numbers = #tpu.dot_dimension_numbers<[2], [1], [1], [2], [0, 0, 0, 1, 1, 2], [0], [0]>} : vector<4x16x16xbf16>, vector<4x16x16xbf16>, vector<4x16x16xf32> -> vector<4x16x16xf32>
    "tpu.trace_stop"() : () -> ()
    %88 = tpu.concatenate %71, %87 in 2 : vector<4x16x16xf32>, vector<4x16x16xf32> -> vector<4x16x32xf32>
    %89 = vector.shape_cast %88 : vector<4x16x32xf32> to vector<64x32xf32>
    %90 = arith.truncf %89 : vector<64x32xf32> to vector<64x32xbf16>
    %c0_23 = arith.constant 0 : index
    %c0_24 = arith.constant 0 : index
    %c0_25 = arith.constant 0 : index
    %91 = vector.load %arg4[%c0_23, %c0_24, %c0_25] : memref<2x32x32xbf16, #tpu.memory_space<vmem>>, vector<1x32x32xbf16>
    %92 = vector.shape_cast %91 : vector<1x32x32xbf16> to vector<32x32xbf16>
    %cst_26 = arith.constant dense<0.000000e+00> : vector<64x32xf32>
    %93 = tpu.matmul %90, %92, %cst_26 {dimension_numbers = #tpu.dot_dimension_numbers<[1], [0], [0], [1], [0, 0, 1, 1], [], []>} : vector<64x32xbf16>, vector<32x32xbf16>, vector<64x32xf32> -> vector<64x32xf32>
    %94 = arith.addf %2, %93 : vector<64x32xf32>
    %95 = vector.broadcast %10 : vector<1x32xf32> to vector<64x32xf32>
    %96 = arith.addf %94, %95 : vector<64x32xf32>
    %cst_27 = arith.constant dense<0.000000e+00> : vector<64xf32>
    %97 = vector.multi_reduction <add>, %96, %cst_27 [1] : vector<64x32xf32> to vector<64xf32>
    %98 = vector.shape_cast %97 : vector<64xf32> to vector<64x1xf32>
    %cst_28 = arith.constant 3.200000e+01 : f32
    %99 = vector.broadcast %cst_28 : f32 to vector<64x1xf32>
    %100 = arith.divf %98, %99 : vector<64x1xf32>
    %101 = vector.broadcast %100 : vector<64x1xf32> to vector<64x32xf32>
    %102 = arith.subf %96, %101 : vector<64x32xf32>
    %103 = arith.mulf %102, %102 : vector<64x32xf32>
    %cst_29 = arith.constant dense<0.000000e+00> : vector<64xf32>
    %104 = vector.multi_reduction <add>, %103, %cst_29 [1] : vector<64x32xf32> to vector<64xf32>
    %105 = vector.shape_cast %104 : vector<64xf32> to vector<64x1xf32>
    %cst_30 = arith.constant 3.200000e+01 : f32
    %106 = vector.broadcast %cst_30 : f32 to vector<64x1xf32>
    %107 = arith.divf %105, %106 : vector<64x1xf32>
    %108 = vector.broadcast %100 : vector<64x1xf32> to vector<64x32xf32>
    %109 = arith.subf %96, %108 : vector<64x32xf32>
    %cst_31 = arith.constant 9.99999997E-7 : f32
    %110 = vector.broadcast %cst_31 : f32 to vector<64x1xf32>
    %111 = arith.addf %107, %110 : vector<64x1xf32>
    %112 = math.rsqrt %111 : vector<64x1xf32>
    %113 = vector.broadcast %112 : vector<64x1xf32> to vector<64x32xf32>
    %114 = arith.mulf %109, %113 : vector<64x32xf32>
    %115 = vector.broadcast %11 : vector<1x32xf32> to vector<64x32xf32>
    %116 = arith.mulf %114, %115 : vector<64x32xf32>
    %117 = vector.broadcast %12 : vector<1x32xf32> to vector<64x32xf32>
    %118 = arith.addf %116, %117 : vector<64x32xf32>
    %119 = arith.truncf %118 : vector<64x32xf32> to vector<64x32xbf16>
    %c0_32 = arith.constant 0 : index
    %c0_33 = arith.constant 0 : index
    %c0_34 = arith.constant 0 : index
    %120 = vector.load %arg5[%c0_32, %c0_33, %c0_34] : memref<2x32x64xbf16, #tpu.memory_space<vmem>>, vector<1x32x64xbf16>
    %121 = vector.shape_cast %120 : vector<1x32x64xbf16> to vector<32x64xbf16>
    %cst_35 = arith.constant dense<0.000000e+00> : vector<64x64xf32>
    %122 = tpu.matmul %119, %121, %cst_35 {dimension_numbers = #tpu.dot_dimension_numbers<[1], [0], [0], [1], [0, 0, 1, 1], [], []>} : vector<64x32xbf16>, vector<32x64xbf16>, vector<64x64xf32> -> vector<64x64xf32>
    %123 = vector.broadcast %13 : vector<1x64xf32> to vector<64x64xf32>
    %124 = arith.addf %122, %123 : vector<64x64xf32>
    %125 = arith.mulf %124, %124 : vector<64x64xf32>
    %126 = arith.mulf %124, %125 : vector<64x64xf32>
    %cst_36 = arith.constant 4.471500e-02 : f32
    %127 = vector.broadcast %cst_36 : f32 to vector<64x64xf32>
    %128 = arith.mulf %127, %126 : vector<64x64xf32>
    %129 = arith.addf %124, %128 : vector<64x64xf32>
    %cst_37 = arith.constant 0.797884583 : f32
    %130 = vector.broadcast %cst_37 : f32 to vector<64x64xf32>
    %131 = arith.mulf %130, %129 : vector<64x64xf32>
    %132 = math.tanh %131 : vector<64x64xf32>
    %cst_38 = arith.constant 1.000000e+00 : f32
    %133 = vector.broadcast %cst_38 : f32 to vector<64x64xf32>
    %134 = arith.addf %133, %132 : vector<64x64xf32>
    %cst_39 = arith.constant 5.000000e-01 : f32
    %135 = vector.broadcast %cst_39 : f32 to vector<64x64xf32>
    %136 = arith.mulf %135, %134 : vector<64x64xf32>
    %137 = arith.mulf %124, %136 : vector<64x64xf32>
    %138 = arith.truncf %137 : vector<64x64xf32> to vector<64x64xbf16>
    %c0_40 = arith.constant 0 : index
    %c0_41 = arith.constant 0 : index
    %c0_42 = arith.constant 0 : index
    %139 = vector.load %arg6[%c0_40, %c0_41, %c0_42] : memref<2x64x32xbf16, #tpu.memory_space<vmem>>, vector<1x64x32xbf16>
    %140 = vector.shape_cast %139 : vector<1x64x32xbf16> to vector<64x32xbf16>
    %cst_43 = arith.constant dense<0.000000e+00> : vector<64x32xf32>
    %141 = tpu.matmul %138, %140, %cst_43 {dimension_numbers = #tpu.dot_dimension_numbers<[1], [0], [0], [1], [0, 0, 1, 1], [], []>} : vector<64x64xbf16>, vector<64x32xbf16>, vector<64x32xf32> -> vector<64x32xf32>
    %142 = arith.addf %96, %141 : vector<64x32xf32>
    %143 = vector.broadcast %14 : vector<1x32xf32> to vector<64x32xf32>
    %144 = arith.addf %142, %143 : vector<64x32xf32>
    %c1 = arith.constant 1 : index
    %c0_44 = arith.constant 0 : index
    %c0_45 = arith.constant 0 : index
    %145 = vector.load %arg7[%c1, %c0_44, %c0_45] : memref<2x10x64xf32, #tpu.memory_space<vmem>>, vector<1x10x64xf32>
    %146 = vector.shape_cast %145 : vector<1x10x64xf32> to vector<10x64xf32>
    %147 = vector.extract_strided_slice %146 {offsets = [0, 0], sizes = [1, 32], strides = [1, 1]} : vector<10x64xf32> to vector<1x32xf32>
    %148 = vector.extract_strided_slice %146 {offsets = [1, 0], sizes = [1, 32], strides = [1, 1]} : vector<10x64xf32> to vector<1x32xf32>
    %149 = vector.extract_strided_slice %146 {offsets = [2, 0], sizes = [1, 32], strides = [1, 1]} : vector<10x64xf32> to vector<1x32xf32>
    %150 = vector.extract_strided_slice %146 {offsets = [3, 0], sizes = [1, 32], strides = [1, 1]} : vector<10x64xf32> to vector<1x32xf32>
    %151 = vector.extract_strided_slice %146 {offsets = [4, 0], sizes = [1, 32], strides = [1, 1]} : vector<10x64xf32> to vector<1x32xf32>
    %152 = vector.extract_strided_slice %146 {offsets = [5, 0], sizes = [1, 32], strides = [1, 1]} : vector<10x64xf32> to vector<1x32xf32>
    %153 = vector.extract_strided_slice %146 {offsets = [6, 0], sizes = [1, 32], strides = [1, 1]} : vector<10x64xf32> to vector<1x32xf32>
    %154 = vector.extract_strided_slice %146 {offsets = [7, 0], sizes = [1, 32], strides = [1, 1]} : vector<10x64xf32> to vector<1x32xf32>
    %155 = vector.extract_strided_slice %146 {offsets = [8, 0], sizes = [1, 64], strides = [1, 1]} : vector<10x64xf32> to vector<1x64xf32>
    %156 = vector.extract_strided_slice %146 {offsets = [9, 0], sizes = [1, 32], strides = [1, 1]} : vector<10x64xf32> to vector<1x32xf32>
    %cst_46 = arith.constant dense<0.000000e+00> : vector<64xf32>
    %157 = vector.multi_reduction <add>, %144, %cst_46 [1] : vector<64x32xf32> to vector<64xf32>
    %158 = vector.shape_cast %157 : vector<64xf32> to vector<64x1xf32>
    %cst_47 = arith.constant 3.200000e+01 : f32
    %159 = vector.broadcast %cst_47 : f32 to vector<64x1xf32>
    %160 = arith.divf %158, %159 : vector<64x1xf32>
    %161 = vector.broadcast %160 : vector<64x1xf32> to vector<64x32xf32>
    %162 = arith.subf %144, %161 : vector<64x32xf32>
    %163 = arith.mulf %162, %162 : vector<64x32xf32>
    %cst_48 = arith.constant dense<0.000000e+00> : vector<64xf32>
    %164 = vector.multi_reduction <add>, %163, %cst_48 [1] : vector<64x32xf32> to vector<64xf32>
    %165 = vector.shape_cast %164 : vector<64xf32> to vector<64x1xf32>
    %cst_49 = arith.constant 3.200000e+01 : f32
    %166 = vector.broadcast %cst_49 : f32 to vector<64x1xf32>
    %167 = arith.divf %165, %166 : vector<64x1xf32>
    %168 = vector.broadcast %160 : vector<64x1xf32> to vector<64x32xf32>
    %169 = arith.subf %144, %168 : vector<64x32xf32>
    %cst_50 = arith.constant 9.99999997E-7 : f32
    %170 = vector.broadcast %cst_50 : f32 to vector<64x1xf32>
    %171 = arith.addf %167, %170 : vector<64x1xf32>
    %172 = math.rsqrt %171 : vector<64x1xf32>
    %173 = vector.broadcast %172 : vector<64x1xf32> to vector<64x32xf32>
    %174 = arith.mulf %169, %173 : vector<64x32xf32>
    %175 = vector.broadcast %147 : vector<1x32xf32> to vector<64x32xf32>
    %176 = arith.mulf %174, %175 : vector<64x32xf32>
    %177 = vector.broadcast %148 : vector<1x32xf32> to vector<64x32xf32>
    %178 = arith.addf %176, %177 : vector<64x32xf32>
    %179 = arith.truncf %178 : vector<64x32xf32> to vector<64x32xbf16>
    %c1_51 = arith.constant 1 : index
    %c0_52 = arith.constant 0 : index
    %c0_53 = arith.constant 0 : index
    %180 = vector.load %arg3[%c1_51, %c0_52, %c0_53] : memref<2x32x96xbf16, #tpu.memory_space<vmem>>, vector<1x32x96xbf16>
    %181 = vector.shape_cast %180 : vector<1x32x96xbf16> to vector<32x96xbf16>
    %cst_54 = arith.constant dense<0.000000e+00> : vector<64x96xf32>
    %182 = tpu.matmul %179, %181, %cst_54 {dimension_numbers = #tpu.dot_dimension_numbers<[1], [0], [0], [1], [0, 0, 1, 1], [], []>} : vector<64x32xbf16>, vector<32x96xbf16>, vector<64x96xf32> -> vector<64x96xf32>
    %183 = vector.extract_strided_slice %182 {offsets = [0, 0], sizes = [64, 32], strides = [1, 1]} : vector<64x96xf32> to vector<64x32xf32>
    %184 = vector.broadcast %149 : vector<1x32xf32> to vector<64x32xf32>
    %185 = arith.addf %183, %184 : vector<64x32xf32>
    %186 = vector.extract_strided_slice %182 {offsets = [0, 32], sizes = [64, 32], strides = [1, 1]} : vector<64x96xf32> to vector<64x32xf32>
    %187 = vector.broadcast %150 : vector<1x32xf32> to vector<64x32xf32>
    %188 = arith.addf %186, %187 : vector<64x32xf32>
    %189 = vector.extract_strided_slice %182 {offsets = [0, 64], sizes = [64, 32], strides = [1, 1]} : vector<64x96xf32> to vector<64x32xf32>
    %190 = vector.broadcast %151 : vector<1x32xf32> to vector<64x32xf32>
    %191 = arith.addf %189, %190 : vector<64x32xf32>
    %192 = arith.truncf %185 : vector<64x32xf32> to vector<64x32xbf16>
    %193 = vector.shape_cast %192 : vector<64x32xbf16> to vector<4x16x32xbf16>
    %194 = arith.truncf %188 : vector<64x32xf32> to vector<64x32xbf16>
    %195 = vector.shape_cast %194 : vector<64x32xbf16> to vector<4x16x32xbf16>
    %196 = arith.truncf %191 : vector<64x32xf32> to vector<64x32xbf16>
    %197 = vector.shape_cast %196 : vector<64x32xbf16> to vector<4x16x32xbf16>
    %198 = vector.extract_strided_slice %193 {offsets = [0, 0, 0], sizes = [4, 16, 16], strides = [1, 1, 1]} : vector<4x16x32xbf16> to vector<4x16x16xbf16>
    %199 = vector.extract_strided_slice %195 {offsets = [0, 0, 0], sizes = [4, 16, 16], strides = [1, 1, 1]} : vector<4x16x32xbf16> to vector<4x16x16xbf16>
    "tpu.trace_start"() <{level = 10 : i32, message = "bqd,bkd->bqk"}> : () -> ()
    %cst_55 = arith.constant dense<0.000000e+00> : vector<4x16x16xf32>
    %200 = tpu.matmul %198, %199, %cst_55 {dimension_numbers = #tpu.dot_dimension_numbers<[2], [2], [1], [1], [0, 0, 0, 1, 1, 1], [0], [0]>} : vector<4x16x16xbf16>, vector<4x16x16xbf16>, vector<4x16x16xf32> -> vector<4x16x16xf32>
    "tpu.trace_stop"() : () -> ()
    %cst_56 = arith.constant dense<0xFF800000> : vector<4x16xf32>
    %201 = vector.multi_reduction <maximumf>, %200, %cst_56 [2] : vector<4x16x16xf32> to vector<4x16xf32>
    %202 = vector.shape_cast %201 : vector<4x16xf32> to vector<4x16x1xf32>
    %203 = vector.broadcast %202 : vector<4x16x1xf32> to vector<4x16x16xf32>
    %204 = arith.subf %200, %203 : vector<4x16x16xf32>
    %205 = math.exp %204 : vector<4x16x16xf32>
    %cst_57 = arith.constant dense<0.000000e+00> : vector<4x16xf32>
    %206 = vector.multi_reduction <add>, %205, %cst_57 [2] : vector<4x16x16xf32> to vector<4x16xf32>
    %207 = vector.shape_cast %206 : vector<4x16xf32> to vector<4x16x1xf32>
    %208 = tpu.reciprocal %207 {approx = true} : vector<4x16x1xf32> -> vector<4x16x1xf32>
    %209 = vector.broadcast %208 : vector<4x16x1xf32> to vector<4x16x16xf32>
    %210 = arith.mulf %205, %209 : vector<4x16x16xf32>
    %211 = arith.truncf %210 : vector<4x16x16xf32> to vector<4x16x16xbf16>
    %212 = vector.extract_strided_slice %197 {offsets = [0, 0, 0], sizes = [4, 16, 16], strides = [1, 1, 1]} : vector<4x16x32xbf16> to vector<4x16x16xbf16>
    "tpu.trace_start"() <{level = 10 : i32, message = "bqk,bkd->bqd"}> : () -> ()
    %cst_58 = arith.constant dense<0.000000e+00> : vector<4x16x16xf32>
    %213 = tpu.matmul %211, %212, %cst_58 {dimension_numbers = #tpu.dot_dimension_numbers<[2], [1], [1], [2], [0, 0, 0, 1, 1, 2], [0], [0]>} : vector<4x16x16xbf16>, vector<4x16x16xbf16>, vector<4x16x16xf32> -> vector<4x16x16xf32>
    "tpu.trace_stop"() : () -> ()
    %214 = vector.extract_strided_slice %193 {offsets = [0, 0, 16], sizes = [4, 16, 16], strides = [1, 1, 1]} : vector<4x16x32xbf16> to vector<4x16x16xbf16>
    %215 = vector.extract_strided_slice %195 {offsets = [0, 0, 16], sizes = [4, 16, 16], strides = [1, 1, 1]} : vector<4x16x32xbf16> to vector<4x16x16xbf16>
    "tpu.trace_start"() <{level = 10 : i32, message = "bqd,bkd->bqk"}> : () -> ()
    %cst_59 = arith.constant dense<0.000000e+00> : vector<4x16x16xf32>
    %216 = tpu.matmul %214, %215, %cst_59 {dimension_numbers = #tpu.dot_dimension_numbers<[2], [2], [1], [1], [0, 0, 0, 1, 1, 1], [0], [0]>} : vector<4x16x16xbf16>, vector<4x16x16xbf16>, vector<4x16x16xf32> -> vector<4x16x16xf32>
    "tpu.trace_stop"() : () -> ()
    %cst_60 = arith.constant dense<0xFF800000> : vector<4x16xf32>
    %217 = vector.multi_reduction <maximumf>, %216, %cst_60 [2] : vector<4x16x16xf32> to vector<4x16xf32>
    %218 = vector.shape_cast %217 : vector<4x16xf32> to vector<4x16x1xf32>
    %219 = vector.broadcast %218 : vector<4x16x1xf32> to vector<4x16x16xf32>
    %220 = arith.subf %216, %219 : vector<4x16x16xf32>
    %221 = math.exp %220 : vector<4x16x16xf32>
    %cst_61 = arith.constant dense<0.000000e+00> : vector<4x16xf32>
    %222 = vector.multi_reduction <add>, %221, %cst_61 [2] : vector<4x16x16xf32> to vector<4x16xf32>
    %223 = vector.shape_cast %222 : vector<4x16xf32> to vector<4x16x1xf32>
    %224 = tpu.reciprocal %223 {approx = true} : vector<4x16x1xf32> -> vector<4x16x1xf32>
    %225 = vector.broadcast %224 : vector<4x16x1xf32> to vector<4x16x16xf32>
    %226 = arith.mulf %221, %225 : vector<4x16x16xf32>
    %227 = arith.truncf %226 : vector<4x16x16xf32> to vector<4x16x16xbf16>
    %228 = vector.extract_strided_slice %197 {offsets = [0, 0, 16], sizes = [4, 16, 16], strides = [1, 1, 1]} : vector<4x16x32xbf16> to vector<4x16x16xbf16>
    "tpu.trace_start"() <{level = 10 : i32, message = "bqk,bkd->bqd"}> : () -> ()
    %cst_62 = arith.constant dense<0.000000e+00> : vector<4x16x16xf32>
    %229 = tpu.matmul %227, %228, %cst_62 {dimension_numbers = #tpu.dot_dimension_numbers<[2], [1], [1], [2], [0, 0, 0, 1, 1, 2], [0], [0]>} : vector<4x16x16xbf16>, vector<4x16x16xbf16>, vector<4x16x16xf32> -> vector<4x16x16xf32>
    "tpu.trace_stop"() : () -> ()
    %230 = tpu.concatenate %213, %229 in 2 : vector<4x16x16xf32>, vector<4x16x16xf32> -> vector<4x16x32xf32>
    %231 = vector.shape_cast %230 : vector<4x16x32xf32> to vector<64x32xf32>
    %232 = arith.truncf %231 : vector<64x32xf32> to vector<64x32xbf16>
    %c1_63 = arith.constant 1 : index
    %c0_64 = arith.constant 0 : index
    %c0_65 = arith.constant 0 : index
    %233 = vector.load %arg4[%c1_63, %c0_64, %c0_65] : memref<2x32x32xbf16, #tpu.memory_space<vmem>>, vector<1x32x32xbf16>
    %234 = vector.shape_cast %233 : vector<1x32x32xbf16> to vector<32x32xbf16>
    %cst_66 = arith.constant dense<0.000000e+00> : vector<64x32xf32>
    %235 = tpu.matmul %232, %234, %cst_66 {dimension_numbers = #tpu.dot_dimension_numbers<[1], [0], [0], [1], [0, 0, 1, 1], [], []>} : vector<64x32xbf16>, vector<32x32xbf16>, vector<64x32xf32> -> vector<64x32xf32>
    %236 = arith.addf %144, %235 : vector<64x32xf32>
    %237 = vector.broadcast %152 : vector<1x32xf32> to vector<64x32xf32>
    %238 = arith.addf %236, %237 : vector<64x32xf32>
    %cst_67 = arith.constant dense<0.000000e+00> : vector<64xf32>
    %239 = vector.multi_reduction <add>, %238, %cst_67 [1] : vector<64x32xf32> to vector<64xf32>
    %240 = vector.shape_cast %239 : vector<64xf32> to vector<64x1xf32>
    %cst_68 = arith.constant 3.200000e+01 : f32
    %241 = vector.broadcast %cst_68 : f32 to vector<64x1xf32>
    %242 = arith.divf %240, %241 : vector<64x1xf32>
    %243 = vector.broadcast %242 : vector<64x1xf32> to vector<64x32xf32>
    %244 = arith.subf %238, %243 : vector<64x32xf32>
    %245 = arith.mulf %244, %244 : vector<64x32xf32>
    %cst_69 = arith.constant dense<0.000000e+00> : vector<64xf32>
    %246 = vector.multi_reduction <add>, %245, %cst_69 [1] : vector<64x32xf32> to vector<64xf32>
    %247 = vector.shape_cast %246 : vector<64xf32> to vector<64x1xf32>
    %cst_70 = arith.constant 3.200000e+01 : f32
    %248 = vector.broadcast %cst_70 : f32 to vector<64x1xf32>
    %249 = arith.divf %247, %248 : vector<64x1xf32>
    %250 = vector.broadcast %242 : vector<64x1xf32> to vector<64x32xf32>
    %251 = arith.subf %238, %250 : vector<64x32xf32>
    %cst_71 = arith.constant 9.99999997E-7 : f32
    %252 = vector.broadcast %cst_71 : f32 to vector<64x1xf32>
    %253 = arith.addf %249, %252 : vector<64x1xf32>
    %254 = math.rsqrt %253 : vector<64x1xf32>
    %255 = vector.broadcast %254 : vector<64x1xf32> to vector<64x32xf32>
    %256 = arith.mulf %251, %255 : vector<64x32xf32>
    %257 = vector.broadcast %153 : vector<1x32xf32> to vector<64x32xf32>
    %258 = arith.mulf %256, %257 : vector<64x32xf32>
    %259 = vector.broadcast %154 : vector<1x32xf32> to vector<64x32xf32>
    %260 = arith.addf %258, %259 : vector<64x32xf32>
    %261 = arith.truncf %260 : vector<64x32xf32> to vector<64x32xbf16>
    %c1_72 = arith.constant 1 : index
    %c0_73 = arith.constant 0 : index
    %c0_74 = arith.constant 0 : index
    %262 = vector.load %arg5[%c1_72, %c0_73, %c0_74] : memref<2x32x64xbf16, #tpu.memory_space<vmem>>, vector<1x32x64xbf16>
    %263 = vector.shape_cast %262 : vector<1x32x64xbf16> to vector<32x64xbf16>
    %cst_75 = arith.constant dense<0.000000e+00> : vector<64x64xf32>
    %264 = tpu.matmul %261, %263, %cst_75 {dimension_numbers = #tpu.dot_dimension_numbers<[1], [0], [0], [1], [0, 0, 1, 1], [], []>} : vector<64x32xbf16>, vector<32x64xbf16>, vector<64x64xf32> -> vector<64x64xf32>
    %265 = vector.broadcast %155 : vector<1x64xf32> to vector<64x64xf32>
    %266 = arith.addf %264, %265 : vector<64x64xf32>
    %267 = arith.mulf %266, %266 : vector<64x64xf32>
    %268 = arith.mulf %266, %267 : vector<64x64xf32>
    %cst_76 = arith.constant 4.471500e-02 : f32
    %269 = vector.broadcast %cst_76 : f32 to vector<64x64xf32>
    %270 = arith.mulf %269, %268 : vector<64x64xf32>
    %271 = arith.addf %266, %270 : vector<64x64xf32>
    %cst_77 = arith.constant 0.797884583 : f32
    %272 = vector.broadcast %cst_77 : f32 to vector<64x64xf32>
    %273 = arith.mulf %272, %271 : vector<64x64xf32>
    %274 = math.tanh %273 : vector<64x64xf32>
    %cst_78 = arith.constant 1.000000e+00 : f32
    %275 = vector.broadcast %cst_78 : f32 to vector<64x64xf32>
    %276 = arith.addf %275, %274 : vector<64x64xf32>
    %cst_79 = arith.constant 5.000000e-01 : f32
    %277 = vector.broadcast %cst_79 : f32 to vector<64x64xf32>
    %278 = arith.mulf %277, %276 : vector<64x64xf32>
    %279 = arith.mulf %266, %278 : vector<64x64xf32>
    %280 = arith.truncf %279 : vector<64x64xf32> to vector<64x64xbf16>
    %c1_80 = arith.constant 1 : index
    %c0_81 = arith.constant 0 : index
    %c0_82 = arith.constant 0 : index
    %281 = vector.load %arg6[%c1_80, %c0_81, %c0_82] : memref<2x64x32xbf16, #tpu.memory_space<vmem>>, vector<1x64x32xbf16>
    %282 = vector.shape_cast %281 : vector<1x64x32xbf16> to vector<64x32xbf16>
    %cst_83 = arith.constant dense<0.000000e+00> : vector<64x32xf32>
    %283 = tpu.matmul %280, %282, %cst_83 {dimension_numbers = #tpu.dot_dimension_numbers<[1], [0], [0], [1], [0, 0, 1, 1], [], []>} : vector<64x64xbf16>, vector<64x32xbf16>, vector<64x32xf32> -> vector<64x32xf32>
    %284 = arith.addf %238, %283 : vector<64x32xf32>
    %285 = vector.broadcast %156 : vector<1x32xf32> to vector<64x32xf32>
    %286 = arith.addf %284, %285 : vector<64x32xf32>
    %c0_84 = arith.constant 0 : index
    %c0_85 = arith.constant 0 : index
    %287 = vector.load %arg11[%c0_84, %c0_85] : memref<5x128xf32, #tpu.memory_space<vmem>>, vector<5x128xf32>
    %288 = vector.extract_strided_slice %287 {offsets = [0, 0], sizes = [1, 32], strides = [1, 1]} : vector<5x128xf32> to vector<1x32xf32>
    %289 = vector.extract_strided_slice %287 {offsets = [1, 0], sizes = [1, 32], strides = [1, 1]} : vector<5x128xf32> to vector<1x32xf32>
    %290 = vector.extract_strided_slice %287 {offsets = [2, 0], sizes = [1, 32], strides = [1, 1]} : vector<5x128xf32> to vector<1x32xf32>
    %291 = vector.extract_strided_slice %287 {offsets = [3, 0], sizes = [1, 128], strides = [1, 1]} : vector<5x128xf32> to vector<1x128xf32>
    %292 = vector.extract_strided_slice %287 {offsets = [4, 0], sizes = [1, 128], strides = [1, 1]} : vector<5x128xf32> to vector<1x128xf32>
    %cst_86 = arith.constant dense<0.000000e+00> : vector<64xf32>
    %293 = vector.multi_reduction <add>, %286, %cst_86 [1] : vector<64x32xf32> to vector<64xf32>
    %294 = vector.shape_cast %293 : vector<64xf32> to vector<64x1xf32>
    %cst_87 = arith.constant 3.200000e+01 : f32
    %295 = vector.broadcast %cst_87 : f32 to vector<64x1xf32>
    %296 = arith.divf %294, %295 : vector<64x1xf32>
    %297 = vector.broadcast %296 : vector<64x1xf32> to vector<64x32xf32>
    %298 = arith.subf %286, %297 : vector<64x32xf32>
    %299 = arith.mulf %298, %298 : vector<64x32xf32>
    %cst_88 = arith.constant dense<0.000000e+00> : vector<64xf32>
    %300 = vector.multi_reduction <add>, %299, %cst_88 [1] : vector<64x32xf32> to vector<64xf32>
    %301 = vector.shape_cast %300 : vector<64xf32> to vector<64x1xf32>
    %cst_89 = arith.constant 3.200000e+01 : f32
    %302 = vector.broadcast %cst_89 : f32 to vector<64x1xf32>
    %303 = arith.divf %301, %302 : vector<64x1xf32>
    %304 = vector.broadcast %296 : vector<64x1xf32> to vector<64x32xf32>
    %305 = arith.subf %286, %304 : vector<64x32xf32>
    %cst_90 = arith.constant 9.99999997E-7 : f32
    %306 = vector.broadcast %cst_90 : f32 to vector<64x1xf32>
    %307 = arith.addf %303, %306 : vector<64x1xf32>
    %308 = math.rsqrt %307 : vector<64x1xf32>
    %309 = vector.broadcast %308 : vector<64x1xf32> to vector<64x32xf32>
    %310 = arith.mulf %305, %309 : vector<64x32xf32>
    %311 = vector.broadcast %288 : vector<1x32xf32> to vector<64x32xf32>
    %312 = arith.mulf %310, %311 : vector<64x32xf32>
    %313 = vector.broadcast %289 : vector<1x32xf32> to vector<64x32xf32>
    %314 = arith.addf %312, %313 : vector<64x32xf32>
    %315 = arith.truncf %314 : vector<64x32xf32> to vector<64x32xbf16>
    %c0_91 = arith.constant 0 : index
    %c0_92 = arith.constant 0 : index
    %316 = vector.load %arg8[%c0_91, %c0_92] : memref<32x128xbf16, #tpu.memory_space<vmem>>, vector<32x128xbf16>
    %cst_93 = arith.constant dense<0.000000e+00> : vector<64x128xf32>
    %317 = tpu.matmul %315, %316, %cst_93 {dimension_numbers = #tpu.dot_dimension_numbers<[1], [0], [0], [1], [0, 0, 1, 1], [], []>} : vector<64x32xbf16>, vector<32x128xbf16>, vector<64x128xf32> -> vector<64x128xf32>
    %318 = vector.broadcast %291 : vector<1x128xf32> to vector<64x128xf32>
    %319 = arith.addf %317, %318 : vector<64x128xf32>
    %c0_94 = arith.constant 0 : index
    %c0_95 = arith.constant 0 : index
    %320 = vector.load %arg9[%c0_94, %c0_95] : memref<32x32xbf16, #tpu.memory_space<vmem>>, vector<32x32xbf16>
    %cst_96 = arith.constant dense<0.000000e+00> : vector<64x32xf32>
    %321 = tpu.matmul %315, %320, %cst_96 {dimension_numbers = #tpu.dot_dimension_numbers<[1], [0], [0], [1], [0, 0, 1, 1], [], []>} : vector<64x32xbf16>, vector<32x32xbf16>, vector<64x32xf32> -> vector<64x32xf32>
    %322 = vector.broadcast %290 : vector<1x32xf32> to vector<64x32xf32>
    %323 = arith.addf %321, %322 : vector<64x32xf32>
    %cst_97 = arith.constant 0.000000e+00 : f32
    %324 = vector.broadcast %cst_97 : f32 to vector<64x32xf32>
    %325 = arith.maximumf %323, %324 : vector<64x32xf32>
    %326 = arith.truncf %325 : vector<64x32xf32> to vector<64x32xbf16>
    %c0_98 = arith.constant 0 : index
    %c0_99 = arith.constant 0 : index
    %327 = vector.load %arg10[%c0_98, %c0_99] : memref<32x128xbf16, #tpu.memory_space<vmem>>, vector<32x128xbf16>
    %cst_100 = arith.constant dense<0.000000e+00> : vector<64x128xf32>
    %328 = tpu.matmul %326, %327, %cst_100 {dimension_numbers = #tpu.dot_dimension_numbers<[1], [0], [0], [1], [0, 0, 1, 1], [], []>} : vector<64x32xbf16>, vector<32x128xbf16>, vector<64x128xf32> -> vector<64x128xf32>
    %329 = vector.broadcast %292 : vector<1x128xf32> to vector<64x128xf32>
    %330 = arith.addf %328, %329 : vector<64x128xf32>
    %331 = arith.addf %319, %330 : vector<64x128xf32>
    %c0_101 = arith.constant 0 : index
    %c0_102 = arith.constant 0 : index
    %332 = vector.load %arg12[%c0_101, %c0_102] : memref<64x128xf32, #tpu.memory_space<vmem>>, vector<64x128xf32>
    tpu.vector_store %arg12[%c0_101, %c0_102], %331 {strides = array<i32>} : memref<64x128xf32, #tpu.memory_space<vmem>>, vector<64x128xf32>,
    return
  }
  func.func @transform_0(%arg0: i32) -> (i32, i32) {
    %c0_i32 = arith.constant 0 : i32
    %c0_i32_0 = arith.constant 0 : i32
    return %arg0, %c0_i32 : i32, i32
  }
  func.func @transform_1(%arg0: i32) -> (i32, i32) {
    %c0_i32 = arith.constant 0 : i32
    %c0_i32_0 = arith.constant 0 : i32
    %c0_i32_1 = arith.constant 0 : i32
    return %c0_i32, %c0_i32_0 : i32, i32
  }
  func.func @transform_2(%arg0: i32) -> (i32, i32, i32) {
    %c0_i32 = arith.constant 0 : i32
    %c0_i32_0 = arith.constant 0 : i32
    %c0_i32_1 = arith.constant 0 : i32
    %c0_i32_2 = arith.constant 0 : i32
    return %c0_i32, %c0_i32_0, %c0_i32_1 : i32, i32, i32
  }
  func.func @transform_3(%arg0: i32) -> (i32, i32, i32) {
    %c0_i32 = arith.constant 0 : i32
    %c0_i32_0 = arith.constant 0 : i32
    %c0_i32_1 = arith.constant 0 : i32
    %c0_i32_2 = arith.constant 0 : i32
    return %c0_i32, %c0_i32_0, %c0_i32_1 : i32, i32, i32
  }
  func.func @transform_4(%arg0: i32) -> (i32, i32, i32) {
    %c0_i32 = arith.constant 0 : i32
    %c0_i32_0 = arith.constant 0 : i32
    %c0_i32_1 = arith.constant 0 : i32
    %c0_i32_2 = arith.constant 0 : i32
    return %c0_i32, %c0_i32_0, %c0_i32_1 : i32, i32, i32
  }
  func.func @transform_5(%arg0: i32) -> (i32, i32, i32) {
    %c0_i32 = arith.constant 0 : i32
    %c0_i32_0 = arith.constant 0 : i32
    %c0_i32_1 = arith.constant 0 : i32
    %c0_i32_2 = arith.constant 0 : i32
    return %c0_i32, %c0_i32_0, %c0_i32_1 : i32, i32, i32
  }
  func.func @transform_6(%arg0: i32) -> (i32, i32, i32) {
    %c0_i32 = arith.constant 0 : i32
    %c0_i32_0 = arith.constant 0 : i32
    %c0_i32_1 = arith.constant 0 : i32
    %c0_i32_2 = arith.constant 0 : i32
    return %c0_i32, %c0_i32_0, %c0_i32_1 : i32, i32, i32
  }
  func.func @transform_7(%arg0: i32) -> (i32, i32) {
    %c0_i32 = arith.constant 0 : i32
    %c0_i32_0 = arith.constant 0 : i32
    %c0_i32_1 = arith.constant 0 : i32
    return %c0_i32, %c0_i32_0 : i32, i32
  }
  func.func @transform_8(%arg0: i32) -> (i32, i32) {
    %c0_i32 = arith.constant 0 : i32
    %c0_i32_0 = arith.constant 0 : i32
    %c0_i32_1 = arith.constant 0 : i32
    return %c0_i32, %c0_i32_0 : i32, i32
  }
  func.func @transform_9(%arg0: i32) -> (i32, i32) {
    %c0_i32 = arith.constant 0 : i32
    %c0_i32_0 = arith.constant 0 : i32
    %c0_i32_1 = arith.constant 0 : i32
    return %c0_i32, %c0_i32_0 : i32, i32
  }
  func.func @transform_10(%arg0: i32) -> (i32, i32) {
    %c0_i32 = arith.constant 0 : i32
    %c0_i32_0 = arith.constant 0 : i32
    %c0_i32_1 = arith.constant 0 : i32
    return %c0_i32, %c0_i32_0 : i32, i32
  }
  func.func @transform_11(%arg0: i32) -> (i32, i32) {
    %c0_i32 = arith.constant 0 : i32
    %c0_i32_0 = arith.constant 0 : i32
    return %arg0, %c0_i32 : i32, i32
  }
}

</mosaic_0001>

<llo_original>
// kernel: dino_with_lora_forward.1
$region0: #{dino_with_lora_forward.1}
  #allocation0 [shape = 'u32[]', space=smem, size = 0x4, offset = 0x4, fixed_abs, tag = 'smem constant byte address 0x4 - core index']
  #allocation1 [shape = 'u32[144,128]{1,0:T(1,128)}', space=vmem, size = 0x12000, scoped, tag = 'internal scratch']
  %s0 = inlined_call_operand.vmem [shape: bf16[64,208], index: 0, kind: input, shape index: {}]
  %s1 = inlined_call_operand.vmem [shape: bf16[208,32], index: 1, kind: input, shape index: {}]
  %s2 = inlined_call_operand.vmem [shape: bf16[2,32,96], index: 2, kind: input, shape index: {}]
  %s3 = inlined_call_operand.vmem [shape: bf16[2,32,32], index: 3, kind: input, shape index: {}]
  %s4 = inlined_call_operand.vmem [shape: bf16[2,32,64], index: 4, kind: input, shape index: {}]
  %s5 = inlined_call_operand.vmem [shape: bf16[2,64,32], index: 5, kind: input, shape index: {}]
  %s6 = inlined_call_operand.vmem [shape: f32[2,10,64], index: 6, kind: input, shape index: {}]
  %s7 = inlined_call_operand.vmem [shape: bf16[32,128], index: 7, kind: input, shape index: {}]
  %s8 = inlined_call_operand.vmem [shape: bf16[32,32], index: 8, kind: input, shape index: {}]
  %s9 = inlined_call_operand.vmem [shape: bf16[32,128], index: 9, kind: input, shape index: {}]
  %s10 = inlined_call_operand.vmem [shape: f32[5,128], index: 10, kind: input, shape index: {}]
  %s11 = inlined_call_operand.vmem [shape: f32[64,128], index: 11, kind: output, shape index: {}]
  %s12 = sld [smem:[#allocation0]]
  $region54: #{dino_with_lora_forward.1} parent=0
    _
  %s14 = ssub.s32 1, %s12
  %s15 = scalar_select 0, %s14, %s12
  // Predicated region
  $region2: #{dino_with_lora_forward.1} parent=0 // pred_check
    _
  $region3: #{dino_with_lora_forward.1} parent=0 // pred_check_branch
    %17 = sbr.rel (0) target = $region5
  $region4: #{dino_with_lora_forward.1} parent=0 // pred_region
    _
  $region5: #{dino_with_lora_forward.1} parent=0 // pred_fallthru
    _
  // Predicated region
  $region6: #{dino_with_lora_forward.1} parent=0 // pred_check
    _
  $region7: #{dino_with_lora_forward.1} parent=0 // pred_check_branch
    %19 = sbr.rel (0) target = $region9
  $region8: #{dino_with_lora_forward.1} parent=0 // pred_region
    _
  $region9: #{dino_with_lora_forward.1} parent=0 // pred_fallthru
    _
  // Predicated region
  $region10: #{dino_with_lora_forward.1} parent=0 // pred_check
    _
  $region11: #{dino_with_lora_forward.1} parent=0 // pred_check_branch
    %21 = sbr.rel (0) target = $region13
  $region12: #{dino_with_lora_forward.1} parent=0 // pred_region
    _
  $region13: #{dino_with_lora_forward.1} parent=0 // pred_fallthru
    _
  // Predicated region
  $region14: #{dino_with_lora_forward.1} parent=0 // pred_check
    _
  $region15: #{dino_with_lora_forward.1} parent=0 // pred_check_branch
    %23 = sbr.rel (0) target = $region17
  $region16: #{dino_with_lora_forward.1} parent=0 // pred_region
    _
  $region17: #{dino_with_lora_forward.1} parent=0 // pred_fallthru
    _
  // Predicated region
  $region18: #{dino_with_lora_forward.1} parent=0 // pred_check
    _
  $region19: #{dino_with_lora_forward.1} parent=0 // pred_check_branch
    %25 = sbr.rel (0) target = $region21
  $region20: #{dino_with_lora_forward.1} parent=0 // pred_region
    _
  $region21: #{dino_with_lora_forward.1} parent=0 // pred_fallthru
    _
  // Predicated region
  $region22: #{dino_with_lora_forward.1} parent=0 // pred_check
    _
  $region23: #{dino_with_lora_forward.1} parent=0 // pred_check_branch
    %27 = sbr.rel (0) target = $region25
  $region24: #{dino_with_lora_forward.1} parent=0 // pred_region
    _
  $region25: #{dino_with_lora_forward.1} parent=0 // pred_fallthru
    _
  // Predicated region
  $region26: #{dino_with_lora_forward.1} parent=0 // pred_check
    _
  $region27: #{dino_with_lora_forward.1} parent=0 // pred_check_branch
    %29 = sbr.rel (0) target = $region29
  $region28: #{dino_with_lora_forward.1} parent=0 // pred_region
    _
  $region29: #{dino_with_lora_forward.1} parent=0 // pred_fallthru
    _
  // Predicated region
  $region30: #{dino_with_lora_forward.1} parent=0 // pred_check
    _
  $region31: #{dino_with_lora_forward.1} parent=0 // pred_check_branch
    %31 = sbr.rel (0) target = $region33
  $region32: #{dino_with_lora_forward.1} parent=0 // pred_region
    _
  $region33: #{dino_with_lora_forward.1} parent=0 // pred_fallthru
    _
  // Predicated region
  $region34: #{dino_with_lora_forward.1} parent=0 // pred_check
    _
  $region35: #{dino_with_lora_forward.1} parent=0 // pred_check_branch
    %33 = sbr.rel (0) target = $region37
  $region36: #{dino_with_lora_forward.1} parent=0 // pred_region
    _
  $region37: #{dino_with_lora_forward.1} parent=0 // pred_fallthru
    _
  // Predicated region
  $region38: #{dino_with_lora_forward.1} parent=0 // pred_check
    _
  $region39: #{dino_with_lora_forward.1} parent=0 // pred_check_branch
    %35 = sbr.rel (0) target = $region41
  $region40: #{dino_with_lora_forward.1} parent=0 // pred_region
    _
  $region41: #{dino_with_lora_forward.1} parent=0 // pred_fallthru
    _
  // Predicated region
  $region42: #{dino_with_lora_forward.1} parent=0 // pred_check
    _
  $region43: #{dino_with_lora_forward.1} parent=0 // pred_check_branch
    %37 = sbr.rel (0) target = $region45
  $region44: #{dino_with_lora_forward.1} parent=0 // pred_region
    _
  $region45: #{dino_with_lora_forward.1} parent=0 // pred_fallthru
    _
  %v39 = vld [vmem:[%s0] sm:$0xff]
  %v40 = vld [vmem:[%s0 + $0x8] sm:$0xff]
  %v41 = vld [vmem:[%s0 + $0x10] sm:$0xff]
  %v42 = vld [vmem:[%s0 + $0x18] sm:$0xff]
  %v43 = vld [vmem:[%s0 + $0x20] sm:$0xff]
  %v44 = vld [vmem:[%s0 + $0x28] sm:$0xff]
  %v45 = vld [vmem:[%s0 + $0x30] sm:$0xff]
  %v46 = vld [vmem:[%s0 + $0x38] sm:$0xff]
  %v47 = vld [vmem:[%s1] sm:$0xf]
  %v48 = vld [vmem:[%s1 + $0x4] sm:$0xf]
  %v49 = vld [vmem:[%s1 + $0x8] sm:$0xf]
  %v50 = vld [vmem:[%s1 + $0xc] sm:$0xf]
  %v51 = vld [vmem:[%s1 + $0x10] sm:$0xf]
  %v52 = vld [vmem:[%s1 + $0x14] sm:$0xf]
  %v53 = vld [vmem:[%s1 + $0x18] sm:$0xf]
  %v54 = vld [vmem:[%s1 + $0x1c] sm:$0xf]
  %v55 = vld [vmem:[%s1 + $0x20] sm:$0xf]
  %v56 = vld [vmem:[%s1 + $0x24] sm:$0xf]
  %v57 = vld [vmem:[%s1 + $0x28] sm:$0xf]
  %v58 = vld [vmem:[%s1 + $0x2c] sm:$0xf]
  %v59 = vld [vmem:[%s1 + $0x30] sm:$0xf]
  %v60 = vld [vmem:[%s1 + $0x34] sm:$0xf]
  %v61 = vld [vmem:[%s1 + $0x38] sm:$0xf]
  %v62 = vld [vmem:[%s1 + $0x3c] sm:$0xf]
  %v63 = vld [vmem:[%s1 + $0x40] sm:$0xf]
  %v64 = vld [vmem:[%s1 + $0x44] sm:$0xf]
  %v65 = vld [vmem:[%s1 + $0x48] sm:$0xf]
  %v66 = vld [vmem:[%s1 + $0x4c] sm:$0xf]
  %v67 = vld [vmem:[%s1 + $0x50] sm:$0xf]
  %v68 = vld [vmem:[%s1 + $0x54] sm:$0xf]
  %v69 = vld [vmem:[%s1 + $0x58] sm:$0xf]
  %v70 = vld [vmem:[%s1 + $0x5c] sm:$0xf]
  %v71 = vld [vmem:[%s1 + $0x60] sm:$0xf]
  %v72 = vld [vmem:[%s1 + $0x64] sm:$0xf]
  %v81 = vunpack.c.l.b16 %v39
  %v82 = vunpack.c.h.b16 %v39
  %v83 = vunpack.c.l.b16 %v40
  %v84 = vunpack.c.h.b16 %v40
  %v85 = vunpack.c.l.b16 %v41
  %v86 = vunpack.c.h.b16 %v41
  %v87 = vunpack.c.l.b16 %v42
  %v88 = vunpack.c.h.b16 %v42
  %v89 = vunpack.c.l.b16 %v43
  %v90 = vunpack.c.h.b16 %v43
  %v91 = vunpack.c.l.b16 %v44
  %v92 = vunpack.c.h.b16 %v44
  %v93 = vunpack.c.l.b16 %v45
  %v94 = vunpack.c.h.b16 %v45
  %v95 = vunpack.c.l.b16 %v46
  %v96 = vunpack.c.h.b16 %v46
  %v97 = vpack.c.b16 %v83, %v81
  %v98 = vpack.c.b16 %v84, %v82
  %v99 = vpack.c.b16 %v87, %v85
  %v100 = vpack.c.b16 %v88, %v86
  %v101 = vpack.c.b16 %v91, %v89
  %v102 = vpack.c.b16 %v92, %v90
  %v103 = vpack.c.b16 %v95, %v93
  %v104 = vpack.c.b16 %v96, %v94
  %v135 = vunpack.c.l.b16 %v47
  %v136 = vunpack.c.l.b16 %v48
  %v137 = vunpack.c.l.b16 %v49
  %v138 = vunpack.c.l.b16 %v50
  %v139 = vunpack.c.l.b16 %v51
  %v140 = vunpack.c.l.b16 %v52
  %v141 = vunpack.c.l.b16 %v53
  %v142 = vunpack.c.l.b16 %v54
  %v143 = vunpack.c.l.b16 %v55
  %v144 = vunpack.c.l.b16 %v56
  %v145 = vunpack.c.l.b16 %v57
  %v146 = vunpack.c.l.b16 %v58
  %v147 = vunpack.c.l.b16 %v59
  %v148 = vunpack.c.l.b16 %v60
  %v149 = vunpack.c.l.b16 %v61
  %v150 = vunpack.c.l.b16 %v62
  %v151 = vunpack.c.l.b16 %v63
  %v152 = vunpack.c.l.b16 %v64
  %v153 = vunpack.c.l.b16 %v65
  %v154 = vunpack.c.l.b16 %v66
  %v155 = vunpack.c.l.b16 %v67
  %v156 = vunpack.c.l.b16 %v68
  %v157 = vunpack.c.l.b16 %v69
  %v158 = vunpack.c.l.b16 %v70
  %v159 = vunpack.c.l.b16 %v71
  %v160 = vunpack.c.l.b16 %v72
  %v161 = vpack.c.b16 %v136, %v135
  %v162 = vpack.c.b16 %v138, %v137
  %v163 = vpack.c.b16 %v140, %v139
  %v164 = vpack.c.b16 %v142, %v141
  %v165 = vpack.c.b16 %v144, %v143
  %v166 = vpack.c.b16 %v146, %v145
  %v167 = vpack.c.b16 %v148, %v147
  %v168 = vpack.c.b16 %v150, %v149
  %v169 = vpack.c.b16 %v152, %v151
  %v170 = vpack.c.b16 %v154, %v153
  %v171 = vpack.c.b16 %v156, %v155
  %v172 = vpack.c.b16 %v158, %v157
  %v173 = vpack.c.b16 %v160, %v159
  %vm187 = vcmask 654336
  %v189 = vsel %vm187, %v98, 0
  %v192 = vsel %vm187, %v100, 0
  %v195 = vsel %vm187, %v102, 0
  %v198 = vsel %vm187, %v104, 0
  %200 = vmatprep.subr.bf16.mxu0 0
  %201 = vmatpush1.bf16.msra.mxu0 %v161
  %202 = vmatprep.subr.bf16.mxu0 0
  %203 = vmatpush1.bf16.msra.mxu0 %v162
  %204 = vmatprep.subr.bf16.mxu0 0
  %205 = vmatpush1.bf16.msra.mxu0 %v163
  %206 = vmatprep.subr.bf16.mxu0 0
  %207 = vmatpush1.bf16.msra.mxu0 %v164
  %208 = vmatprep.subr.bf16.mxu0 0
  %209 = vmatpush1.bf16.msra.mxu0 %v165
  %210 = vmatprep.subr.bf16.mxu0 0
  %211 = vmatpush1.bf16.msra.mxu0 %v166
  %212 = vmatprep.subr.bf16.mxu0 0
  %213 = vmatpush1.bf16.msra.mxu0 %v167
  %214 = vmatprep.subr.bf16.mxu0 0
  %215 = vmatpush1.bf16.msra.mxu0 %v168
  %216 = vmatprep.subr.bf16.mxu0 0
  %217 = vmatpush1.bf16.msra.mxu0 %v169
  %218 = vmatprep.subr.bf16.mxu0 0
  %219 = vmatpush1.bf16.msra.mxu0 %v170
  %220 = vmatprep.subr.bf16.mxu0 0
  %221 = vmatpush1.bf16.msra.mxu0 %v171
  %222 = vmatprep.subr.bf16.mxu0 0
  %223 = vmatpush1.bf16.msra.mxu0 %v172
  %224 = vmatprep.subr.bf16.mxu0 0
  %225 = vmatpush1.bf16.msra.mxu0 %v173
  %226 = vmatprep.subr.bf16.mxu0 0
  %227 = vmatpush1.bf16.msra.mxu0 0
  %228 = vmatprep.subr.bf16.mxu0 0
  %229 = vmatpush1.bf16.msra.mxu0 0
  %230 = vmatprep.subr.bf16.mxu0 0
  %231 = vmatpush1.bf16.msra.mxu0 0
  %232 = vmatprep.mubr.bf16.mxu0 %v189
  %233 = vmatmul.mubr.bf16.gmra.mrb[0].mxu0 %v97
  %v234 = vpop.f32.mrb[0].mxu0
  %v235 = vadd.f32 0.0, %v234
  %v236 = vpop.f32.mrb[0].mxu0
  %v237 = vpop.f32.mrb[0].mxu0
  %v238 = vadd.f32 0.0, %v237
  %v239 = vpop.f32.mrb[0].mxu0
  %240 = vmatprep.mubr.bf16.mxu0 %v192
  %241 = vmatmul.mubr.bf16.gmra.mrb[0].mxu0 %v99
  %v242 = vpop.f32.mrb[0].mxu0
  %v243 = vadd.f32 0.0, %v242
  %v244 = vpop.f32.mrb[0].mxu0
  %v245 = vpop.f32.mrb[0].mxu0
  %v246 = vadd.f32 0.0, %v245
  %v247 = vpop.f32.mrb[0].mxu0
  %248 = vmatprep.mubr.bf16.mxu0 %v195
  %249 = vmatmul.mubr.bf16.gmra.mrb[0].mxu0 %v101
  %v250 = vpop.f32.mrb[0].mxu0
  %v251 = vadd.f32 0.0, %v250
  %v252 = vpop.f32.mrb[0].mxu0
  %v253 = vpop.f32.mrb[0].mxu0
  %v254 = vadd.f32 0.0, %v253
  %v255 = vpop.f32.mrb[0].mxu0
  %256 = vmatprep.mubr.bf16.mxu0 %v198
  %257 = vmatmul.mubr.bf16.gmra.mrb[0].mxu0 %v103
  %v258 = vpop.f32.mrb[0].mxu0
  %v259 = vadd.f32 0.0, %v258
  %v260 = vpop.f32.mrb[0].mxu0
  %v261 = vpop.f32.mrb[0].mxu0
  %v262 = vadd.f32 0.0, %v261
  %v263 = vpop.f32.mrb[0].mxu0
  %264 = vdwg.mxu0
  %v265 = vld [vmem:[%s6] sm:$0xff]
  %v266 = vld [vmem:[%s6 + $0x8] sm:$0x3]
  %vm267 = vcmask 261120
  %v268 = vsel %vm267, %v235, 0.0
  %269 = vadd.xlane.f32.xlu0 %v268
  %v270 = vpop.xlane.xlu0 %269
  %v271 = vsel %vm267, %v238, 0.0
  %272 = vadd.xlane.f32.xlu0 %v271
  %v273 = vpop.xlane.xlu0 %272
  %v274 = vsel %vm267, %v243, 0.0
  %275 = vadd.xlane.f32.xlu0 %v274
  %v276 = vpop.xlane.xlu0 %275
  %v277 = vsel %vm267, %v246, 0.0
  %278 = vadd.xlane.f32.xlu0 %v277
  %v279 = vpop.xlane.xlu0 %278
  %v280 = vsel %vm267, %v251, 0.0
  %281 = vadd.xlane.f32.xlu0 %v280
  %v282 = vpop.xlane.xlu0 %281
  %v283 = vsel %vm267, %v254, 0.0
  %284 = vadd.xlane.f32.xlu0 %v283
  %v285 = vpop.xlane.xlu0 %284
  %v286 = vsel %vm267, %v259, 0.0
  %287 = vadd.xlane.f32.xlu0 %v286
  %v288 = vpop.xlane.xlu0 %287
  %v289 = vsel %vm267, %v262, 0.0
  %290 = vadd.xlane.f32.xlu0 %v289
  %v291 = vpop.xlane.xlu0 %290
  %v292 = vrcp.pop 32.0
  %v293 = vmul.f32 %v270, %v292
  %v294 = vmul.f32 %v273, %v292
  %v295 = vmul.f32 %v276, %v292
  %v296 = vmul.f32 %v279, %v292
  %v297 = vmul.f32 %v282, %v292
  %v298 = vmul.f32 %v285, %v292
  %v299 = vmul.f32 %v288, %v292
  %v300 = vmul.f32 %v291, %v292
  %v301 = vsub.f32 %v235, %v293
  %v302 = vsub.f32 %v238, %v294
  %v303 = vsub.f32 %v243, %v295
  %v304 = vsub.f32 %v246, %v296
  %v305 = vsub.f32 %v251, %v297
  %v306 = vsub.f32 %v254, %v298
  %v307 = vsub.f32 %v259, %v299
  %v308 = vsub.f32 %v262, %v300
  %v309 = vmul.f32 %v301, %v301
  %v310 = vmul.f32 %v302, %v302
  %v311 = vmul.f32 %v303, %v303
  %v312 = vmul.f32 %v304, %v304
  %v313 = vmul.f32 %v305, %v305
  %v314 = vmul.f32 %v306, %v306
  %v315 = vmul.f32 %v307, %v307
  %v316 = vmul.f32 %v308, %v308
  %v317 = vsel %vm267, %v309, 0.0
  %318 = vadd.xlane.f32.xlu0 %v317
  %v319 = vpop.xlane.xlu0 %318
  %v320 = vsel %vm267, %v310, 0.0
  %321 = vadd.xlane.f32.xlu0 %v320
  %v322 = vpop.xlane.xlu0 %321
  %v323 = vsel %vm267, %v311, 0.0
  %324 = vadd.xlane.f32.xlu0 %v323
  %v325 = vpop.xlane.xlu0 %324
  %v326 = vsel %vm267, %v312, 0.0
  %327 = vadd.xlane.f32.xlu0 %v326
  %v328 = vpop.xlane.xlu0 %327
  %v329 = vsel %vm267, %v313, 0.0
  %330 = vadd.xlane.f32.xlu0 %v329
  %v331 = vpop.xlane.xlu0 %330
  %v332 = vsel %vm267, %v314, 0.0
  %333 = vadd.xlane.f32.xlu0 %v332
  %v334 = vpop.xlane.xlu0 %333
  %v335 = vsel %vm267, %v315, 0.0
  %336 = vadd.xlane.f32.xlu0 %v335
  %v337 = vpop.xlane.xlu0 %336
  %v338 = vsel %vm267, %v316, 0.0
  %339 = vadd.xlane.f32.xlu0 %v338
  %v340 = vpop.xlane.xlu0 %339
  %v341 = vmul.f32 %v319, %v292
  %v342 = vmul.f32 %v322, %v292
  %v343 = vmul.f32 %v325, %v292
  %v344 = vmul.f32 %v328, %v292
  %v345 = vmul.f32 %v331, %v292
  %v346 = vmul.f32 %v334, %v292
  %v347 = vmul.f32 %v337, %v292
  %v348 = vmul.f32 %v340, %v292
  %v349 = vadd.f32 %v341, 1e-06
  %v350 = vadd.f32 %v342, 1e-06
  %v351 = vadd.f32 %v343, 1e-06
  %v352 = vadd.f32 %v344, 1e-06
  %v353 = vadd.f32 %v345, 1e-06
  %v354 = vadd.f32 %v346, 1e-06
  %v355 = vadd.f32 %v347, 1e-06
  %v356 = vadd.f32 %v348, 1e-06
  %v357 = vrsqrt.pop %v349
  %v358 = vrsqrt.pop %v350
  %v359 = vrsqrt.pop %v351
  %v360 = vrsqrt.pop %v352
  %v361 = vrsqrt.pop %v353
  %v362 = vrsqrt.pop %v354
  %v363 = vrsqrt.pop %v355
  %v364 = vrsqrt.pop %v356
  %v365 = vmul.f32 %v301, %v357
  %v366 = vmul.f32 %v302, %v358
  %v367 = vmul.f32 %v303, %v359
  %v368 = vmul.f32 %v304, %v360
  %v369 = vmul.f32 %v305, %v361
  %v370 = vmul.f32 %v306, %v362
  %v371 = vmul.f32 %v307, %v363
  %v372 = vmul.f32 %v308, %v364
  %v373 = vlaneseq
  %v374 = vshrl.u32 %v373, 7
  %v375 = vsub.s32 0, %v374
  %v376 = vrot.slane %v265, %v375
  %v377 = vmul.f32 %v365, %v376
  %v378 = vmul.f32 %v366, %v376
  %v379 = vmul.f32 %v367, %v376
  %v380 = vmul.f32 %v368, %v376
  %v381 = vmul.f32 %v369, %v376
  %v382 = vmul.f32 %v370, %v376
  %v383 = vmul.f32 %v371, %v376
  %v384 = vmul.f32 %v372, %v376
  %v385 = vlaneseq
  %v386 = vshrl.u32 %v385, 7
  %v387 = vsub.s32 1, %v386
  %v388 = vrot.slane %v265, %v387
  %v389 = vadd.f32 %v377, %v388
  %v390 = vadd.f32 %v378, %v388
  %v391 = vadd.f32 %v379, %v388
  %v392 = vadd.f32 %v380, %v388
  %v393 = vadd.f32 %v381, %v388
  %v394 = vadd.f32 %v382, %v388
  %v395 = vadd.f32 %v383, %v388
  %v396 = vadd.f32 %v384, %v388
  %v397 = vpack.c.bf16 %v390, %v389
  %v398 = vpack.c.bf16 %v392, %v391
  %v399 = vpack.c.bf16 %v394, %v393
  %v400 = vpack.c.bf16 %v396, %v395
  %v401 = vld [vmem:[%s2] sm:$0xf]
  %v402 = vld [vmem:[%s2 + $0x4] sm:$0xf]
  %v403 = vld [vmem:[%s2 + $0x8] sm:$0xf]
  %v404 = vld [vmem:[%s2 + $0xc] sm:$0xf]
  %v409 = vunpack.c.l.b16 %v401
  %v410 = vunpack.c.l.b16 %v402
  %v411 = vunpack.c.l.b16 %v403
  %v412 = vunpack.c.l.b16 %v404
  %v413 = vpack.c.b16 %v410, %v409
  %v414 = vpack.c.b16 %v412, %v411
  %v418 = vsel %vm267, %v397, 0
  %v421 = vsel %vm267, %v398, 0
  %v424 = vsel %vm267, %v399, 0
  %v427 = vsel %vm267, %v400, 0
  %429 = vmatprep.subr.bf16.mxu0 0
  %430 = vmatpush1.bf16.msra.mxu0 %v413
  %431 = vmatprep.subr.bf16.mxu0 0
  %432 = vmatpush1.bf16.msra.mxu0 %v414
  %433 = vmatprep.subr.bf16.mxu0 0
  %434 = vmatpush1.bf16.msra.mxu0 0
  %435 = vmatprep.subr.bf16.mxu0 0
  %436 = vmatpush1.bf16.msra.mxu0 0
  %437 = vmatprep.subr.bf16.mxu0 0
  %438 = vmatpush1.bf16.msra.mxu0 0
  %439 = vmatprep.subr.bf16.mxu0 0
  %440 = vmatpush1.bf16.msra.mxu0 0
  %441 = vmatprep.subr.bf16.mxu0 0
  %442 = vmatpush1.bf16.msra.mxu0 0
  %443 = vmatprep.subr.bf16.mxu0 0
  %444 = vmatpush1.bf16.msra.mxu0 0
  %445 = vmatprep.subr.bf16.mxu0 0
  %446 = vmatpush1.bf16.msra.mxu0 0
  %447 = vmatprep.subr.bf16.mxu0 0
  %448 = vmatpush1.bf16.msra.mxu0 0
  %449 = vmatprep.subr.bf16.mxu0 0
  %450 = vmatpush1.bf16.msra.mxu0 0
  %451 = vmatprep.subr.bf16.mxu0 0
  %452 = vmatpush1.bf16.msra.mxu0 0
  %453 = vmatprep.subr.bf16.mxu0 0
  %454 = vmatpush1.bf16.msra.mxu0 0
  %455 = vmatprep.subr.bf16.mxu0 0
  %456 = vmatpush1.bf16.msra.mxu0 0
  %457 = vmatprep.subr.bf16.mxu0 0
  %458 = vmatpush1.bf16.msra.mxu0 0
  %459 = vmatprep.subr.bf16.mxu0 0
  %460 = vmatpush1.bf16.msra.mxu0 0
  %461 = vmatprep.mubr.bf16.mxu0 0
  %462 = vmatmul.mubr.bf16.gmra.mrb[0].mxu0 %v418
  %v463 = vpop.f32.mrb[0].mxu0
  %v464 = vadd.f32 0.0, %v463
  %v465 = vpop.f32.mrb[0].mxu0
  %v466 = vpop.f32.mrb[0].mxu0
  %v467 = vadd.f32 0.0, %v466
  %v468 = vpop.f32.mrb[0].mxu0
  %469 = vmatprep.mubr.bf16.mxu0 0
  %470 = vmatmul.mubr.bf16.gmra.mrb[0].mxu0 %v421
  %v471 = vpop.f32.mrb[0].mxu0
  %v472 = vadd.f32 0.0, %v471
  %v473 = vpop.f32.mrb[0].mxu0
  %v474 = vpop.f32.mrb[0].mxu0
  %v475 = vadd.f32 0.0, %v474
  %v476 = vpop.f32.mrb[0].mxu0
  %477 = vmatprep.mubr.bf16.mxu0 0
  %478 = vmatmul.mubr.bf16.gmra.mrb[0].mxu0 %v424
  %v479 = vpop.f32.mrb[0].mxu0
  %v480 = vadd.f32 0.0, %v479
  %v481 = vpop.f32.mrb[0].mxu0
  %v482 = vpop.f32.mrb[0].mxu0
  %v483 = vadd.f32 0.0, %v482
  %v484 = vpop.f32.mrb[0].mxu0
  %485 = vmatprep.mubr.bf16.mxu0 0
  %486 = vmatmul.mubr.bf16.gmra.mrb[0].mxu0 %v427
  %v487 = vpop.f32.mrb[0].mxu0
  %v488 = vadd.f32 0.0, %v487
  %v489 = vpop.f32.mrb[0].mxu0
  %v490 = vpop.f32.mrb[0].mxu0
  %v491 = vadd.f32 0.0, %v490
  %v492 = vpop.f32.mrb[0].mxu0
  %493 = vdwg.mxu0
  %v494 = vlaneseq
  %v495 = vshrl.u32 %v494, 7
  %v496 = vsub.s32 2, %v495
  %v497 = vrot.slane %v265, %v496
  %v498 = vadd.f32 %v464, %v497
  %v499 = vadd.f32 %v467, %v497
  %v500 = vadd.f32 %v472, %v497
  %v501 = vadd.f32 %v475, %v497
  %v502 = vadd.f32 %v480, %v497
  %v503 = vadd.f32 %v483, %v497
  %v504 = vadd.f32 %v488, %v497
  %v505 = vadd.f32 %v491, %v497
  %v506 = vlaneseq
  %v507 = vshrl.u32 %v506, 7
  %v508 = vsub.s32 3, %v507
  %v509 = vrot.slane %v265, %v508
  %511 = vrot.lane.b32.xlu0 %v509, 32
  %v512 = vpop.permute.xlu0 %511
  %v514 = vadd.f32 %v464, %v512
  %v515 = vadd.f32 %v467, %v512
  %v516 = vadd.f32 %v472, %v512
  %v517 = vadd.f32 %v475, %v512
  %v518 = vadd.f32 %v480, %v512
  %v519 = vadd.f32 %v483, %v512
  %v520 = vadd.f32 %v488, %v512
  %v521 = vadd.f32 %v491, %v512
  %v522 = vlaneseq
  %v523 = vshrl.u32 %v522, 7
  %v524 = vsub.s32 4, %v523
  %v525 = vrot.slane %v265, %v524
  %527 = vrot.lane.b32.xlu0 %v525, 64
  %v528 = vpop.permute.xlu0 %527
  %v530 = vadd.f32 %v464, %v528
  %v531 = vadd.f32 %v467, %v528
  %v532 = vadd.f32 %v472, %v528
  %v533 = vadd.f32 %v475, %v528
  %v534 = vadd.f32 %v480, %v528
  %v535 = vadd.f32 %v483, %v528
  %v536 = vadd.f32 %v488, %v528
  %v537 = vadd.f32 %v491, %v528
  %v538 = vpack.c.bf16 %v499, %v498
  %v539 = vpack.c.bf16 %v501, %v500
  %v540 = vpack.c.bf16 %v503, %v502
  %v541 = vpack.c.bf16 %v505, %v504
  %v542 = vpack.c.bf16 %v515, %v514
  %v543 = vpack.c.bf16 %v517, %v516
  %v544 = vpack.c.bf16 %v519, %v518
  %v545 = vpack.c.bf16 %v521, %v520
  %v546 = vpack.c.bf16 %v531, %v530
  %v547 = vpack.c.bf16 %v533, %v532
  %v548 = vpack.c.bf16 %v535, %v534
  %v549 = vpack.c.bf16 %v537, %v536
  %551 = vrot.lane.b32.xlu0 %v542, 96
  %v552 = vpop.permute.xlu0 %551
  %vm553 = vcmask 130048
  %v555 = vsel %vm553, %v538, 0
  %v558 = vsel %vm553, %v552, 0
  %560 = vmatprep.subr.bf16.mxu0 0
  %561 = vmatpush1.bf16.xpose.msra.mxu0 %v558
  %562 = vmatprep.subr.bf16.mxu0 0
  %563 = vmatpush1.bf16.xpose.msra.mxu0 0
  %564 = vmatprep.subr.bf16.mxu0 0
  %565 = vmatpush1.bf16.xpose.msra.mxu0 0
  %566 = vmatprep.subr.bf16.mxu0 0
  %567 = vmatpush1.bf16.xpose.msra.mxu0 0
  %568 = vmatprep.subr.bf16.mxu0 0
  %569 = vmatpush1.bf16.xpose.msra.mxu0 0
  %570 = vmatprep.subr.bf16.mxu0 0
  %571 = vmatpush1.bf16.xpose.msra.mxu0 0
  %572 = vmatprep.subr.bf16.mxu0 0
  %573 = vmatpush1.bf16.xpose.msra.mxu0 0
  %574 = vmatprep.subr.bf16.mxu0 0
  %575 = vmatpush1.bf16.xpose.msra.mxu0 0
  %576 = vmatprep.subr.bf16.mxu0 0
  %577 = vmatpush1.bf16.xpose.msra.mxu0 0
  %578 = vmatprep.subr.bf16.mxu0 0
  %579 = vmatpush1.bf16.xpose.msra.mxu0 0
  %580 = vmatprep.subr.bf16.mxu0 0
  %581 = vmatpush1.bf16.xpose.msra.mxu0 0
  %582 = vmatprep.subr.bf16.mxu0 0
  %583 = vmatpush1.bf16.xpose.msra.mxu0 0
  %584 = vmatprep.subr.bf16.mxu0 0
  %585 = vmatpush1.bf16.xpose.msra.mxu0 0
  %586 = vmatprep.subr.bf16.mxu0 0
  %587 = vmatpush1.bf16.xpose.msra.mxu0 0
  %588 = vmatprep.subr.bf16.mxu0 0
  %589 = vmatpush1.bf16.xpose.msra.mxu0 0
  %590 = vmatprep.subr.bf16.mxu0 0
  %591 = vmatpush1.bf16.xpose.msra.mxu0 0
  %592 = vmatprep.mubr.bf16.mxu0 0
  %593 = vmatmul.mubr.bf16.gmra.mrb[0].mxu0 %v555
  %v594 = vpop.f32.mrb[0].mxu0
  %v595 = vadd.f32 0.0, %v594
  %v596 = vpop.f32.mrb[0].mxu0
  %v597 = vpop.f32.mrb[0].mxu0
  %v598 = vadd.f32 0.0, %v597
  %v599 = vpop.f32.mrb[0].mxu0
  %600 = vdwg.mxu0
  %602 = vrot.lane.b32.xlu0 %v543, 96
  %v603 = vpop.permute.xlu0 %602
  %v605 = vsel %vm553, %v539, 0
  %v608 = vsel %vm553, %v603, 0
  %610 = vmatprep.subr.bf16.mxu0 0
  %611 = vmatpush1.bf16.xpose.msra.mxu0 %v608
  %612 = vmatprep.subr.bf16.mxu0 0
  %613 = vmatpush1.bf16.xpose.msra.mxu0 0
  %614 = vmatprep.subr.bf16.mxu0 0
  %615 = vmatpush1.bf16.xpose.msra.mxu0 0
  %616 = vmatprep.subr.bf16.mxu0 0
  %617 = vmatpush1.bf16.xpose.msra.mxu0 0
  %618 = vmatprep.subr.bf16.mxu0 0
  %619 = vmatpush1.bf16.xpose.msra.mxu0 0
  %620 = vmatprep.subr.bf16.mxu0 0
  %621 = vmatpush1.bf16.xpose.msra.mxu0 0
  %622 = vmatprep.subr.bf16.mxu0 0
  %623 = vmatpush1.bf16.xpose.msra.mxu0 0
  %624 = vmatprep.subr.bf16.mxu0 0
  %625 = vmatpush1.bf16.xpose.msra.mxu0 0
  %626 = vmatprep.subr.bf16.mxu0 0
  %627 = vmatpush1.bf16.xpose.msra.mxu0 0
  %628 = vmatprep.subr.bf16.mxu0 0
  %629 = vmatpush1.bf16.xpose.msra.mxu0 0
  %630 = vmatprep.subr.bf16.mxu0 0
  %631 = vmatpush1.bf16.xpose.msra.mxu0 0
  %632 = vmatprep.subr.bf16.mxu0 0
  %633 = vmatpush1.bf16.xpose.msra.mxu0 0
  %634 = vmatprep.subr.bf16.mxu0 0
  %635 = vmatpush1.bf16.xpose.msra.mxu0 0
  %636 = vmatprep.subr.bf16.mxu0 0
  %637 = vmatpush1.bf16.xpose.msra.mxu0 0
  %638 = vmatprep.subr.bf16.mxu0 0
  %639 = vmatpush1.bf16.xpose.msra.mxu0 0
  %640 = vmatprep.subr.bf16.mxu0 0
  %641 = vmatpush1.bf16.xpose.msra.mxu0 0
  %642 = vmatprep.mubr.bf16.mxu0 0
  %643 = vmatmul.mubr.bf16.gmra.mrb[0].mxu0 %v605
  %v644 = vpop.f32.mrb[0].mxu0
  %v645 = vadd.f32 0.0, %v644
  %v646 = vpop.f32.mrb[0].mxu0
  %v647 = vpop.f32.mrb[0].mxu0
  %v648 = vadd.f32 0.0, %v647
  %v649 = vpop.f32.mrb[0].mxu0
  %650 = vdwg.mxu0
  %652 = vrot.lane.b32.xlu0 %v544, 96
  %v653 = vpop.permute.xlu0 %652
  %v655 = vsel %vm553, %v540, 0
  %v658 = vsel %vm553, %v653, 0
  %660 = vmatprep.subr.bf16.mxu0 0
  %661 = vmatpush1.bf16.xpose.msra.mxu0 %v658
  %662 = vmatprep.subr.bf16.mxu0 0
  %663 = vmatpush1.bf16.xpose.msra.mxu0 0
  %664 = vmatprep.subr.bf16.mxu0 0
  %665 = vmatpush1.bf16.xpose.msra.mxu0 0
  %666 = vmatprep.subr.bf16.mxu0 0
  %667 = vmatpush1.bf16.xpose.msra.mxu0 0
  %668 = vmatprep.subr.bf16.mxu0 0
  %669 = vmatpush1.bf16.xpose.msra.mxu0 0
  %670 = vmatprep.subr.bf16.mxu0 0
  %671 = vmatpush1.bf16.xpose.msra.mxu0 0
  %672 = vmatprep.subr.bf16.mxu0 0
  %673 = vmatpush1.bf16.xpose.msra.mxu0 0
  %674 = vmatprep.subr.bf16.mxu0 0
  %675 = vmatpush1.bf16.xpose.msra.mxu0 0
  %676 = vmatprep.subr.bf16.mxu0 0
  %677 = vmatpush1.bf16.xpose.msra.mxu0 0
  %678 = vmatprep.subr.bf16.mxu0 0
  %679 = vmatpush1.bf16.xpose.msra.mxu0 0
  %680 = vmatprep.subr.bf16.mxu0 0
  %681 = vmatpush1.bf16.xpose.msra.mxu0 0
  %682 = vmatprep.subr.bf16.mxu0 0
  %683 = vmatpush1.bf16.xpose.msra.mxu0 0
  %684 = vmatprep.subr.bf16.mxu0 0
  %685 = vmatpush1.bf16.xpose.msra.mxu0 0
  %686 = vmatprep.subr.bf16.mxu0 0
  %687 = vmatpush1.bf16.xpose.msra.mxu0 0
  %688 = vmatprep.subr.bf16.mxu0 0
  %689 = vmatpush1.bf16.xpose.msra.mxu0 0
  %690 = vmatprep.subr.bf16.mxu0 0
  %691 = vmatpush1.bf16.xpose.msra.mxu0 0
  %692 = vmatprep.mubr.bf16.mxu0 0
  %693 = vmatmul.mubr.bf16.gmra.mrb[0].mxu0 %v655
  %v694 = vpop.f32.mrb[0].mxu0
  %v695 = vadd.f32 0.0, %v694
  %v696 = vpop.f32.mrb[0].mxu0
  %v697 = vpop.f32.mrb[0].mxu0
  %v698 = vadd.f32 0.0, %v697
  %v699 = vpop.f32.mrb[0].mxu0
  %700 = vdwg.mxu0
  %702 = vrot.lane.b32.xlu0 %v545, 96
  %v703 = vpop.permute.xlu0 %702
  %v705 = vsel %vm553, %v541, 0
  %v708 = vsel %vm553, %v703, 0
  %710 = vmatprep.subr.bf16.mxu0 0
  %711 = vmatpush1.bf16.xpose.msra.mxu0 %v708
  %712 = vmatprep.subr.bf16.mxu0 0
  %713 = vmatpush1.bf16.xpose.msra.mxu0 0
  %714 = vmatprep.subr.bf16.mxu0 0
  %715 = vmatpush1.bf16.xpose.msra.mxu0 0
  %716 = vmatprep.subr.bf16.mxu0 0
  %717 = vmatpush1.bf16.xpose.msra.mxu0 0
  %718 = vmatprep.subr.bf16.mxu0 0
  %719 = vmatpush1.bf16.xpose.msra.mxu0 0
  %720 = vmatprep.subr.bf16.mxu0 0
  %721 = vmatpush1.bf16.xpose.msra.mxu0 0
  %722 = vmatprep.subr.bf16.mxu0 0
  %723 = vmatpush1.bf16.xpose.msra.mxu0 0
  %724 = vmatprep.subr.bf16.mxu0 0
  %725 = vmatpush1.bf16.xpose.msra.mxu0 0
  %726 = vmatprep.subr.bf16.mxu0 0
  %727 = vmatpush1.bf16.xpose.msra.mxu0 0
  %728 = vmatprep.subr.bf16.mxu0 0
  %729 = vmatpush1.bf16.xpose.msra.mxu0 0
  %730 = vmatprep.subr.bf16.mxu0 0
  %731 = vmatpush1.bf16.xpose.msra.mxu0 0
  %732 = vmatprep.subr.bf16.mxu0 0
  %733 = vmatpush1.bf16.xpose.msra.mxu0 0
  %734 = vmatprep.subr.bf16.mxu0 0
  %735 = vmatpush1.bf16.xpose.msra.mxu0 0
  %736 = vmatprep.subr.bf16.mxu0 0
  %737 = vmatpush1.bf16.xpose.msra.mxu0 0
  %738 = vmatprep.subr.bf16.mxu0 0
  %739 = vmatpush1.bf16.xpose.msra.mxu0 0
  %740 = vmatprep.subr.bf16.mxu0 0
  %741 = vmatpush1.bf16.xpose.msra.mxu0 0
  %742 = vmatprep.mubr.bf16.mxu0 0
  %743 = vmatmul.mubr.bf16.gmra.mrb[0].mxu0 %v705
  %v744 = vpop.f32.mrb[0].mxu0
  %v745 = vadd.f32 0.0, %v744
  %v746 = vpop.f32.mrb[0].mxu0
  %v747 = vpop.f32.mrb[0].mxu0
  %v748 = vadd.f32 0.0, %v747
  %v749 = vpop.f32.mrb[0].mxu0
  %750 = vdwg.mxu0
  %v751 = vsel %vm553, %v595, -inf
  %752 = vmax.xlane.f32.xlu0 %v751
  %v753 = vpop.xlane.xlu0 %752
  %v754 = vsel %vm553, %v598, -inf
  %755 = vmax.xlane.f32.xlu0 %v754
  %v756 = vpop.xlane.xlu0 %755
  %v757 = vsel %vm553, %v645, -inf
  %758 = vmax.xlane.f32.xlu0 %v757
  %v759 = vpop.xlane.xlu0 %758
  %v760 = vsel %vm553, %v648, -inf
  %761 = vmax.xlane.f32.xlu0 %v760
  %v762 = vpop.xlane.xlu0 %761
  %v763 = vsel %vm553, %v695, -inf
  %764 = vmax.xlane.f32.xlu0 %v763
  %v765 = vpop.xlane.xlu0 %764
  %v766 = vsel %vm553, %v698, -inf
  %767 = vmax.xlane.f32.xlu0 %v766
  %v768 = vpop.xlane.xlu0 %767
  %v769 = vsel %vm553, %v745, -inf
  %770 = vmax.xlane.f32.xlu0 %v769
  %v771 = vpop.xlane.xlu0 %770
  %v772 = vsel %vm553, %v748, -inf
  %773 = vmax.xlane.f32.xlu0 %v772
  %v774 = vpop.xlane.xlu0 %773
  %v775 = vsub.f32 %v595, %v753
  %v776 = vsub.f32 %v598, %v756
  %v777 = vsub.f32 %v645, %v759
  %v778 = vsub.f32 %v648, %v762
  %v779 = vsub.f32 %v695, %v765
  %v780 = vsub.f32 %v698, %v768
  %v781 = vsub.f32 %v745, %v771
  %v782 = vsub.f32 %v748, %v774
  %v783 = vmul.f32 %v775, 1.442695
  %v784 = vpow.pop %v783
  %v785 = vmul.f32 %v776, 1.442695
  %v786 = vpow.pop %v785
  %v787 = vmul.f32 %v777, 1.442695
  %v788 = vpow.pop %v787
  %v789 = vmul.f32 %v778, 1.442695
  %v790 = vpow.pop %v789
  %v791 = vmul.f32 %v779, 1.442695
  %v792 = vpow.pop %v791
  %v793 = vmul.f32 %v780, 1.442695
  %v794 = vpow.pop %v793
  %v795 = vmul.f32 %v781, 1.442695
  %v796 = vpow.pop %v795
  %v797 = vmul.f32 %v782, 1.442695
  %v798 = vpow.pop %v797
  %v799 = vsel %vm553, %v784, 0.0
  %800 = vadd.xlane.f32.xlu0 %v799
  %v801 = vpop.xlane.xlu0 %800
  %v802 = vsel %vm553, %v786, 0.0
  %803 = vadd.xlane.f32.xlu0 %v802
  %v804 = vpop.xlane.xlu0 %803
  %v805 = vsel %vm553, %v788, 0.0
  %806 = vadd.xlane.f32.xlu0 %v805
  %v807 = vpop.xlane.xlu0 %806
  %v808 = vsel %vm553, %v790, 0.0
  %809 = vadd.xlane.f32.xlu0 %v808
  %v810 = vpop.xlane.xlu0 %809
  %v811 = vsel %vm553, %v792, 0.0
  %812 = vadd.xlane.f32.xlu0 %v811
  %v813 = vpop.xlane.xlu0 %812
  %v814 = vsel %vm553, %v794, 0.0
  %815 = vadd.xlane.f32.xlu0 %v814
  %v816 = vpop.xlane.xlu0 %815
  %v817 = vsel %vm553, %v796, 0.0
  %818 = vadd.xlane.f32.xlu0 %v817
  %v819 = vpop.xlane.xlu0 %818
  %v820 = vsel %vm553, %v798, 0.0
  %821 = vadd.xlane.f32.xlu0 %v820
  %v822 = vpop.xlane.xlu0 %821
  %v823 = vrcp.pop %v801
  %v824 = vrcp.pop %v804
  %v825 = vrcp.pop %v807
  %v826 = vrcp.pop %v810
  %v827 = vrcp.pop %v813
  %v828 = vrcp.pop %v816
  %v829 = vrcp.pop %v819
  %v830 = vrcp.pop %v822
  %v831 = vmul.f32 %v784, %v823
  %v832 = vmul.f32 %v786, %v824
  %v833 = vmul.f32 %v788, %v825
  %v834 = vmul.f32 %v790, %v826
  %v835 = vmul.f32 %v792, %v827
  %v836 = vmul.f32 %v794, %v828
  %v837 = vmul.f32 %v796, %v829
  %v838 = vmul.f32 %v798, %v830
  %v839 = vpack.c.bf16 %v832, %v831
  %v840 = vpack.c.bf16 %v834, %v833
  %v841 = vpack.c.bf16 %v836, %v835
  %v842 = vpack.c.bf16 %v838, %v837
  %844 = vrot.lane.b32.xlu0 %v546, 64
  %v845 = vpop.permute.xlu0 %844
  %v848 = vsel %vm553, %v839, 0
  %850 = vmatprep.subr.bf16.mxu0 0
  %851 = vmatpush1.bf16.msra.mxu0 %v845
  %852 = vmatprep.subr.bf16.mxu0 0
  %853 = vmatpush1.bf16.msra.mxu0 0
  %854 = vmatprep.subr.bf16.mxu0 0
  %855 = vmatpush1.bf16.msra.mxu0 0
  %856 = vmatprep.subr.bf16.mxu0 0
  %857 = vmatpush1.bf16.msra.mxu0 0
  %858 = vmatprep.subr.bf16.mxu0 0
  %859 = vmatpush1.bf16.msra.mxu0 0
  %860 = vmatprep.subr.bf16.mxu0 0
  %861 = vmatpush1.bf16.msra.mxu0 0
  %862 = vmatprep.subr.bf16.mxu0 0
  %863 = vmatpush1.bf16.msra.mxu0 0
  %864 = vmatprep.subr.bf16.mxu0 0
  %865 = vmatpush1.bf16.msra.mxu0 0
  %866 = vmatprep.subr.bf16.mxu0 0
  %867 = vmatpush1.bf16.msra.mxu0 0
  %868 = vmatprep.subr.bf16.mxu0 0
  %869 = vmatpush1.bf16.msra.mxu0 0
  %870 = vmatprep.subr.bf16.mxu0 0
  %871 = vmatpush1.bf16.msra.mxu0 0
  %872 = vmatprep.subr.bf16.mxu0 0
  %873 = vmatpush1.bf16.msra.mxu0 0
  %874 = vmatprep.subr.bf16.mxu0 0
  %875 = vmatpush1.bf16.msra.mxu0 0
  %876 = vmatprep.subr.bf16.mxu0 0
  %877 = vmatpush1.bf16.msra.mxu0 0
  %878 = vmatprep.subr.bf16.mxu0 0
  %879 = vmatpush1.bf16.msra.mxu0 0
  %880 = vmatprep.subr.bf16.mxu0 0
  %881 = vmatpush1.bf16.msra.mxu0 0
  %882 = vmatprep.mubr.bf16.mxu0 0
  %883 = vmatmul.mubr.bf16.gmra.mrb[0].mxu0 %v848
  %v884 = vpop.f32.mrb[0].mxu0
  %v885 = vadd.f32 0.0, %v884
  %v886 = vpop.f32.mrb[0].mxu0
  %v887 = vpop.f32.mrb[0].mxu0
  %v888 = vadd.f32 0.0, %v887
  %v889 = vpop.f32.mrb[0].mxu0
  %890 = vdwg.mxu0
  %892 = vrot.lane.b32.xlu0 %v547, 64
  %v893 = vpop.permute.xlu0 %892
  %v896 = vsel %vm553, %v840, 0
  %898 = vmatprep.subr.bf16.mxu0 0
  %899 = vmatpush1.bf16.msra.mxu0 %v893
  %900 = vmatprep.subr.bf16.mxu0 0
  %901 = vmatpush1.bf16.msra.mxu0 0
  %902 = vmatprep.subr.bf16.mxu0 0
  %903 = vmatpush1.bf16.msra.mxu0 0
  %904 = vmatprep.subr.bf16.mxu0 0
  %905 = vmatpush1.bf16.msra.mxu0 0
  %906 = vmatprep.subr.bf16.mxu0 0
  %907 = vmatpush1.bf16.msra.mxu0 0
  %908 = vmatprep.subr.bf16.mxu0 0
  %909 = vmatpush1.bf16.msra.mxu0 0
  %910 = vmatprep.subr.bf16.mxu0 0
  %911 = vmatpush1.bf16.msra.mxu0 0
  %912 = vmatprep.subr.bf16.mxu0 0
  %913 = vmatpush1.bf16.msra.mxu0 0
  %914 = vmatprep.subr.bf16.mxu0 0
  %915 = vmatpush1.bf16.msra.mxu0 0
  %916 = vmatprep.subr.bf16.mxu0 0
  %917 = vmatpush1.bf16.msra.mxu0 0
  %918 = vmatprep.subr.bf16.mxu0 0
  %919 = vmatpush1.bf16.msra.mxu0 0
  %920 = vmatprep.subr.bf16.mxu0 0
  %921 = vmatpush1.bf16.msra.mxu0 0
  %922 = vmatprep.subr.bf16.mxu0 0
  %923 = vmatpush1.bf16.msra.mxu0 0
  %924 = vmatprep.subr.bf16.mxu0 0
  %925 = vmatpush1.bf16.msra.mxu0 0
  %926 = vmatprep.subr.bf16.mxu0 0
  %927 = vmatpush1.bf16.msra.mxu0 0
  %928 = vmatprep.subr.bf16.mxu0 0
  %929 = vmatpush1.bf16.msra.mxu0 0
  %930 = vmatprep.mubr.bf16.mxu0 0
  %931 = vmatmul.mubr.bf16.gmra.mrb[0].mxu0 %v896
  %v932 = vpop.f32.mrb[0].mxu0
  %v933 = vadd.f32 0.0, %v932
  %v934 = vpop.f32.mrb[0].mxu0
  %v935 = vpop.f32.mrb[0].mxu0
  %v936 = vadd.f32 0.0, %v935
  %v937 = vpop.f32.mrb[0].mxu0
  %938 = vdwg.mxu0
  %940 = vrot.lane.b32.xlu0 %v548, 64
  %v941 = vpop.permute.xlu0 %940
  %v944 = vsel %vm553, %v841, 0
  %946 = vmatprep.subr.bf16.mxu0 0
  %947 = vmatpush1.bf16.msra.mxu0 %v941
  %948 = vmatprep.subr.bf16.mxu0 0
  %949 = vmatpush1.bf16.msra.mxu0 0
  %950 = vmatprep.subr.bf16.mxu0 0
  %951 = vmatpush1.bf16.msra.mxu0 0
  %952 = vmatprep.subr.bf16.mxu0 0
  %953 = vmatpush1.bf16.msra.mxu0 0
  %954 = vmatprep.subr.bf16.mxu0 0
  %955 = vmatpush1.bf16.msra.mxu0 0
  %956 = vmatprep.subr.bf16.mxu0 0
  %957 = vmatpush1.bf16.msra.mxu0 0
  %958 = vmatprep.subr.bf16.mxu0 0
  %959 = vmatpush1.bf16.msra.mxu0 0
  %960 = vmatprep.subr.bf16.mxu0 0
  %961 = vmatpush1.bf16.msra.mxu0 0
  %962 = vmatprep.subr.bf16.mxu0 0
  %963 = vmatpush1.bf16.msra.mxu0 0
  %964 = vmatprep.subr.bf16.mxu0 0
  %965 = vmatpush1.bf16.msra.mxu0 0
  %966 = vmatprep.subr.bf16.mxu0 0
  %967 = vmatpush1.bf16.msra.mxu0 0
  %968 = vmatprep.subr.bf16.mxu0 0
  %969 = vmatpush1.bf16.msra.mxu0 0
  %970 = vmatprep.subr.bf16.mxu0 0
  %971 = vmatpush1.bf16.msra.mxu0 0
  %972 = vmatprep.subr.bf16.mxu0 0
  %973 = vmatpush1.bf16.msra.mxu0 0
  %974 = vmatprep.subr.bf16.mxu0 0
  %975 = vmatpush1.bf16.msra.mxu0 0
  %976 = vmatprep.subr.bf16.mxu0 0
  %977 = vmatpush1.bf16.msra.mxu0 0
  %978 = vmatprep.mubr.bf16.mxu0 0
  %979 = vmatmul.mubr.bf16.gmra.mrb[0].mxu0 %v944
  %v980 = vpop.f32.mrb[0].mxu0
  %v981 = vadd.f32 0.0, %v980
  %v982 = vpop.f32.mrb[0].mxu0
  %v983 = vpop.f32.mrb[0].mxu0
  %v984 = vadd.f32 0.0, %v983
  %v985 = vpop.f32.mrb[0].mxu0
  %986 = vdwg.mxu0
  %988 = vrot.lane.b32.xlu0 %v549, 64
  %v989 = vpop.permute.xlu0 %988
  %v992 = vsel %vm553, %v842, 0
  %994 = vmatprep.subr.bf16.mxu0 0
  %995 = vmatpush1.bf16.msra.mxu0 %v989
  %996 = vmatprep.subr.bf16.mxu0 0
  %997 = vmatpush1.bf16.msra.mxu0 0
  %998 = vmatprep.subr.bf16.mxu0 0
  %999 = vmatpush1.bf16.msra.mxu0 0
  %1000 = vmatprep.subr.bf16.mxu0 0
  %1001 = vmatpush1.bf16.msra.mxu0 0
  %1002 = vmatprep.subr.bf16.mxu0 0
  %1003 = vmatpush1.bf16.msra.mxu0 0
  %1004 = vmatprep.subr.bf16.mxu0 0
  %1005 = vmatpush1.bf16.msra.mxu0 0
  %1006 = vmatprep.subr.bf16.mxu0 0
  %1007 = vmatpush1.bf16.msra.mxu0 0
  %1008 = vmatprep.subr.bf16.mxu0 0
  %1009 = vmatpush1.bf16.msra.mxu0 0
  %1010 = vmatprep.subr.bf16.mxu0 0
  %1011 = vmatpush1.bf16.msra.mxu0 0
  %1012 = vmatprep.subr.bf16.mxu0 0
  %1013 = vmatpush1.bf16.msra.mxu0 0
  %1014 = vmatprep.subr.bf16.mxu0 0
  %1015 = vmatpush1.bf16.msra.mxu0 0
  %1016 = vmatprep.subr.bf16.mxu0 0
  %1017 = vmatpush1.bf16.msra.mxu0 0
  %1018 = vmatprep.subr.bf16.mxu0 0
  %1019 = vmatpush1.bf16.msra.mxu0 0
  %1020 = vmatprep.subr.bf16.mxu0 0
  %1021 = vmatpush1.bf16.msra.mxu0 0
  %1022 = vmatprep.subr.bf16.mxu0 0
  %1023 = vmatpush1.bf16.msra.mxu0 0
  %1024 = vmatprep.subr.bf16.mxu0 0
  %1025 = vmatpush1.bf16.msra.mxu0 0
  %1026 = vmatprep.mubr.bf16.mxu0 0
  %1027 = vmatmul.mubr.bf16.gmra.mrb[0].mxu0 %v992
  %v1028 = vpop.f32.mrb[0].mxu0
  %v1029 = vadd.f32 0.0, %v1028
  %v1030 = vpop.f32.mrb[0].mxu0
  %v1031 = vpop.f32.mrb[0].mxu0
  %v1032 = vadd.f32 0.0, %v1031
  %v1033 = vpop.f32.mrb[0].mxu0
  %1034 = vdwg.mxu0
  %1036 = vrot.lane.b32.xlu0 %v538, 112
  %v1037 = vpop.permute.xlu0 %1036
  %1038 = vrot.lane.b32.xlu0 %v542, 80
  %v1039 = vpop.permute.xlu0 %1038
  %v1041 = vsel %vm553, %v1037, 0
  %v1044 = vsel %vm553, %v1039, 0
  %1046 = vmatprep.subr.bf16.mxu0 0
  %1047 = vmatpush1.bf16.xpose.msra.mxu0 %v1044
  %1048 = vmatprep.subr.bf16.mxu0 0
  %1049 = vmatpush1.bf16.xpose.msra.mxu0 0
  %1050 = vmatprep.subr.bf16.mxu0 0
  %1051 = vmatpush1.bf16.xpose.msra.mxu0 0
  %1052 = vmatprep.subr.bf16.mxu0 0
  %1053 = vmatpush1.bf16.xpose.msra.mxu0 0
  %1054 = vmatprep.subr.bf16.mxu0 0
  %1055 = vmatpush1.bf16.xpose.msra.mxu0 0
  %1056 = vmatprep.subr.bf16.mxu0 0
  %1057 = vmatpush1.bf16.xpose.msra.mxu0 0
  %1058 = vmatprep.subr.bf16.mxu0 0
  %1059 = vmatpush1.bf16.xpose.msra.mxu0 0
  %1060 = vmatprep.subr.bf16.mxu0 0
  %1061 = vmatpush1.bf16.xpose.msra.mxu0 0
  %1062 = vmatprep.subr.bf16.mxu0 0
  %1063 = vmatpush1.bf16.xpose.msra.mxu0 0
  %1064 = vmatprep.subr.bf16.mxu0 0
  %1065 = vmatpush1.bf16.xpose.msra.mxu0 0
  %1066 = vmatprep.subr.bf16.mxu0 0
  %1067 = vmatpush1.bf16.xpose.msra.mxu0 0
  %1068 = vmatprep.subr.bf16.mxu0 0
  %1069 = vmatpush1.bf16.xpose.msra.mxu0 0
  %1070 = vmatprep.subr.bf16.mxu0 0
  %1071 = vmatpush1.bf16.xpose.msra.mxu0 0
  %1072 = vmatprep.subr.bf16.mxu0 0
  %1073 = vmatpush1.bf16.xpose.msra.mxu0 0
  %1074 = vmatprep.subr.bf16.mxu0 0
  %1075 = vmatpush1.bf16.xpose.msra.mxu0 0
  %1076 = vmatprep.subr.bf16.mxu0 0
  %1077 = vmatpush1.bf16.xpose.msra.mxu0 0
  %1078 = vmatprep.mubr.bf16.mxu0 0
  %1079 = vmatmul.mubr.bf16.gmra.mrb[0].mxu0 %v1041
  %v1080 = vpop.f32.mrb[0].mxu0
  %v1081 = vadd.f32 0.0, %v1080
  %v1082 = vpop.f32.mrb[0].mxu0
  %v1083 = vpop.f32.mrb[0].mxu0
  %v1084 = vadd.f32 0.0, %v1083
  %v1085 = vpop.f32.mrb[0].mxu0
  %1086 = vdwg.mxu0
  %1088 = vrot.lane.b32.xlu0 %v539, 112
  %v1089 = vpop.permute.xlu0 %1088
  %1090 = vrot.lane.b32.xlu0 %v543, 80
  %v1091 = vpop.permute.xlu0 %1090
  %v1093 = vsel %vm553, %v1089, 0
  %v1096 = vsel %vm553, %v1091, 0
  %1098 = vmatprep.subr.bf16.mxu0 0
  %1099 = vmatpush1.bf16.xpose.msra.mxu0 %v1096
  %1100 = vmatprep.subr.bf16.mxu0 0
  %1101 = vmatpush1.bf16.xpose.msra.mxu0 0
  %1102 = vmatprep.subr.bf16.mxu0 0
  %1103 = vmatpush1.bf16.xpose.msra.mxu0 0
  %1104 = vmatprep.subr.bf16.mxu0 0
  %1105 = vmatpush1.bf16.xpose.msra.mxu0 0
  %1106 = vmatprep.subr.bf16.mxu0 0
  %1107 = vmatpush1.bf16.xpose.msra.mxu0 0
  %1108 = vmatprep.subr.bf16.mxu0 0
  %1109 = vmatpush1.bf16.xpose.msra.mxu0 0
  %1110 = vmatprep.subr.bf16.mxu0 0
  %1111 = vmatpush1.bf16.xpose.msra.mxu0 0
  %1112 = vmatprep.subr.bf16.mxu0 0
  %1113 = vmatpush1.bf16.xpose.msra.mxu0 0
  %1114 = vmatprep.subr.bf16.mxu0 0
  %1115 = vmatpush1.bf16.xpose.msra.mxu0 0
  %1116 = vmatprep.subr.bf16.mxu0 0
  %1117 = vmatpush1.bf16.xpose.msra.mxu0 0
  %1118 = vmatprep.subr.bf16.mxu0 0
  %1119 = vmatpush1.bf16.xpose.msra.mxu0 0
  %1120 = vmatprep.subr.bf16.mxu0 0
  %1121 = vmatpush1.bf16.xpose.msra.mxu0 0
  %1122 = vmatprep.subr.bf16.mxu0 0
  %1123 = vmatpush1.bf16.xpose.msra.mxu0 0
  %1124 = vmatprep.subr.bf16.mxu0 0
  %1125 = vmatpush1.bf16.xpose.msra.mxu0 0
  %1126 = vmatprep.subr.bf16.mxu0 0
  %1127 = vmatpush1.bf16.xpose.msra.mxu0 0
  %1128 = vmatprep.subr.bf16.mxu0 0
  %1129 = vmatpush1.bf16.xpose.msra.mxu0 0
  %1130 = vmatprep.mubr.bf16.mxu0 0
  %1131 = vmatmul.mubr.bf16.gmra.mrb[0].mxu0 %v1093
  %v1132 = vpop.f32.mrb[0].mxu0
  %v1133 = vadd.f32 0.0, %v1132
  %v1134 = vpop.f32.mrb[0].mxu0
  %v1135 = vpop.f32.mrb[0].mxu0
  %v1136 = vadd.f32 0.0, %v1135
  %v1137 = vpop.f32.mrb[0].mxu0
  %1138 = vdwg.mxu0
  %1140 = vrot.lane.b32.xlu0 %v540, 112
  %v1141 = vpop.permute.xlu0 %1140
  %1142 = vrot.lane.b32.xlu0 %v544, 80
  %v1143 = vpop.permute.xlu0 %1142
  %v1145 = vsel %vm553, %v1141, 0
  %v1148 = vsel %vm553, %v1143, 0
  %1150 = vmatprep.subr.bf16.mxu0 0
  %1151 = vmatpush1.bf16.xpose.msra.mxu0 %v1148
  %1152 = vmatprep.subr.bf16.mxu0 0
  %1153 = vmatpush1.bf16.xpose.msra.mxu0 0
  %1154 = vmatprep.subr.bf16.mxu0 0
  %1155 = vmatpush1.bf16.xpose.msra.mxu0 0
  %1156 = vmatprep.subr.bf16.mxu0 0
  %1157 = vmatpush1.bf16.xpose.msra.mxu0 0
  %1158 = vmatprep.subr.bf16.mxu0 0
  %1159 = vmatpush1.bf16.xpose.msra.mxu0 0
  %1160 = vmatprep.subr.bf16.mxu0 0
  %1161 = vmatpush1.bf16.xpose.msra.mxu0 0
  %1162 = vmatprep.subr.bf16.mxu0 0
  %1163 = vmatpush1.bf16.xpose.msra.mxu0 0
  %1164 = vmatprep.subr.bf16.mxu0 0
  %1165 = vmatpush1.bf16.xpose.msra.mxu0 0
  %1166 = vmatprep.subr.bf16.mxu0 0
  %1167 = vmatpush1.bf16.xpose.msra.mxu0 0
  %1168 = vmatprep.subr.bf16.mxu0 0
  %1169 = vmatpush1.bf16.xpose.msra.mxu0 0
  %1170 = vmatprep.subr.bf16.mxu0 0
  %1171 = vmatpush1.bf16.xpose.msra.mxu0 0
  %1172 = vmatprep.subr.bf16.mxu0 0
  %1173 = vmatpush1.bf16.xpose.msra.mxu0 0
  %1174 = vmatprep.subr.bf16.mxu0 0
  %1175 = vmatpush1.bf16.xpose.msra.mxu0 0
  %1176 = vmatprep.subr.bf16.mxu0 0
  %1177 = vmatpush1.bf16.xpose.msra.mxu0 0
  %1178 = vmatprep.subr.bf16.mxu0 0
  %1179 = vmatpush1.bf16.xpose.msra.mxu0 0
  %1180 = vmatprep.subr.bf16.mxu0 0
  %1181 = vmatpush1.bf16.xpose.msra.mxu0 0
  %1182 = vmatprep.mubr.bf16.mxu0 0
  %1183 = vmatmul.mubr.bf16.gmra.mrb[0].mxu0 %v1145
  %v1184 = vpop.f32.mrb[0].mxu0
  %v1185 = vadd.f32 0.0, %v1184
  %v1186 = vpop.f32.mrb[0].mxu0
  %v1187 = vpop.f32.mrb[0].mxu0
  %v1188 = vadd.f32 0.0, %v1187
  %v1189 = vpop.f32.mrb[0].mxu0
  %1190 = vdwg.mxu0
  %1192 = vrot.lane.b32.xlu0 %v541, 112
  %v1193 = vpop.permute.xlu0 %1192
  %1194 = vrot.lane.b32.xlu0 %v545, 80
  %v1195 = vpop.permute.xlu0 %1194
  %v1197 = vsel %vm553, %v1193, 0
  %v1200 = vsel %vm553, %v1195, 0
  %1202 = vmatprep.subr.bf16.mxu0 0
  %1203 = vmatpush1.bf16.xpose.msra.mxu0 %v1200
  %1204 = vmatprep.subr.bf16.mxu0 0
  %1205 = vmatpush1.bf16.xpose.msra.mxu0 0
  %1206 = vmatprep.subr.bf16.mxu0 0
  %1207 = vmatpush1.bf16.xpose.msra.mxu0 0
  %1208 = vmatprep.subr.bf16.mxu0 0
  %1209 = vmatpush1.bf16.xpose.msra.mxu0 0
  %1210 = vmatprep.subr.bf16.mxu0 0
  %1211 = vmatpush1.bf16.xpose.msra.mxu0 0
  %1212 = vmatprep.subr.bf16.mxu0 0
  %1213 = vmatpush1.bf16.xpose.msra.mxu0 0
  %1214 = vmatprep.subr.bf16.mxu0 0
  %1215 = vmatpush1.bf16.xpose.msra.mxu0 0
  %1216 = vmatprep.subr.bf16.mxu0 0
  %1217 = vmatpush1.bf16.xpose.msra.mxu0 0
  %1218 = vmatprep.subr.bf16.mxu0 0
  %1219 = vmatpush1.bf16.xpose.msra.mxu0 0
  %1220 = vmatprep.subr.bf16.mxu0 0
  %1221 = vmatpush1.bf16.xpose.msra.mxu0 0
  %1222 = vmatprep.subr.bf16.mxu0 0
  %1223 = vmatpush1.bf16.xpose.msra.mxu0 0
  %1224 = vmatprep.subr.bf16.mxu0 0
  %1225 = vmatpush1.bf16.xpose.msra.mxu0 0
  %1226 = vmatprep.subr.bf16.mxu0 0
  %1227 = vmatpush1.bf16.xpose.msra.mxu0 0
  %1228 = vmatprep.subr.bf16.mxu0 0
  %1229 = vmatpush1.bf16.xpose.msra.mxu0 0
  %1230 = vmatprep.subr.bf16.mxu0 0
  %1231 = vmatpush1.bf16.xpose.msra.mxu0 0
  %1232 = vmatprep.subr.bf16.mxu0 0
  %1233 = vmatpush1.bf16.xpose.msra.mxu0 0
  %1234 = vmatprep.mubr.bf16.mxu0 0
  %1235 = vmatmul.mubr.bf16.gmra.mrb[0].mxu0 %v1197
  %v1236 = vpop.f32.mrb[0].mxu0
  %v1237 = vadd.f32 0.0, %v1236
  %v1238 = vpop.f32.mrb[0].mxu0
  %v1239 = vpop.f32.mrb[0].mxu0
  %v1240 = vadd.f32 0.0, %v1239
  %v1241 = vpop.f32.mrb[0].mxu0
  %1242 = vdwg.mxu0
  %v1243 = vsel %vm553, %v1081, -inf
  %1244 = vmax.xlane.f32.xlu0 %v1243
  %v1245 = vpop.xlane.xlu0 %1244
  %v1246 = vsel %vm553, %v1084, -inf
  %1247 = vmax.xlane.f32.xlu0 %v1246
  %v1248 = vpop.xlane.xlu0 %1247
  %v1249 = vsel %vm553, %v1133, -inf
  %1250 = vmax.xlane.f32.xlu0 %v1249
  %v1251 = vpop.xlane.xlu0 %1250
  %v1252 = vsel %vm553, %v1136, -inf
  %1253 = vmax.xlane.f32.xlu0 %v1252
  %v1254 = vpop.xlane.xlu0 %1253
  %v1255 = vsel %vm553, %v1185, -inf
  %1256 = vmax.xlane.f32.xlu0 %v1255
  %v1257 = vpop.xlane.xlu0 %1256
  %v1258 = vsel %vm553, %v1188, -inf
  %1259 = vmax.xlane.f32.xlu0 %v1258
  %v1260 = vpop.xlane.xlu0 %1259
  %v1261 = vsel %vm553, %v1237, -inf
  %1262 = vmax.xlane.f32.xlu0 %v1261
  %v1263 = vpop.xlane.xlu0 %1262
  %v1264 = vsel %vm553, %v1240, -inf
  %1265 = vmax.xlane.f32.xlu0 %v1264
  %v1266 = vpop.xlane.xlu0 %1265
  %v1267 = vsub.f32 %v1081, %v1245
  %v1268 = vsub.f32 %v1084, %v1248
  %v1269 = vsub.f32 %v1133, %v1251
  %v1270 = vsub.f32 %v1136, %v1254
  %v1271 = vsub.f32 %v1185, %v1257
  %v1272 = vsub.f32 %v1188, %v1260
  %v1273 = vsub.f32 %v1237, %v1263
  %v1274 = vsub.f32 %v1240, %v1266
  %v1275 = vmul.f32 %v1267, 1.442695
  %v1276 = vpow.pop %v1275
  %v1277 = vmul.f32 %v1268, 1.442695
  %v1278 = vpow.pop %v1277
  %v1279 = vmul.f32 %v1269, 1.442695
  %v1280 = vpow.pop %v1279
  %v1281 = vmul.f32 %v1270, 1.442695
  %v1282 = vpow.pop %v1281
  %v1283 = vmul.f32 %v1271, 1.442695
  %v1284 = vpow.pop %v1283
  %v1285 = vmul.f32 %v1272, 1.442695
  %v1286 = vpow.pop %v1285
  %v1287 = vmul.f32 %v1273, 1.442695
  %v1288 = vpow.pop %v1287
  %v1289 = vmul.f32 %v1274, 1.442695
  %v1290 = vpow.pop %v1289
  %v1291 = vsel %vm553, %v1276, 0.0
  %1292 = vadd.xlane.f32.xlu0 %v1291
  %v1293 = vpop.xlane.xlu0 %1292
  %v1294 = vsel %vm553, %v1278, 0.0
  %1295 = vadd.xlane.f32.xlu0 %v1294
  %v1296 = vpop.xlane.xlu0 %1295
  %v1297 = vsel %vm553, %v1280, 0.0
  %1298 = vadd.xlane.f32.xlu0 %v1297
  %v1299 = vpop.xlane.xlu0 %1298
  %v1300 = vsel %vm553, %v1282, 0.0
  %1301 = vadd.xlane.f32.xlu0 %v1300
  %v1302 = vpop.xlane.xlu0 %1301
  %v1303 = vsel %vm553, %v1284, 0.0
  %1304 = vadd.xlane.f32.xlu0 %v1303
  %v1305 = vpop.xlane.xlu0 %1304
  %v1306 = vsel %vm553, %v1286, 0.0
  %1307 = vadd.xlane.f32.xlu0 %v1306
  %v1308 = vpop.xlane.xlu0 %1307
  %v1309 = vsel %vm553, %v1288, 0.0
  %1310 = vadd.xlane.f32.xlu0 %v1309
  %v1311 = vpop.xlane.xlu0 %1310
  %v1312 = vsel %vm553, %v1290, 0.0
  %1313 = vadd.xlane.f32.xlu0 %v1312
  %v1314 = vpop.xlane.xlu0 %1313
  %v1315 = vrcp.pop %v1293
  %v1316 = vrcp.pop %v1296
  %v1317 = vrcp.pop %v1299
  %v1318 = vrcp.pop %v1302
  %v1319 = vrcp.pop %v1305
  %v1320 = vrcp.pop %v1308
  %v1321 = vrcp.pop %v1311
  %v1322 = vrcp.pop %v1314
  %v1323 = vmul.f32 %v1276, %v1315
  %v1324 = vmul.f32 %v1278, %v1316
  %v1325 = vmul.f32 %v1280, %v1317
  %v1326 = vmul.f32 %v1282, %v1318
  %v1327 = vmul.f32 %v1284, %v1319
  %v1328 = vmul.f32 %v1286, %v1320
  %v1329 = vmul.f32 %v1288, %v1321
  %v1330 = vmul.f32 %v1290, %v1322
  %v1331 = vpack.c.bf16 %v1324, %v1323
  %v1332 = vpack.c.bf16 %v1326, %v1325
  %v1333 = vpack.c.bf16 %v1328, %v1327
  %v1334 = vpack.c.bf16 %v1330, %v1329
  %1335 = vrot.lane.b32.xlu0 %v546, 48
  %v1336 = vpop.permute.xlu0 %1335
  %v1339 = vsel %vm553, %v1331, 0
  %1341 = vmatprep.subr.bf16.mxu0 0
  %1342 = vmatpush1.bf16.msra.mxu0 %v1336
  %1343 = vmatprep.subr.bf16.mxu0 0
  %1344 = vmatpush1.bf16.msra.mxu0 0
  %1345 = vmatprep.subr.bf16.mxu0 0
  %1346 = vmatpush1.bf16.msra.mxu0 0
  %1347 = vmatprep.subr.bf16.mxu0 0
  %1348 = vmatpush1.bf16.msra.mxu0 0
  %1349 = vmatprep.subr.bf16.mxu0 0
  %1350 = vmatpush1.bf16.msra.mxu0 0
  %1351 = vmatprep.subr.bf16.mxu0 0
  %1352 = vmatpush1.bf16.msra.mxu0 0
  %1353 = vmatprep.subr.bf16.mxu0 0
  %1354 = vmatpush1.bf16.msra.mxu0 0
  %1355 = vmatprep.subr.bf16.mxu0 0
  %1356 = vmatpush1.bf16.msra.mxu0 0
  %1357 = vmatprep.subr.bf16.mxu0 0
  %1358 = vmatpush1.bf16.msra.mxu0 0
  %1359 = vmatprep.subr.bf16.mxu0 0
  %1360 = vmatpush1.bf16.msra.mxu0 0
  %1361 = vmatprep.subr.bf16.mxu0 0
  %1362 = vmatpush1.bf16.msra.mxu0 0
  %1363 = vmatprep.subr.bf16.mxu0 0
  %1364 = vmatpush1.bf16.msra.mxu0 0
  %1365 = vmatprep.subr.bf16.mxu0 0
  %1366 = vmatpush1.bf16.msra.mxu0 0
  %1367 = vmatprep.subr.bf16.mxu0 0
  %1368 = vmatpush1.bf16.msra.mxu0 0
  %1369 = vmatprep.subr.bf16.mxu0 0
  %1370 = vmatpush1.bf16.msra.mxu0 0
  %1371 = vmatprep.subr.bf16.mxu0 0
  %1372 = vmatpush1.bf16.msra.mxu0 0
  %1373 = vmatprep.mubr.bf16.mxu0 0
  %1374 = vmatmul.mubr.bf16.gmra.mrb[0].mxu0 %v1339
  %v1375 = vpop.f32.mrb[0].mxu0
  %v1376 = vadd.f32 0.0, %v1375
  %v1377 = vpop.f32.mrb[0].mxu0
  %v1378 = vpop.f32.mrb[0].mxu0
  %v1379 = vadd.f32 0.0, %v1378
  %v1380 = vpop.f32.mrb[0].mxu0
  %1381 = vdwg.mxu0
  %1382 = vrot.lane.b32.xlu0 %v547, 48
  %v1383 = vpop.permute.xlu0 %1382
  %v1386 = vsel %vm553, %v1332, 0
  %1388 = vmatprep.subr.bf16.mxu0 0
  %1389 = vmatpush1.bf16.msra.mxu0 %v1383
  %1390 = vmatprep.subr.bf16.mxu0 0
  %1391 = vmatpush1.bf16.msra.mxu0 0
  %1392 = vmatprep.subr.bf16.mxu0 0
  %1393 = vmatpush1.bf16.msra.mxu0 0
  %1394 = vmatprep.subr.bf16.mxu0 0
  %1395 = vmatpush1.bf16.msra.mxu0 0
  %1396 = vmatprep.subr.bf16.mxu0 0
  %1397 = vmatpush1.bf16.msra.mxu0 0
  %1398 = vmatprep.subr.bf16.mxu0 0
  %1399 = vmatpush1.bf16.msra.mxu0 0
  %1400 = vmatprep.subr.bf16.mxu0 0
  %1401 = vmatpush1.bf16.msra.mxu0 0
  %1402 = vmatprep.subr.bf16.mxu0 0
  %1403 = vmatpush1.bf16.msra.mxu0 0
  %1404 = vmatprep.subr.bf16.mxu0 0
  %1405 = vmatpush1.bf16.msra.mxu0 0
  %1406 = vmatprep.subr.bf16.mxu0 0
  %1407 = vmatpush1.bf16.msra.mxu0 0
  %1408 = vmatprep.subr.bf16.mxu0 0
  %1409 = vmatpush1.bf16.msra.mxu0 0
  %1410 = vmatprep.subr.bf16.mxu0 0
  %1411 = vmatpush1.bf16.msra.mxu0 0
  %1412 = vmatprep.subr.bf16.mxu0 0
  %1413 = vmatpush1.bf16.msra.mxu0 0
  %1414 = vmatprep.subr.bf16.mxu0 0
  %1415 = vmatpush1.bf16.msra.mxu0 0
  %1416 = vmatprep.subr.bf16.mxu0 0
  %1417 = vmatpush1.bf16.msra.mxu0 0
  %1418 = vmatprep.subr.bf16.mxu0 0
  %1419 = vmatpush1.bf16.msra.mxu0 0
  %1420 = vmatprep.mubr.bf16.mxu0 0
  %1421 = vmatmul.mubr.bf16.gmra.mrb[0].mxu0 %v1386
  %v1422 = vpop.f32.mrb[0].mxu0
  %v1423 = vadd.f32 0.0, %v1422
  %v1424 = vpop.f32.mrb[0].mxu0
  %v1425 = vpop.f32.mrb[0].mxu0
  %v1426 = vadd.f32 0.0, %v1425
  %v1427 = vpop.f32.mrb[0].mxu0
  %1428 = vdwg.mxu0
  %1429 = vrot.lane.b32.xlu0 %v548, 48
  %v1430 = vpop.permute.xlu0 %1429
  %v1433 = vsel %vm553, %v1333, 0
  %1435 = vmatprep.subr.bf16.mxu0 0
  %1436 = vmatpush1.bf16.msra.mxu0 %v1430
  %1437 = vmatprep.subr.bf16.mxu0 0
  %1438 = vmatpush1.bf16.msra.mxu0 0
  %1439 = vmatprep.subr.bf16.mxu0 0
  %1440 = vmatpush1.bf16.msra.mxu0 0
  %1441 = vmatprep.subr.bf16.mxu0 0
  %1442 = vmatpush1.bf16.msra.mxu0 0
  %1443 = vmatprep.subr.bf16.mxu0 0
  %1444 = vmatpush1.bf16.msra.mxu0 0
  %1445 = vmatprep.subr.bf16.mxu0 0
  %1446 = vmatpush1.bf16.msra.mxu0 0
  %1447 = vmatprep.subr.bf16.mxu0 0
  %1448 = vmatpush1.bf16.msra.mxu0 0
  %1449 = vmatprep.subr.bf16.mxu0 0
  %1450 = vmatpush1.bf16.msra.mxu0 0
  %1451 = vmatprep.subr.bf16.mxu0 0
  %1452 = vmatpush1.bf16.msra.mxu0 0
  %1453 = vmatprep.subr.bf16.mxu0 0
  %1454 = vmatpush1.bf16.msra.mxu0 0
  %1455 = vmatprep.subr.bf16.mxu0 0
  %1456 = vmatpush1.bf16.msra.mxu0 0
  %1457 = vmatprep.subr.bf16.mxu0 0
  %1458 = vmatpush1.bf16.msra.mxu0 0
  %1459 = vmatprep.subr.bf16.mxu0 0
  %1460 = vmatpush1.bf16.msra.mxu0 0
  %1461 = vmatprep.subr.bf16.mxu0 0
  %1462 = vmatpush1.bf16.msra.mxu0 0
  %1463 = vmatprep.subr.bf16.mxu0 0
  %1464 = vmatpush1.bf16.msra.mxu0 0
  %1465 = vmatprep.subr.bf16.mxu0 0
  %1466 = vmatpush1.bf16.msra.mxu0 0
  %1467 = vmatprep.mubr.bf16.mxu0 0
  %1468 = vmatmul.mubr.bf16.gmra.mrb[0].mxu0 %v1433
  %v1469 = vpop.f32.mrb[0].mxu0
  %v1470 = vadd.f32 0.0, %v1469
  %v1471 = vpop.f32.mrb[0].mxu0
  %v1472 = vpop.f32.mrb[0].mxu0
  %v1473 = vadd.f32 0.0, %v1472
  %v1474 = vpop.f32.mrb[0].mxu0
  %1475 = vdwg.mxu0
  %1476 = vrot.lane.b32.xlu0 %v549, 48
  %v1477 = vpop.permute.xlu0 %1476
  %v1480 = vsel %vm553, %v1334, 0
  %1482 = vmatprep.subr.bf16.mxu0 0
  %1483 = vmatpush1.bf16.msra.mxu0 %v1477
  %1484 = vmatprep.subr.bf16.mxu0 0
  %1485 = vmatpush1.bf16.msra.mxu0 0
  %1486 = vmatprep.subr.bf16.mxu0 0
  %1487 = vmatpush1.bf16.msra.mxu0 0
  %1488 = vmatprep.subr.bf16.mxu0 0
  %1489 = vmatpush1.bf16.msra.mxu0 0
  %1490 = vmatprep.subr.bf16.mxu0 0
  %1491 = vmatpush1.bf16.msra.mxu0 0
  %1492 = vmatprep.subr.bf16.mxu0 0
  %1493 = vmatpush1.bf16.msra.mxu0 0
  %1494 = vmatprep.subr.bf16.mxu0 0
  %1495 = vmatpush1.bf16.msra.mxu0 0
  %1496 = vmatprep.subr.bf16.mxu0 0
  %1497 = vmatpush1.bf16.msra.mxu0 0
  %1498 = vmatprep.subr.bf16.mxu0 0
  %1499 = vmatpush1.bf16.msra.mxu0 0
  %1500 = vmatprep.subr.bf16.mxu0 0
  %1501 = vmatpush1.bf16.msra.mxu0 0
  %1502 = vmatprep.subr.bf16.mxu0 0
  %1503 = vmatpush1.bf16.msra.mxu0 0
  %1504 = vmatprep.subr.bf16.mxu0 0
  %1505 = vmatpush1.bf16.msra.mxu0 0
  %1506 = vmatprep.subr.bf16.mxu0 0
  %1507 = vmatpush1.bf16.msra.mxu0 0
  %1508 = vmatprep.subr.bf16.mxu0 0
  %1509 = vmatpush1.bf16.msra.mxu0 0
  %1510 = vmatprep.subr.bf16.mxu0 0
  %1511 = vmatpush1.bf16.msra.mxu0 0
  %1512 = vmatprep.subr.bf16.mxu0 0
  %1513 = vmatpush1.bf16.msra.mxu0 0
  %1514 = vmatprep.mubr.bf16.mxu0 0
  %1515 = vmatmul.mubr.bf16.gmra.mrb[0].mxu0 %v1480
  %v1516 = vpop.f32.mrb[0].mxu0
  %v1517 = vadd.f32 0.0, %v1516
  %v1518 = vpop.f32.mrb[0].mxu0
  %v1519 = vpop.f32.mrb[0].mxu0
  %v1520 = vadd.f32 0.0, %v1519
  %v1521 = vpop.f32.mrb[0].mxu0
  %1522 = vdwg.mxu0
  %1531 = vrot.lane.b32.xlu0 %v1376, 16
  %v1532 = vpop.permute.xlu0 %1531
  %1533 = vrot.lane.b32.xlu0 %v1379, 16
  %v1534 = vpop.permute.xlu0 %1533
  %1535 = vrot.lane.b32.xlu0 %v1423, 16
  %v1536 = vpop.permute.xlu0 %1535
  %1537 = vrot.lane.b32.xlu0 %v1426, 16
  %v1538 = vpop.permute.xlu0 %1537
  %1539 = vrot.lane.b32.xlu0 %v1470, 16
  %v1540 = vpop.permute.xlu0 %1539
  %1541 = vrot.lane.b32.xlu0 %v1473, 16
  %v1542 = vpop.permute.xlu0 %1541
  %1543 = vrot.lane.b32.xlu0 %v1517, 16
  %v1544 = vpop.permute.xlu0 %1543
  %1545 = vrot.lane.b32.xlu0 %v1520, 16
  %v1546 = vpop.permute.xlu0 %1545
  %v1555 = vsel %vm553, %v885, %v1532
  %v1556 = vsel %vm553, %v888, %v1534
  %v1557 = vsel %vm553, %v933, %v1536
  %v1558 = vsel %vm553, %v936, %v1538
  %v1559 = vsel %vm553, %v981, %v1540
  %v1560 = vsel %vm553, %v984, %v1542
  %v1561 = vsel %vm553, %v1029, %v1544
  %v1562 = vsel %vm553, %v1032, %v1546
  %v1563 = vpack.c.bf16 %v1556, %v1555
  %v1564 = vpack.c.bf16 %v1558, %v1557
  %v1565 = vpack.c.bf16 %v1560, %v1559
  %v1566 = vpack.c.bf16 %v1562, %v1561
  %v1567 = vld [vmem:[%s3] sm:$0xf]
  %v1568 = vld [vmem:[%s3 + $0x4] sm:$0xf]
  %v1569 = vld [vmem:[%s3 + $0x8] sm:$0xf]
  %v1570 = vld [vmem:[%s3 + $0xc] sm:$0xf]
  %v1575 = vunpack.c.l.b16 %v1567
  %v1576 = vunpack.c.l.b16 %v1568
  %v1577 = vunpack.c.l.b16 %v1569
  %v1578 = vunpack.c.l.b16 %v1570
  %v1579 = vpack.c.b16 %v1576, %v1575
  %v1580 = vpack.c.b16 %v1578, %v1577
  %v1584 = vsel %vm267, %v1563, 0
  %v1587 = vsel %vm267, %v1564, 0
  %v1590 = vsel %vm267, %v1565, 0
  %v1593 = vsel %vm267, %v1566, 0
  %1595 = vmatprep.subr.bf16.mxu0 0
  %1596 = vmatpush1.bf16.msra.mxu0 %v1579
  %1597 = vmatprep.subr.bf16.mxu0 0
  %1598 = vmatpush1.bf16.msra.mxu0 %v1580
  %1599 = vmatprep.subr.bf16.mxu0 0
  %1600 = vmatpush1.bf16.msra.mxu0 0
  %1601 = vmatprep.subr.bf16.mxu0 0
  %1602 = vmatpush1.bf16.msra.mxu0 0
  %1603 = vmatprep.subr.bf16.mxu0 0
  %1604 = vmatpush1.bf16.msra.mxu0 0
  %1605 = vmatprep.subr.bf16.mxu0 0
  %1606 = vmatpush1.bf16.msra.mxu0 0
  %1607 = vmatprep.subr.bf16.mxu0 0
  %1608 = vmatpush1.bf16.msra.mxu0 0
  %1609 = vmatprep.subr.bf16.mxu0 0
  %1610 = vmatpush1.bf16.msra.mxu0 0
  %1611 = vmatprep.subr.bf16.mxu0 0
  %1612 = vmatpush1.bf16.msra.mxu0 0
  %1613 = vmatprep.subr.bf16.mxu0 0
  %1614 = vmatpush1.bf16.msra.mxu0 0
  %1615 = vmatprep.subr.bf16.mxu0 0
  %1616 = vmatpush1.bf16.msra.mxu0 0
  %1617 = vmatprep.subr.bf16.mxu0 0
  %1618 = vmatpush1.bf16.msra.mxu0 0
  %1619 = vmatprep.subr.bf16.mxu0 0
  %1620 = vmatpush1.bf16.msra.mxu0 0
  %1621 = vmatprep.subr.bf16.mxu0 0
  %1622 = vmatpush1.bf16.msra.mxu0 0
  %1623 = vmatprep.subr.bf16.mxu0 0
  %1624 = vmatpush1.bf16.msra.mxu0 0
  %1625 = vmatprep.subr.bf16.mxu0 0
  %1626 = vmatpush1.bf16.msra.mxu0 0
  %1627 = vmatprep.mubr.bf16.mxu0 0
  %1628 = vmatmul.mubr.bf16.gmra.mrb[0].mxu0 %v1584
  %v1629 = vpop.f32.mrb[0].mxu0
  %v1630 = vadd.f32 0.0, %v1629
  %v1631 = vpop.f32.mrb[0].mxu0
  %v1632 = vpop.f32.mrb[0].mxu0
  %v1633 = vadd.f32 0.0, %v1632
  %v1634 = vpop.f32.mrb[0].mxu0
  %1635 = vmatprep.mubr.bf16.mxu0 0
  %1636 = vmatmul.mubr.bf16.gmra.mrb[0].mxu0 %v1587
  %v1637 = vpop.f32.mrb[0].mxu0
  %v1638 = vadd.f32 0.0, %v1637
  %v1639 = vpop.f32.mrb[0].mxu0
  %v1640 = vpop.f32.mrb[0].mxu0
  %v1641 = vadd.f32 0.0, %v1640
  %v1642 = vpop.f32.mrb[0].mxu0
  %1643 = vmatprep.mubr.bf16.mxu0 0
  %1644 = vmatmul.mubr.bf16.gmra.mrb[0].mxu0 %v1590
  %v1645 = vpop.f32.mrb[0].mxu0
  %v1646 = vadd.f32 0.0, %v1645
  %v1647 = vpop.f32.mrb[0].mxu0
  %v1648 = vpop.f32.mrb[0].mxu0
  %v1649 = vadd.f32 0.0, %v1648
  %v1650 = vpop.f32.mrb[0].mxu0
  %1651 = vmatprep.mubr.bf16.mxu0 0
  %1652 = vmatmul.mubr.bf16.gmra.mrb[0].mxu0 %v1593
  %v1653 = vpop.f32.mrb[0].mxu0
  %v1654 = vadd.f32 0.0, %v1653
  %v1655 = vpop.f32.mrb[0].mxu0
  %v1656 = vpop.f32.mrb[0].mxu0
  %v1657 = vadd.f32 0.0, %v1656
  %v1658 = vpop.f32.mrb[0].mxu0
  %1659 = vdwg.mxu0
  %v1660 = vadd.f32 %v235, %v1630
  %v1661 = vadd.f32 %v238, %v1633
  %v1662 = vadd.f32 %v243, %v1638
  %v1663 = vadd.f32 %v246, %v1641
  %v1664 = vadd.f32 %v251, %v1646
  %v1665 = vadd.f32 %v254, %v1649
  %v1666 = vadd.f32 %v259, %v1654
  %v1667 = vadd.f32 %v262, %v1657
  %v1668 = vlaneseq
  %v1669 = vshrl.u32 %v1668, 7
  %v1670 = vsub.s32 5, %v1669
  %v1671 = vrot.slane %v265, %v1670
  %v1672 = vadd.f32 %v1660, %v1671
  %v1673 = vadd.f32 %v1661, %v1671
  %v1674 = vadd.f32 %v1662, %v1671
  %v1675 = vadd.f32 %v1663, %v1671
  %v1676 = vadd.f32 %v1664, %v1671
  %v1677 = vadd.f32 %v1665, %v1671
  %v1678 = vadd.f32 %v1666, %v1671
  %v1679 = vadd.f32 %v1667, %v1671
  %v1680 = vsel %vm267, %v1672, 0.0
  %1681 = vadd.xlane.f32.xlu0 %v1680
  %v1682 = vpop.xlane.xlu0 %1681
  %v1683 = vsel %vm267, %v1673, 0.0
  %1684 = vadd.xlane.f32.xlu0 %v1683
  %v1685 = vpop.xlane.xlu0 %1684
  %v1686 = vsel %vm267, %v1674, 0.0
  %1687 = vadd.xlane.f32.xlu0 %v1686
  %v1688 = vpop.xlane.xlu0 %1687
  %v1689 = vsel %vm267, %v1675, 0.0
  %1690 = vadd.xlane.f32.xlu0 %v1689
  %v1691 = vpop.xlane.xlu0 %1690
  %v1692 = vsel %vm267, %v1676, 0.0
  %1693 = vadd.xlane.f32.xlu0 %v1692
  %v1694 = vpop.xlane.xlu0 %1693
  %v1695 = vsel %vm267, %v1677, 0.0
  %1696 = vadd.xlane.f32.xlu0 %v1695
  %v1697 = vpop.xlane.xlu0 %1696
  %v1698 = vsel %vm267, %v1678, 0.0
  %1699 = vadd.xlane.f32.xlu0 %v1698
  %v1700 = vpop.xlane.xlu0 %1699
  %v1701 = vsel %vm267, %v1679, 0.0
  %1702 = vadd.xlane.f32.xlu0 %v1701
  %v1703 = vpop.xlane.xlu0 %1702
  %v1704 = vmul.f32 %v1682, %v292
  %v1705 = vmul.f32 %v1685, %v292
  %v1706 = vmul.f32 %v1688, %v292
  %v1707 = vmul.f32 %v1691, %v292
  %v1708 = vmul.f32 %v1694, %v292
  %v1709 = vmul.f32 %v1697, %v292
  %v1710 = vmul.f32 %v1700, %v292
  %v1711 = vmul.f32 %v1703, %v292
  %v1712 = vsub.f32 %v1672, %v1704
  %v1713 = vsub.f32 %v1673, %v1705
  %v1714 = vsub.f32 %v1674, %v1706
  %v1715 = vsub.f32 %v1675, %v1707
  %v1716 = vsub.f32 %v1676, %v1708
  %v1717 = vsub.f32 %v1677, %v1709
  %v1718 = vsub.f32 %v1678, %v1710
  %v1719 = vsub.f32 %v1679, %v1711
  %v1720 = vmul.f32 %v1712, %v1712
  %v1721 = vmul.f32 %v1713, %v1713
  %v1722 = vmul.f32 %v1714, %v1714
  %v1723 = vmul.f32 %v1715, %v1715
  %v1724 = vmul.f32 %v1716, %v1716
  %v1725 = vmul.f32 %v1717, %v1717
  %v1726 = vmul.f32 %v1718, %v1718
  %v1727 = vmul.f32 %v1719, %v1719
  %v1728 = vsel %vm267, %v1720, 0.0
  %1729 = vadd.xlane.f32.xlu0 %v1728
  %v1730 = vpop.xlane.xlu0 %1729
  %v1731 = vsel %vm267, %v1721, 0.0
  %1732 = vadd.xlane.f32.xlu0 %v1731
  %v1733 = vpop.xlane.xlu0 %1732
  %v1734 = vsel %vm267, %v1722, 0.0
  %1735 = vadd.xlane.f32.xlu0 %v1734
  %v1736 = vpop.xlane.xlu0 %1735
  %v1737 = vsel %vm267, %v1723, 0.0
  %1738 = vadd.xlane.f32.xlu0 %v1737
  %v1739 = vpop.xlane.xlu0 %1738
  %v1740 = vsel %vm267, %v1724, 0.0
  %1741 = vadd.xlane.f32.xlu0 %v1740
  %v1742 = vpop.xlane.xlu0 %1741
  %v1743 = vsel %vm267, %v1725, 0.0
  %1744 = vadd.xlane.f32.xlu0 %v1743
  %v1745 = vpop.xlane.xlu0 %1744
  %v1746 = vsel %vm267, %v1726, 0.0
  %1747 = vadd.xlane.f32.xlu0 %v1746
  %v1748 = vpop.xlane.xlu0 %1747
  %v1749 = vsel %vm267, %v1727, 0.0
  %1750 = vadd.xlane.f32.xlu0 %v1749
  %v1751 = vpop.xlane.xlu0 %1750
  %v1752 = vmul.f32 %v1730, %v292
  %v1753 = vmul.f32 %v1733, %v292
  %v1754 = vmul.f32 %v1736, %v292
  %v1755 = vmul.f32 %v1739, %v292
  %v1756 = vmul.f32 %v1742, %v292
  %v1757 = vmul.f32 %v1745, %v292
  %v1758 = vmul.f32 %v1748, %v292
  %v1759 = vmul.f32 %v1751, %v292
  %v1760 = vadd.f32 %v1752, 1e-06
  %v1761 = vadd.f32 %v1753, 1e-06
  %v1762 = vadd.f32 %v1754, 1e-06
  %v1763 = vadd.f32 %v1755, 1e-06
  %v1764 = vadd.f32 %v1756, 1e-06
  %v1765 = vadd.f32 %v1757, 1e-06
  %v1766 = vadd.f32 %v1758, 1e-06
  %v1767 = vadd.f32 %v1759, 1e-06
  %v1768 = vrsqrt.pop %v1760
  %v1769 = vrsqrt.pop %v1761
  %v1770 = vrsqrt.pop %v1762
  %v1771 = vrsqrt.pop %v1763
  %v1772 = vrsqrt.pop %v1764
  %v1773 = vrsqrt.pop %v1765
  %v1774 = vrsqrt.pop %v1766
  %v1775 = vrsqrt.pop %v1767
  %v1776 = vmul.f32 %v1712, %v1768
  %v1777 = vmul.f32 %v1713, %v1769
  %v1778 = vmul.f32 %v1714, %v1770
  %v1779 = vmul.f32 %v1715, %v1771
  %v1780 = vmul.f32 %v1716, %v1772
  %v1781 = vmul.f32 %v1717, %v1773
  %v1782 = vmul.f32 %v1718, %v1774
  %v1783 = vmul.f32 %v1719, %v1775
  %v1784 = vlaneseq
  %v1785 = vshrl.u32 %v1784, 7
  %v1786 = vsub.s32 6, %v1785
  %v1787 = vrot.slane %v265, %v1786
  %v1788 = vmul.f32 %v1776, %v1787
  %v1789 = vmul.f32 %v1777, %v1787
  %v1790 = vmul.f32 %v1778, %v1787
  %v1791 = vmul.f32 %v1779, %v1787
  %v1792 = vmul.f32 %v1780, %v1787
  %v1793 = vmul.f32 %v1781, %v1787
  %v1794 = vmul.f32 %v1782, %v1787
  %v1795 = vmul.f32 %v1783, %v1787
  %v1796 = vlaneseq
  %v1797 = vshrl.u32 %v1796, 7
  %v1798 = vsub.s32 7, %v1797
  %v1799 = vrot.slane %v265, %v1798
  %v1800 = vadd.f32 %v1788, %v1799
  %v1801 = vadd.f32 %v1789, %v1799
  %v1802 = vadd.f32 %v1790, %v1799
  %v1803 = vadd.f32 %v1791, %v1799
  %v1804 = vadd.f32 %v1792, %v1799
  %v1805 = vadd.f32 %v1793, %v1799
  %v1806 = vadd.f32 %v1794, %v1799
  %v1807 = vadd.f32 %v1795, %v1799
  %v1808 = vpack.c.bf16 %v1801, %v1800
  %v1809 = vpack.c.bf16 %v1803, %v1802
  %v1810 = vpack.c.bf16 %v1805, %v1804
  %v1811 = vpack.c.bf16 %v1807, %v1806
  %v1812 = vld [vmem:[%s4] sm:$0xf]
  %v1813 = vld [vmem:[%s4 + $0x4] sm:$0xf]
  %v1814 = vld [vmem:[%s4 + $0x8] sm:$0xf]
  %v1815 = vld [vmem:[%s4 + $0xc] sm:$0xf]
  %v1816 = vlaneseq
  %v1817 = vshrl.u32 %v1816, 7
  %v1818 = vsub.s32 0, %v1817
  %v1819 = vrot.slane %v266, %v1818
  %v1824 = vunpack.c.l.b16 %v1812
  %v1825 = vunpack.c.l.b16 %v1813
  %v1826 = vunpack.c.l.b16 %v1814
  %v1827 = vunpack.c.l.b16 %v1815
  %v1828 = vpack.c.b16 %v1825, %v1824
  %v1829 = vpack.c.b16 %v1827, %v1826
  %v1833 = vsel %vm267, %v1808, 0
  %v1836 = vsel %vm267, %v1809, 0
  %v1839 = vsel %vm267, %v1810, 0
  %v1842 = vsel %vm267, %v1811, 0
  %1844 = vmatprep.subr.bf16.mxu0 0
  %1845 = vmatpush1.bf16.msra.mxu0 %v1828
  %1846 = vmatprep.subr.bf16.mxu0 0
  %1847 = vmatpush1.bf16.msra.mxu0 %v1829
  %1848 = vmatprep.subr.bf16.mxu0 0
  %1849 = vmatpush1.bf16.msra.mxu0 0
  %1850 = vmatprep.subr.bf16.mxu0 0
  %1851 = vmatpush1.bf16.msra.mxu0 0
  %1852 = vmatprep.subr.bf16.mxu0 0
  %1853 = vmatpush1.bf16.msra.mxu0 0
  %1854 = vmatprep.subr.bf16.mxu0 0
  %1855 = vmatpush1.bf16.msra.mxu0 0
  %1856 = vmatprep.subr.bf16.mxu0 0
  %1857 = vmatpush1.bf16.msra.mxu0 0
  %1858 = vmatprep.subr.bf16.mxu0 0
  %1859 = vmatpush1.bf16.msra.mxu0 0
  %1860 = vmatprep.subr.bf16.mxu0 0
  %1861 = vmatpush1.bf16.msra.mxu0 0
  %1862 = vmatprep.subr.bf16.mxu0 0
  %1863 = vmatpush1.bf16.msra.mxu0 0
  %1864 = vmatprep.subr.bf16.mxu0 0
  %1865 = vmatpush1.bf16.msra.mxu0 0
  %1866 = vmatprep.subr.bf16.mxu0 0
  %1867 = vmatpush1.bf16.msra.mxu0 0
  %1868 = vmatprep.subr.bf16.mxu0 0
  %1869 = vmatpush1.bf16.msra.mxu0 0
  %1870 = vmatprep.subr.bf16.mxu0 0
  %1871 = vmatpush1.bf16.msra.mxu0 0
  %1872 = vmatprep.subr.bf16.mxu0 0
  %1873 = vmatpush1.bf16.msra.mxu0 0
  %1874 = vmatprep.subr.bf16.mxu0 0
  %1875 = vmatpush1.bf16.msra.mxu0 0
  %1876 = vmatprep.mubr.bf16.mxu0 0
  %1877 = vmatmul.mubr.bf16.gmra.mrb[0].mxu0 %v1833
  %v1878 = vpop.f32.mrb[0].mxu0
  %v1879 = vadd.f32 %v1819, %v1878
  %v1880 = vpop.f32.mrb[0].mxu0
  %v1881 = vpop.f32.mrb[0].mxu0
  %v1882 = vadd.f32 %v1819, %v1881
  %v1883 = vpop.f32.mrb[0].mxu0
  %1884 = vmatprep.mubr.bf16.mxu0 0
  %1885 = vmatmul.mubr.bf16.gmra.mrb[0].mxu0 %v1836
  %v1886 = vpop.f32.mrb[0].mxu0
  %v1887 = vadd.f32 %v1819, %v1886
  %v1888 = vpop.f32.mrb[0].mxu0
  %v1889 = vpop.f32.mrb[0].mxu0
  %v1890 = vadd.f32 %v1819, %v1889
  %v1891 = vpop.f32.mrb[0].mxu0
  %1892 = vmatprep.mubr.bf16.mxu0 0
  %1893 = vmatmul.mubr.bf16.gmra.mrb[0].mxu0 %v1839
  %v1894 = vpop.f32.mrb[0].mxu0
  %v1895 = vadd.f32 %v1819, %v1894
  %v1896 = vpop.f32.mrb[0].mxu0
  %v1897 = vpop.f32.mrb[0].mxu0
  %v1898 = vadd.f32 %v1819, %v1897
  %v1899 = vpop.f32.mrb[0].mxu0
  %1900 = vmatprep.mubr.bf16.mxu0 0
  %1901 = vmatmul.mubr.bf16.gmra.mrb[0].mxu0 %v1842
  %v1902 = vpop.f32.mrb[0].mxu0
  %v1903 = vadd.f32 %v1819, %v1902
  %v1904 = vpop.f32.mrb[0].mxu0
  %v1905 = vpop.f32.mrb[0].mxu0
  %v1906 = vadd.f32 %v1819, %v1905
  %v1907 = vpop.f32.mrb[0].mxu0
  %1908 = vdwg.mxu0
  %v1909 = vmul.f32 %v1879, %v1879
  %v1910 = vmul.f32 %v1882, %v1882
  %v1911 = vmul.f32 %v1887, %v1887
  %v1912 = vmul.f32 %v1890, %v1890
  %v1913 = vmul.f32 %v1895, %v1895
  %v1914 = vmul.f32 %v1898, %v1898
  %v1915 = vmul.f32 %v1903, %v1903
  %v1916 = vmul.f32 %v1906, %v1906
  %v1917 = vmul.f32 %v1879, %v1909
  %v1918 = vmul.f32 %v1882, %v1910
  %v1919 = vmul.f32 %v1887, %v1911
  %v1920 = vmul.f32 %v1890, %v1912
  %v1921 = vmul.f32 %v1895, %v1913
  %v1922 = vmul.f32 %v1898, %v1914
  %v1923 = vmul.f32 %v1903, %v1915
  %v1924 = vmul.f32 %v1906, %v1916
  %v1925 = vmul.f32 %v1917, 0.044715
  %v1926 = vmul.f32 %v1918, 0.044715
  %v1927 = vmul.f32 %v1919, 0.044715
  %v1928 = vmul.f32 %v1920, 0.044715
  %v1929 = vmul.f32 %v1921, 0.044715
  %v1930 = vmul.f32 %v1922, 0.044715
  %v1931 = vmul.f32 %v1923, 0.044715
  %v1932 = vmul.f32 %v1924, 0.044715
  %v1933 = vadd.f32 %v1879, %v1925
  %v1934 = vadd.f32 %v1882, %v1926
  %v1935 = vadd.f32 %v1887, %v1927
  %v1936 = vadd.f32 %v1890, %v1928
  %v1937 = vadd.f32 %v1895, %v1929
  %v1938 = vadd.f32 %v1898, %v1930
  %v1939 = vadd.f32 %v1903, %v1931
  %v1940 = vadd.f32 %v1906, %v1932
  %v1941 = vmul.f32 %v1933, 0.7978846
  %v1942 = vmul.f32 %v1934, 0.7978846
  %v1943 = vmul.f32 %v1935, 0.7978846
  %v1944 = vmul.f32 %v1936, 0.7978846
  %v1945 = vmul.f32 %v1937, 0.7978846
  %v1946 = vmul.f32 %v1938, 0.7978846
  %v1947 = vmul.f32 %v1939, 0.7978846
  %v1948 = vmul.f32 %v1940, 0.7978846
  %v1949 = vtanh.pop %v1941
  %v1950 = vtanh.pop %v1942
  %v1951 = vtanh.pop %v1943
  %v1952 = vtanh.pop %v1944
  %v1953 = vtanh.pop %v1945
  %v1954 = vtanh.pop %v1946
  %v1955 = vtanh.pop %v1947
  %v1956 = vtanh.pop %v1948
  %v1957 = vadd.f32 %v1949, 1.0
  %v1958 = vadd.f32 %v1950, 1.0
  %v1959 = vadd.f32 %v1951, 1.0
  %v1960 = vadd.f32 %v1952, 1.0
  %v1961 = vadd.f32 %v1953, 1.0
  %v1962 = vadd.f32 %v1954, 1.0
  %v1963 = vadd.f32 %v1955, 1.0
  %v1964 = vadd.f32 %v1956, 1.0
  %v1965 = vmul.f32 %v1957, 0.5
  %v1966 = vmul.f32 %v1958, 0.5
  %v1967 = vmul.f32 %v1959, 0.5
  %v1968 = vmul.f32 %v1960, 0.5
  %v1969 = vmul.f32 %v1961, 0.5
  %v1970 = vmul.f32 %v1962, 0.5
  %v1971 = vmul.f32 %v1963, 0.5
  %v1972 = vmul.f32 %v1964, 0.5
  %v1973 = vmul.f32 %v1879, %v1965
  %v1974 = vmul.f32 %v1882, %v1966
  %v1975 = vmul.f32 %v1887, %v1967
  %v1976 = vmul.f32 %v1890, %v1968
  %v1977 = vmul.f32 %v1895, %v1969
  %v1978 = vmul.f32 %v1898, %v1970
  %v1979 = vmul.f32 %v1903, %v1971
  %v1980 = vmul.f32 %v1906, %v1972
  %v1981 = vpack.c.bf16 %v1974, %v1973
  %v1982 = vpack.c.bf16 %v1976, %v1975
  %v1983 = vpack.c.bf16 %v1978, %v1977
  %v1984 = vpack.c.bf16 %v1980, %v1979
  %v1985 = vld [vmem:[%s5] sm:$0xf]
  %v1986 = vld [vmem:[%s5 + $0x4] sm:$0xf]
  %v1987 = vld [vmem:[%s5 + $0x8] sm:$0xf]
  %v1988 = vld [vmem:[%s5 + $0xc] sm:$0xf]
  %v1989 = vld [vmem:[%s5 + $0x10] sm:$0xf]
  %v1990 = vld [vmem:[%s5 + $0x14] sm:$0xf]
  %v1991 = vld [vmem:[%s5 + $0x18] sm:$0xf]
  %v1992 = vld [vmem:[%s5 + $0x1c] sm:$0xf]
  %v2001 = vunpack.c.l.b16 %v1985
  %v2002 = vunpack.c.l.b16 %v1986
  %v2003 = vunpack.c.l.b16 %v1987
  %v2004 = vunpack.c.l.b16 %v1988
  %v2005 = vunpack.c.l.b16 %v1989
  %v2006 = vunpack.c.l.b16 %v1990
  %v2007 = vunpack.c.l.b16 %v1991
  %v2008 = vunpack.c.l.b16 %v1992
  %v2009 = vpack.c.b16 %v2002, %v2001
  %v2010 = vpack.c.b16 %v2004, %v2003
  %v2011 = vpack.c.b16 %v2006, %v2005
  %v2012 = vpack.c.b16 %v2008, %v2007
  %vm2017 = vcmask 523264
  %v2019 = vsel %vm2017, %v1981, 0
  %v2022 = vsel %vm2017, %v1982, 0
  %v2025 = vsel %vm2017, %v1983, 0
  %v2028 = vsel %vm2017, %v1984, 0
  %2030 = vmatprep.subr.bf16.mxu0 0
  %2031 = vmatpush1.bf16.msra.mxu0 %v2009
  %2032 = vmatprep.subr.bf16.mxu0 0
  %2033 = vmatpush1.bf16.msra.mxu0 %v2010
  %2034 = vmatprep.subr.bf16.mxu0 0
  %2035 = vmatpush1.bf16.msra.mxu0 %v2011
  %2036 = vmatprep.subr.bf16.mxu0 0
  %2037 = vmatpush1.bf16.msra.mxu0 %v2012
  %2038 = vmatprep.subr.bf16.mxu0 0
  %2039 = vmatpush1.bf16.msra.mxu0 0
  %2040 = vmatprep.subr.bf16.mxu0 0
  %2041 = vmatpush1.bf16.msra.mxu0 0
  %2042 = vmatprep.subr.bf16.mxu0 0
  %2043 = vmatpush1.bf16.msra.mxu0 0
  %2044 = vmatprep.subr.bf16.mxu0 0
  %2045 = vmatpush1.bf16.msra.mxu0 0
  %2046 = vmatprep.subr.bf16.mxu0 0
  %2047 = vmatpush1.bf16.msra.mxu0 0
  %2048 = vmatprep.subr.bf16.mxu0 0
  %2049 = vmatpush1.bf16.msra.mxu0 0
  %2050 = vmatprep.subr.bf16.mxu0 0
  %2051 = vmatpush1.bf16.msra.mxu0 0
  %2052 = vmatprep.subr.bf16.mxu0 0
  %2053 = vmatpush1.bf16.msra.mxu0 0
  %2054 = vmatprep.subr.bf16.mxu0 0
  %2055 = vmatpush1.bf16.msra.mxu0 0
  %2056 = vmatprep.subr.bf16.mxu0 0
  %2057 = vmatpush1.bf16.msra.mxu0 0
  %2058 = vmatprep.subr.bf16.mxu0 0
  %2059 = vmatpush1.bf16.msra.mxu0 0
  %2060 = vmatprep.subr.bf16.mxu0 0
  %2061 = vmatpush1.bf16.msra.mxu0 0
  %2062 = vmatprep.mubr.bf16.mxu0 0
  %2063 = vmatmul.mubr.bf16.gmra.mrb[0].mxu0 %v2019
  %v2064 = vpop.f32.mrb[0].mxu0
  %v2065 = vadd.f32 0.0, %v2064
  %v2066 = vpop.f32.mrb[0].mxu0
  %v2067 = vpop.f32.mrb[0].mxu0
  %v2068 = vadd.f32 0.0, %v2067
  %v2069 = vpop.f32.mrb[0].mxu0
  %2070 = vmatprep.mubr.bf16.mxu0 0
  %2071 = vmatmul.mubr.bf16.gmra.mrb[0].mxu0 %v2022
  %v2072 = vpop.f32.mrb[0].mxu0
  %v2073 = vadd.f32 0.0, %v2072
  %v2074 = vpop.f32.mrb[0].mxu0
  %v2075 = vpop.f32.mrb[0].mxu0
  %v2076 = vadd.f32 0.0, %v2075
  %v2077 = vpop.f32.mrb[0].mxu0
  %2078 = vmatprep.mubr.bf16.mxu0 0
  %2079 = vmatmul.mubr.bf16.gmra.mrb[0].mxu0 %v2025
  %v2080 = vpop.f32.mrb[0].mxu0
  %v2081 = vadd.f32 0.0, %v2080
  %v2082 = vpop.f32.mrb[0].mxu0
  %v2083 = vpop.f32.mrb[0].mxu0
  %v2084 = vadd.f32 0.0, %v2083
  %v2085 = vpop.f32.mrb[0].mxu0
  %2086 = vmatprep.mubr.bf16.mxu0 0
  %2087 = vmatmul.mubr.bf16.gmra.mrb[0].mxu0 %v2028
  %v2088 = vpop.f32.mrb[0].mxu0
  %v2089 = vadd.f32 0.0, %v2088
  %v2090 = vpop.f32.mrb[0].mxu0
  %v2091 = vpop.f32.mrb[0].mxu0
  %v2092 = vadd.f32 0.0, %v2091
  %v2093 = vpop.f32.mrb[0].mxu0
  %2094 = vdwg.mxu0
  %v2095 = vadd.f32 %v1672, %v2065
  %v2096 = vadd.f32 %v1673, %v2068
  %v2097 = vadd.f32 %v1674, %v2073
  %v2098 = vadd.f32 %v1675, %v2076
  %v2099 = vadd.f32 %v1676, %v2081
  %v2100 = vadd.f32 %v1677, %v2084
  %v2101 = vadd.f32 %v1678, %v2089
  %v2102 = vadd.f32 %v1679, %v2092
  %v2103 = vlaneseq
  %v2104 = vshrl.u32 %v2103, 7
  %v2105 = vsub.s32 1, %v2104
  %v2106 = vrot.slane %v266, %v2105
  %v2107 = vadd.f32 %v2095, %v2106
  %v2108 = vadd.f32 %v2096, %v2106
  %v2109 = vadd.f32 %v2097, %v2106
  %v2110 = vadd.f32 %v2098, %v2106
  %v2111 = vadd.f32 %v2099, %v2106
  %v2112 = vadd.f32 %v2100, %v2106
  %v2113 = vadd.f32 %v2101, %v2106
  %v2114 = vadd.f32 %v2102, %v2106
  %s2115 = scalar_lea.vmem %s6, 16
  %v2116 = vld [vmem:[%s2115] sm:$0xff]
  %v2117 = vld [vmem:[%s2115 + $0x8] sm:$0x3]
  %v2118 = vsel %vm267, %v2107, 0.0
  %2119 = vadd.xlane.f32.xlu0 %v2118
  %v2120 = vpop.xlane.xlu0 %2119
  %v2121 = vsel %vm267, %v2108, 0.0
  %2122 = vadd.xlane.f32.xlu0 %v2121
  %v2123 = vpop.xlane.xlu0 %2122
  %v2124 = vsel %vm267, %v2109, 0.0
  %2125 = vadd.xlane.f32.xlu0 %v2124
  %v2126 = vpop.xlane.xlu0 %2125
  %v2127 = vsel %vm267, %v2110, 0.0
  %2128 = vadd.xlane.f32.xlu0 %v2127
  %v2129 = vpop.xlane.xlu0 %2128
  %v2130 = vsel %vm267, %v2111, 0.0
  %2131 = vadd.xlane.f32.xlu0 %v2130
  %v2132 = vpop.xlane.xlu0 %2131
  %v2133 = vsel %vm267, %v2112, 0.0
  %2134 = vadd.xlane.f32.xlu0 %v2133
  %v2135 = vpop.xlane.xlu0 %2134
  %v2136 = vsel %vm267, %v2113, 0.0
  %2137 = vadd.xlane.f32.xlu0 %v2136
  %v2138 = vpop.xlane.xlu0 %2137
  %v2139 = vsel %vm267, %v2114, 0.0
  %2140 = vadd.xlane.f32.xlu0 %v2139
  %v2141 = vpop.xlane.xlu0 %2140
  %v2142 = vmul.f32 %v2120, %v292
  %v2143 = vmul.f32 %v2123, %v292
  %v2144 = vmul.f32 %v2126, %v292
  %v2145 = vmul.f32 %v2129, %v292
  %v2146 = vmul.f32 %v2132, %v292
  %v2147 = vmul.f32 %v2135, %v292
  %v2148 = vmul.f32 %v2138, %v292
  %v2149 = vmul.f32 %v2141, %v292
  %v2150 = vsub.f32 %v2107, %v2142
  %v2151 = vsub.f32 %v2108, %v2143
  %v2152 = vsub.f32 %v2109, %v2144
  %v2153 = vsub.f32 %v2110, %v2145
  %v2154 = vsub.f32 %v2111, %v2146
  %v2155 = vsub.f32 %v2112, %v2147
  %v2156 = vsub.f32 %v2113, %v2148
  %v2157 = vsub.f32 %v2114, %v2149
  %v2158 = vmul.f32 %v2150, %v2150
  %v2159 = vmul.f32 %v2151, %v2151
  %v2160 = vmul.f32 %v2152, %v2152
  %v2161 = vmul.f32 %v2153, %v2153
  %v2162 = vmul.f32 %v2154, %v2154
  %v2163 = vmul.f32 %v2155, %v2155
  %v2164 = vmul.f32 %v2156, %v2156
  %v2165 = vmul.f32 %v2157, %v2157
  %v2166 = vsel %vm267, %v2158, 0.0
  %2167 = vadd.xlane.f32.xlu0 %v2166
  %v2168 = vpop.xlane.xlu0 %2167
  %v2169 = vsel %vm267, %v2159, 0.0
  %2170 = vadd.xlane.f32.xlu0 %v2169
  %v2171 = vpop.xlane.xlu0 %2170
  %v2172 = vsel %vm267, %v2160, 0.0
  %2173 = vadd.xlane.f32.xlu0 %v2172
  %v2174 = vpop.xlane.xlu0 %2173
  %v2175 = vsel %vm267, %v2161, 0.0
  %2176 = vadd.xlane.f32.xlu0 %v2175
  %v2177 = vpop.xlane.xlu0 %2176
  %v2178 = vsel %vm267, %v2162, 0.0
  %2179 = vadd.xlane.f32.xlu0 %v2178
  %v2180 = vpop.xlane.xlu0 %2179
  %v2181 = vsel %vm267, %v2163, 0.0
  %2182 = vadd.xlane.f32.xlu0 %v2181
  %v2183 = vpop.xlane.xlu0 %2182
  %v2184 = vsel %vm267, %v2164, 0.0
  %2185 = vadd.xlane.f32.xlu0 %v2184
  %v2186 = vpop.xlane.xlu0 %2185
  %v2187 = vsel %vm267, %v2165, 0.0
  %2188 = vadd.xlane.f32.xlu0 %v2187
  %v2189 = vpop.xlane.xlu0 %2188
  %v2190 = vmul.f32 %v2168, %v292
  %v2191 = vmul.f32 %v2171, %v292
  %v2192 = vmul.f32 %v2174, %v292
  %v2193 = vmul.f32 %v2177, %v292
  %v2194 = vmul.f32 %v2180, %v292
  %v2195 = vmul.f32 %v2183, %v292
  %v2196 = vmul.f32 %v2186, %v292
  %v2197 = vmul.f32 %v2189, %v292
  %v2198 = vadd.f32 %v2190, 1e-06
  %v2199 = vadd.f32 %v2191, 1e-06
  %v2200 = vadd.f32 %v2192, 1e-06
  %v2201 = vadd.f32 %v2193, 1e-06
  %v2202 = vadd.f32 %v2194, 1e-06
  %v2203 = vadd.f32 %v2195, 1e-06
  %v2204 = vadd.f32 %v2196, 1e-06
  %v2205 = vadd.f32 %v2197, 1e-06
  %v2206 = vrsqrt.pop %v2198
  %v2207 = vrsqrt.pop %v2199
  %v2208 = vrsqrt.pop %v2200
  %v2209 = vrsqrt.pop %v2201
  %v2210 = vrsqrt.pop %v2202
  %v2211 = vrsqrt.pop %v2203
  %v2212 = vrsqrt.pop %v2204
  %v2213 = vrsqrt.pop %v2205
  %v2214 = vmul.f32 %v2150, %v2206
  %v2215 = vmul.f32 %v2151, %v2207
  %v2216 = vmul.f32 %v2152, %v2208
  %v2217 = vmul.f32 %v2153, %v2209
  %v2218 = vmul.f32 %v2154, %v2210
  %v2219 = vmul.f32 %v2155, %v2211
  %v2220 = vmul.f32 %v2156, %v2212
  %v2221 = vmul.f32 %v2157, %v2213
  %v2222 = vlaneseq
  %v2223 = vshrl.u32 %v2222, 7
  %v2224 = vsub.s32 0, %v2223
  %v2225 = vrot.slane %v2116, %v2224
  %v2226 = vmul.f32 %v2214, %v2225
  %v2227 = vmul.f32 %v2215, %v2225
  %v2228 = vmul.f32 %v2216, %v2225
  %v2229 = vmul.f32 %v2217, %v2225
  %v2230 = vmul.f32 %v2218, %v2225
  %v2231 = vmul.f32 %v2219, %v2225
  %v2232 = vmul.f32 %v2220, %v2225
  %v2233 = vmul.f32 %v2221, %v2225
  %v2234 = vlaneseq
  %v2235 = vshrl.u32 %v2234, 7
  %v2236 = vsub.s32 1, %v2235
  %v2237 = vrot.slane %v2116, %v2236
  %v2238 = vadd.f32 %v2226, %v2237
  %v2239 = vadd.f32 %v2227, %v2237
  %v2240 = vadd.f32 %v2228, %v2237
  %v2241 = vadd.f32 %v2229, %v2237
  %v2242 = vadd.f32 %v2230, %v2237
  %v2243 = vadd.f32 %v2231, %v2237
  %v2244 = vadd.f32 %v2232, %v2237
  %v2245 = vadd.f32 %v2233, %v2237
  %v2246 = vpack.c.bf16 %v2239, %v2238
  %v2247 = vpack.c.bf16 %v2241, %v2240
  %v2248 = vpack.c.bf16 %v2243, %v2242
  %v2249 = vpack.c.bf16 %v2245, %v2244
  %s2250 = scalar_lea.vmem %s2, 16
  %v2251 = vld [vmem:[%s2250] sm:$0xf]
  %v2252 = vld [vmem:[%s2250 + $0x4] sm:$0xf]
  %v2253 = vld [vmem:[%s2250 + $0x8] sm:$0xf]
  %v2254 = vld [vmem:[%s2250 + $0xc] sm:$0xf]
  %v2259 = vunpack.c.l.b16 %v2251
  %v2260 = vunpack.c.l.b16 %v2252
  %v2261 = vunpack.c.l.b16 %v2253
  %v2262 = vunpack.c.l.b16 %v2254
  %v2263 = vpack.c.b16 %v2260, %v2259
  %v2264 = vpack.c.b16 %v2262, %v2261
  %v2268 = vsel %vm267, %v2246, 0
  %v2271 = vsel %vm267, %v2247, 0
  %v2274 = vsel %vm267, %v2248, 0
  %v2277 = vsel %vm267, %v2249, 0
  %2279 = vmatprep.subr.bf16.mxu0 0
  %2280 = vmatpush1.bf16.msra.mxu0 %v2263
  %2281 = vmatprep.subr.bf16.mxu0 0
  %2282 = vmatpush1.bf16.msra.mxu0 %v2264
  %2283 = vmatprep.subr.bf16.mxu0 0
  %2284 = vmatpush1.bf16.msra.mxu0 0
  %2285 = vmatprep.subr.bf16.mxu0 0
  %2286 = vmatpush1.bf16.msra.mxu0 0
  %2287 = vmatprep.subr.bf16.mxu0 0
  %2288 = vmatpush1.bf16.msra.mxu0 0
  %2289 = vmatprep.subr.bf16.mxu0 0
  %2290 = vmatpush1.bf16.msra.mxu0 0
  %2291 = vmatprep.subr.bf16.mxu0 0
  %2292 = vmatpush1.bf16.msra.mxu0 0
  %2293 = vmatprep.subr.bf16.mxu0 0
  %2294 = vmatpush1.bf16.msra.mxu0 0
  %2295 = vmatprep.subr.bf16.mxu0 0
  %2296 = vmatpush1.bf16.msra.mxu0 0
  %2297 = vmatprep.subr.bf16.mxu0 0
  %2298 = vmatpush1.bf16.msra.mxu0 0
  %2299 = vmatprep.subr.bf16.mxu0 0
  %2300 = vmatpush1.bf16.msra.mxu0 0
  %2301 = vmatprep.subr.bf16.mxu0 0
  %2302 = vmatpush1.bf16.msra.mxu0 0
  %2303 = vmatprep.subr.bf16.mxu0 0
  %2304 = vmatpush1.bf16.msra.mxu0 0
  %2305 = vmatprep.subr.bf16.mxu0 0
  %2306 = vmatpush1.bf16.msra.mxu0 0
  %2307 = vmatprep.subr.bf16.mxu0 0
  %2308 = vmatpush1.bf16.msra.mxu0 0
  %2309 = vmatprep.subr.bf16.mxu0 0
  %2310 = vmatpush1.bf16.msra.mxu0 0
  %2311 = vmatprep.mubr.bf16.mxu0 0
  %2312 = vmatmul.mubr.bf16.gmra.mrb[0].mxu0 %v2268
  %v2313 = vpop.f32.mrb[0].mxu0
  %v2314 = vadd.f32 0.0, %v2313
  %v2315 = vpop.f32.mrb[0].mxu0
  %v2316 = vpop.f32.mrb[0].mxu0
  %v2317 = vadd.f32 0.0, %v2316
  %v2318 = vpop.f32.mrb[0].mxu0
  %2319 = vmatprep.mubr.bf16.mxu0 0
  %2320 = vmatmul.mubr.bf16.gmra.mrb[0].mxu0 %v2271
  %v2321 = vpop.f32.mrb[0].mxu0
  %v2322 = vadd.f32 0.0, %v2321
  %v2323 = vpop.f32.mrb[0].mxu0
  %v2324 = vpop.f32.mrb[0].mxu0
  %v2325 = vadd.f32 0.0, %v2324
  %v2326 = vpop.f32.mrb[0].mxu0
  %2327 = vmatprep.mubr.bf16.mxu0 0
  %2328 = vmatmul.mubr.bf16.gmra.mrb[0].mxu0 %v2274
  %v2329 = vpop.f32.mrb[0].mxu0
  %v2330 = vadd.f32 0.0, %v2329
  %v2331 = vpop.f32.mrb[0].mxu0
  %v2332 = vpop.f32.mrb[0].mxu0
  %v2333 = vadd.f32 0.0, %v2332
  %v2334 = vpop.f32.mrb[0].mxu0
  %2335 = vmatprep.mubr.bf16.mxu0 0
  %2336 = vmatmul.mubr.bf16.gmra.mrb[0].mxu0 %v2277
  %v2337 = vpop.f32.mrb[0].mxu0
  %v2338 = vadd.f32 0.0, %v2337
  %v2339 = vpop.f32.mrb[0].mxu0
  %v2340 = vpop.f32.mrb[0].mxu0
  %v2341 = vadd.f32 0.0, %v2340
  %v2342 = vpop.f32.mrb[0].mxu0
  %2343 = vdwg.mxu0
  %v2344 = vlaneseq
  %v2345 = vshrl.u32 %v2344, 7
  %v2346 = vsub.s32 2, %v2345
  %v2347 = vrot.slane %v2116, %v2346
  %v2348 = vadd.f32 %v2314, %v2347
  %v2349 = vadd.f32 %v2317, %v2347
  %v2350 = vadd.f32 %v2322, %v2347
  %v2351 = vadd.f32 %v2325, %v2347
  %v2352 = vadd.f32 %v2330, %v2347
  %v2353 = vadd.f32 %v2333, %v2347
  %v2354 = vadd.f32 %v2338, %v2347
  %v2355 = vadd.f32 %v2341, %v2347
  %v2356 = vlaneseq
  %v2357 = vshrl.u32 %v2356, 7
  %v2358 = vsub.s32 3, %v2357
  %v2359 = vrot.slane %v2116, %v2358
  %2361 = vrot.lane.b32.xlu0 %v2359, 32
  %v2362 = vpop.permute.xlu0 %2361
  %v2364 = vadd.f32 %v2314, %v2362
  %v2365 = vadd.f32 %v2317, %v2362
  %v2366 = vadd.f32 %v2322, %v2362
  %v2367 = vadd.f32 %v2325, %v2362
  %v2368 = vadd.f32 %v2330, %v2362
  %v2369 = vadd.f32 %v2333, %v2362
  %v2370 = vadd.f32 %v2338, %v2362
  %v2371 = vadd.f32 %v2341, %v2362
  %v2372 = vlaneseq
  %v2373 = vshrl.u32 %v2372, 7
  %v2374 = vsub.s32 4, %v2373
  %v2375 = vrot.slane %v2116, %v2374
  %2377 = vrot.lane.b32.xlu0 %v2375, 64
  %v2378 = vpop.permute.xlu0 %2377
  %v2380 = vadd.f32 %v2314, %v2378
  %v2381 = vadd.f32 %v2317, %v2378
  %v2382 = vadd.f32 %v2322, %v2378
  %v2383 = vadd.f32 %v2325, %v2378
  %v2384 = vadd.f32 %v2330, %v2378
  %v2385 = vadd.f32 %v2333, %v2378
  %v2386 = vadd.f32 %v2338, %v2378
  %v2387 = vadd.f32 %v2341, %v2378
  %v2388 = vpack.c.bf16 %v2349, %v2348
  %v2389 = vpack.c.bf16 %v2351, %v2350
  %v2390 = vpack.c.bf16 %v2353, %v2352
  %v2391 = vpack.c.bf16 %v2355, %v2354
  %v2392 = vpack.c.bf16 %v2365, %v2364
  %v2393 = vpack.c.bf16 %v2367, %v2366
  %v2394 = vpack.c.bf16 %v2369, %v2368
  %v2395 = vpack.c.bf16 %v2371, %v2370
  %v2396 = vpack.c.bf16 %v2381, %v2380
  %v2397 = vpack.c.bf16 %v2383, %v2382
  %v2398 = vpack.c.bf16 %v2385, %v2384
  %v2399 = vpack.c.bf16 %v2387, %v2386
  %2401 = vrot.lane.b32.xlu0 %v2392, 96
  %v2402 = vpop.permute.xlu0 %2401
  %v2404 = vsel %vm553, %v2388, 0
  %v2407 = vsel %vm553, %v2402, 0
  %2409 = vmatprep.subr.bf16.mxu0 0
  %2410 = vmatpush1.bf16.xpose.msra.mxu0 %v2407
  %2411 = vmatprep.subr.bf16.mxu0 0
  %2412 = vmatpush1.bf16.xpose.msra.mxu0 0
  %2413 = vmatprep.subr.bf16.mxu0 0
  %2414 = vmatpush1.bf16.xpose.msra.mxu0 0
  %2415 = vmatprep.subr.bf16.mxu0 0
  %2416 = vmatpush1.bf16.xpose.msra.mxu0 0
  %2417 = vmatprep.subr.bf16.mxu0 0
  %2418 = vmatpush1.bf16.xpose.msra.mxu0 0
  %2419 = vmatprep.subr.bf16.mxu0 0
  %2420 = vmatpush1.bf16.xpose.msra.mxu0 0
  %2421 = vmatprep.subr.bf16.mxu0 0
  %2422 = vmatpush1.bf16.xpose.msra.mxu0 0
  %2423 = vmatprep.subr.bf16.mxu0 0
  %2424 = vmatpush1.bf16.xpose.msra.mxu0 0
  %2425 = vmatprep.subr.bf16.mxu0 0
  %2426 = vmatpush1.bf16.xpose.msra.mxu0 0
  %2427 = vmatprep.subr.bf16.mxu0 0
  %2428 = vmatpush1.bf16.xpose.msra.mxu0 0
  %2429 = vmatprep.subr.bf16.mxu0 0
  %2430 = vmatpush1.bf16.xpose.msra.mxu0 0
  %2431 = vmatprep.subr.bf16.mxu0 0
  %2432 = vmatpush1.bf16.xpose.msra.mxu0 0
  %2433 = vmatprep.subr.bf16.mxu0 0
  %2434 = vmatpush1.bf16.xpose.msra.mxu0 0
  %2435 = vmatprep.subr.bf16.mxu0 0
  %2436 = vmatpush1.bf16.xpose.msra.mxu0 0
  %2437 = vmatprep.subr.bf16.mxu0 0
  %2438 = vmatpush1.bf16.xpose.msra.mxu0 0
  %2439 = vmatprep.subr.bf16.mxu0 0
  %2440 = vmatpush1.bf16.xpose.msra.mxu0 0
  %2441 = vmatprep.mubr.bf16.mxu0 0
  %2442 = vmatmul.mubr.bf16.gmra.mrb[0].mxu0 %v2404
  %v2443 = vpop.f32.mrb[0].mxu0
  %v2444 = vadd.f32 0.0, %v2443
  %v2445 = vpop.f32.mrb[0].mxu0
  %v2446 = vpop.f32.mrb[0].mxu0
  %v2447 = vadd.f32 0.0, %v2446
  %v2448 = vpop.f32.mrb[0].mxu0
  %2449 = vdwg.mxu0
  %2451 = vrot.lane.b32.xlu0 %v2393, 96
  %v2452 = vpop.permute.xlu0 %2451
  %v2454 = vsel %vm553, %v2389, 0
  %v2457 = vsel %vm553, %v2452, 0
  %2459 = vmatprep.subr.bf16.mxu0 0
  %2460 = vmatpush1.bf16.xpose.msra.mxu0 %v2457
  %2461 = vmatprep.subr.bf16.mxu0 0
  %2462 = vmatpush1.bf16.xpose.msra.mxu0 0
  %2463 = vmatprep.subr.bf16.mxu0 0
  %2464 = vmatpush1.bf16.xpose.msra.mxu0 0
  %2465 = vmatprep.subr.bf16.mxu0 0
  %2466 = vmatpush1.bf16.xpose.msra.mxu0 0
  %2467 = vmatprep.subr.bf16.mxu0 0
  %2468 = vmatpush1.bf16.xpose.msra.mxu0 0
  %2469 = vmatprep.subr.bf16.mxu0 0
  %2470 = vmatpush1.bf16.xpose.msra.mxu0 0
  %2471 = vmatprep.subr.bf16.mxu0 0
  %2472 = vmatpush1.bf16.xpose.msra.mxu0 0
  %2473 = vmatprep.subr.bf16.mxu0 0
  %2474 = vmatpush1.bf16.xpose.msra.mxu0 0
  %2475 = vmatprep.subr.bf16.mxu0 0
  %2476 = vmatpush1.bf16.xpose.msra.mxu0 0
  %2477 = vmatprep.subr.bf16.mxu0 0
  %2478 = vmatpush1.bf16.xpose.msra.mxu0 0
  %2479 = vmatprep.subr.bf16.mxu0 0
  %2480 = vmatpush1.bf16.xpose.msra.mxu0 0
  %2481 = vmatprep.subr.bf16.mxu0 0
  %2482 = vmatpush1.bf16.xpose.msra.mxu0 0
  %2483 = vmatprep.subr.bf16.mxu0 0
  %2484 = vmatpush1.bf16.xpose.msra.mxu0 0
  %2485 = vmatprep.subr.bf16.mxu0 0
  %2486 = vmatpush1.bf16.xpose.msra.mxu0 0
  %2487 = vmatprep.subr.bf16.mxu0 0
  %2488 = vmatpush1.bf16.xpose.msra.mxu0 0
  %2489 = vmatprep.subr.bf16.mxu0 0
  %2490 = vmatpush1.bf16.xpose.msra.mxu0 0
  %2491 = vmatprep.mubr.bf16.mxu0 0
  %2492 = vmatmul.mubr.bf16.gmra.mrb[0].mxu0 %v2454
  %v2493 = vpop.f32.mrb[0].mxu0
  %v2494 = vadd.f32 0.0, %v2493
  %v2495 = vpop.f32.mrb[0].mxu0
  %v2496 = vpop.f32.mrb[0].mxu0
  %v2497 = vadd.f32 0.0, %v2496
  %v2498 = vpop.f32.mrb[0].mxu0
  %2499 = vdwg.mxu0
  %2501 = vrot.lane.b32.xlu0 %v2394, 96
  %v2502 = vpop.permute.xlu0 %2501
  %v2504 = vsel %vm553, %v2390, 0
  %v2507 = vsel %vm553, %v2502, 0
  %2509 = vmatprep.subr.bf16.mxu0 0
  %2510 = vmatpush1.bf16.xpose.msra.mxu0 %v2507
  %2511 = vmatprep.subr.bf16.mxu0 0
  %2512 = vmatpush1.bf16.xpose.msra.mxu0 0
  %2513 = vmatprep.subr.bf16.mxu0 0
  %2514 = vmatpush1.bf16.xpose.msra.mxu0 0
  %2515 = vmatprep.subr.bf16.mxu0 0
  %2516 = vmatpush1.bf16.xpose.msra.mxu0 0
  %2517 = vmatprep.subr.bf16.mxu0 0
  %2518 = vmatpush1.bf16.xpose.msra.mxu0 0
  %2519 = vmatprep.subr.bf16.mxu0 0
  %2520 = vmatpush1.bf16.xpose.msra.mxu0 0
  %2521 = vmatprep.subr.bf16.mxu0 0
  %2522 = vmatpush1.bf16.xpose.msra.mxu0 0
  %2523 = vmatprep.subr.bf16.mxu0 0
  %2524 = vmatpush1.bf16.xpose.msra.mxu0 0
  %2525 = vmatprep.subr.bf16.mxu0 0
  %2526 = vmatpush1.bf16.xpose.msra.mxu0 0
  %2527 = vmatprep.subr.bf16.mxu0 0
  %2528 = vmatpush1.bf16.xpose.msra.mxu0 0
  %2529 = vmatprep.subr.bf16.mxu0 0
  %2530 = vmatpush1.bf16.xpose.msra.mxu0 0
  %2531 = vmatprep.subr.bf16.mxu0 0
  %2532 = vmatpush1.bf16.xpose.msra.mxu0 0
  %2533 = vmatprep.subr.bf16.mxu0 0
  %2534 = vmatpush1.bf16.xpose.msra.mxu0 0
  %2535 = vmatprep.subr.bf16.mxu0 0
  %2536 = vmatpush1.bf16.xpose.msra.mxu0 0
  %2537 = vmatprep.subr.bf16.mxu0 0
  %2538 = vmatpush1.bf16.xpose.msra.mxu0 0
  %2539 = vmatprep.subr.bf16.mxu0 0
  %2540 = vmatpush1.bf16.xpose.msra.mxu0 0
  %2541 = vmatprep.mubr.bf16.mxu0 0
  %2542 = vmatmul.mubr.bf16.gmra.mrb[0].mxu0 %v2504
  %v2543 = vpop.f32.mrb[0].mxu0
  %v2544 = vadd.f32 0.0, %v2543
  %v2545 = vpop.f32.mrb[0].mxu0
  %v2546 = vpop.f32.mrb[0].mxu0
  %v2547 = vadd.f32 0.0, %v2546
  %v2548 = vpop.f32.mrb[0].mxu0
  %2549 = vdwg.mxu0
  %2551 = vrot.lane.b32.xlu0 %v2395, 96
  %v2552 = vpop.permute.xlu0 %2551
  %v2554 = vsel %vm553, %v2391, 0
  %v2557 = vsel %vm553, %v2552, 0
  %2559 = vmatprep.subr.bf16.mxu0 0
  %2560 = vmatpush1.bf16.xpose.msra.mxu0 %v2557
  %2561 = vmatprep.subr.bf16.mxu0 0
  %2562 = vmatpush1.bf16.xpose.msra.mxu0 0
  %2563 = vmatprep.subr.bf16.mxu0 0
  %2564 = vmatpush1.bf16.xpose.msra.mxu0 0
  %2565 = vmatprep.subr.bf16.mxu0 0
  %2566 = vmatpush1.bf16.xpose.msra.mxu0 0
  %2567 = vmatprep.subr.bf16.mxu0 0
  %2568 = vmatpush1.bf16.xpose.msra.mxu0 0
  %2569 = vmatprep.subr.bf16.mxu0 0
  %2570 = vmatpush1.bf16.xpose.msra.mxu0 0
  %2571 = vmatprep.subr.bf16.mxu0 0
  %2572 = vmatpush1.bf16.xpose.msra.mxu0 0
  %2573 = vmatprep.subr.bf16.mxu0 0
  %2574 = vmatpush1.bf16.xpose.msra.mxu0 0
  %2575 = vmatprep.subr.bf16.mxu0 0
  %2576 = vmatpush1.bf16.xpose.msra.mxu0 0
  %2577 = vmatprep.subr.bf16.mxu0 0
  %2578 = vmatpush1.bf16.xpose.msra.mxu0 0
  %2579 = vmatprep.subr.bf16.mxu0 0
  %2580 = vmatpush1.bf16.xpose.msra.mxu0 0
  %2581 = vmatprep.subr.bf16.mxu0 0
  %2582 = vmatpush1.bf16.xpose.msra.mxu0 0
  %2583 = vmatprep.subr.bf16.mxu0 0
  %2584 = vmatpush1.bf16.xpose.msra.mxu0 0
  %2585 = vmatprep.subr.bf16.mxu0 0
  %2586 = vmatpush1.bf16.xpose.msra.mxu0 0
  %2587 = vmatprep.subr.bf16.mxu0 0
  %2588 = vmatpush1.bf16.xpose.msra.mxu0 0
  %2589 = vmatprep.subr.bf16.mxu0 0
  %2590 = vmatpush1.bf16.xpose.msra.mxu0 0
  %2591 = vmatprep.mubr.bf16.mxu0 0
  %2592 = vmatmul.mubr.bf16.gmra.mrb[0].mxu0 %v2554
  %v2593 = vpop.f32.mrb[0].mxu0
  %v2594 = vadd.f32 0.0, %v2593
  %v2595 = vpop.f32.mrb[0].mxu0
  %v2596 = vpop.f32.mrb[0].mxu0
  %v2597 = vadd.f32 0.0, %v2596
  %v2598 = vpop.f32.mrb[0].mxu0
  %2599 = vdwg.mxu0
  %v2600 = vsel %vm553, %v2444, -inf
  %2601 = vmax.xlane.f32.xlu0 %v2600
  %v2602 = vpop.xlane.xlu0 %2601
  %v2603 = vsel %vm553, %v2447, -inf
  %2604 = vmax.xlane.f32.xlu0 %v2603
  %v2605 = vpop.xlane.xlu0 %2604
  %v2606 = vsel %vm553, %v2494, -inf
  %2607 = vmax.xlane.f32.xlu0 %v2606
  %v2608 = vpop.xlane.xlu0 %2607
  %v2609 = vsel %vm553, %v2497, -inf
  %2610 = vmax.xlane.f32.xlu0 %v2609
  %v2611 = vpop.xlane.xlu0 %2610
  %v2612 = vsel %vm553, %v2544, -inf
  %2613 = vmax.xlane.f32.xlu0 %v2612
  %v2614 = vpop.xlane.xlu0 %2613
  %v2615 = vsel %vm553, %v2547, -inf
  %2616 = vmax.xlane.f32.xlu0 %v2615
  %v2617 = vpop.xlane.xlu0 %2616
  %v2618 = vsel %vm553, %v2594, -inf
  %2619 = vmax.xlane.f32.xlu0 %v2618
  %v2620 = vpop.xlane.xlu0 %2619
  %v2621 = vsel %vm553, %v2597, -inf
  %2622 = vmax.xlane.f32.xlu0 %v2621
  %v2623 = vpop.xlane.xlu0 %2622
  %v2624 = vsub.f32 %v2444, %v2602
  %v2625 = vsub.f32 %v2447, %v2605
  %v2626 = vsub.f32 %v2494, %v2608
  %v2627 = vsub.f32 %v2497, %v2611
  %v2628 = vsub.f32 %v2544, %v2614
  %v2629 = vsub.f32 %v2547, %v2617
  %v2630 = vsub.f32 %v2594, %v2620
  %v2631 = vsub.f32 %v2597, %v2623
  %v2632 = vmul.f32 %v2624, 1.442695
  %v2633 = vpow.pop %v2632
  %v2634 = vmul.f32 %v2625, 1.442695
  %v2635 = vpow.pop %v2634
  %v2636 = vmul.f32 %v2626, 1.442695
  %v2637 = vpow.pop %v2636
  %v2638 = vmul.f32 %v2627, 1.442695
  %v2639 = vpow.pop %v2638
  %v2640 = vmul.f32 %v2628, 1.442695
  %v2641 = vpow.pop %v2640
  %v2642 = vmul.f32 %v2629, 1.442695
  %v2643 = vpow.pop %v2642
  %v2644 = vmul.f32 %v2630, 1.442695
  %v2645 = vpow.pop %v2644
  %v2646 = vmul.f32 %v2631, 1.442695
  %v2647 = vpow.pop %v2646
  %v2648 = vsel %vm553, %v2633, 0.0
  %2649 = vadd.xlane.f32.xlu0 %v2648
  %v2650 = vpop.xlane.xlu0 %2649
  %v2651 = vsel %vm553, %v2635, 0.0
  %2652 = vadd.xlane.f32.xlu0 %v2651
  %v2653 = vpop.xlane.xlu0 %2652
  %v2654 = vsel %vm553, %v2637, 0.0
  %2655 = vadd.xlane.f32.xlu0 %v2654
  %v2656 = vpop.xlane.xlu0 %2655
  %v2657 = vsel %vm553, %v2639, 0.0
  %2658 = vadd.xlane.f32.xlu0 %v2657
  %v2659 = vpop.xlane.xlu0 %2658
  %v2660 = vsel %vm553, %v2641, 0.0
  %2661 = vadd.xlane.f32.xlu0 %v2660
  %v2662 = vpop.xlane.xlu0 %2661
  %v2663 = vsel %vm553, %v2643, 0.0
  %2664 = vadd.xlane.f32.xlu0 %v2663
  %v2665 = vpop.xlane.xlu0 %2664
  %v2666 = vsel %vm553, %v2645, 0.0
  %2667 = vadd.xlane.f32.xlu0 %v2666
  %v2668 = vpop.xlane.xlu0 %2667
  %v2669 = vsel %vm553, %v2647, 0.0
  %2670 = vadd.xlane.f32.xlu0 %v2669
  %v2671 = vpop.xlane.xlu0 %2670
  %v2672 = vrcp.pop %v2650
  %v2673 = vrcp.pop %v2653
  %v2674 = vrcp.pop %v2656
  %v2675 = vrcp.pop %v2659
  %v2676 = vrcp.pop %v2662
  %v2677 = vrcp.pop %v2665
  %v2678 = vrcp.pop %v2668
  %v2679 = vrcp.pop %v2671
  %v2680 = vmul.f32 %v2633, %v2672
  %v2681 = vmul.f32 %v2635, %v2673
  %v2682 = vmul.f32 %v2637, %v2674
  %v2683 = vmul.f32 %v2639, %v2675
  %v2684 = vmul.f32 %v2641, %v2676
  %v2685 = vmul.f32 %v2643, %v2677
  %v2686 = vmul.f32 %v2645, %v2678
  %v2687 = vmul.f32 %v2647, %v2679
  %v2688 = vpack.c.bf16 %v2681, %v2680
  %v2689 = vpack.c.bf16 %v2683, %v2682
  %v2690 = vpack.c.bf16 %v2685, %v2684
  %v2691 = vpack.c.bf16 %v2687, %v2686
  %2693 = vrot.lane.b32.xlu0 %v2396, 64
  %v2694 = vpop.permute.xlu0 %2693
  %v2697 = vsel %vm553, %v2688, 0
  %2699 = vmatprep.subr.bf16.mxu0 0
  %2700 = vmatpush1.bf16.msra.mxu0 %v2694
  %2701 = vmatprep.subr.bf16.mxu0 0
  %2702 = vmatpush1.bf16.msra.mxu0 0
  %2703 = vmatprep.subr.bf16.mxu0 0
  %2704 = vmatpush1.bf16.msra.mxu0 0
  %2705 = vmatprep.subr.bf16.mxu0 0
  %2706 = vmatpush1.bf16.msra.mxu0 0
  %2707 = vmatprep.subr.bf16.mxu0 0
  %2708 = vmatpush1.bf16.msra.mxu0 0
  %2709 = vmatprep.subr.bf16.mxu0 0
  %2710 = vmatpush1.bf16.msra.mxu0 0
  %2711 = vmatprep.subr.bf16.mxu0 0
  %2712 = vmatpush1.bf16.msra.mxu0 0
  %2713 = vmatprep.subr.bf16.mxu0 0
  %2714 = vmatpush1.bf16.msra.mxu0 0
  %2715 = vmatprep.subr.bf16.mxu0 0
  %2716 = vmatpush1.bf16.msra.mxu0 0
  %2717 = vmatprep.subr.bf16.mxu0 0
  %2718 = vmatpush1.bf16.msra.mxu0 0
  %2719 = vmatprep.subr.bf16.mxu0 0
  %2720 = vmatpush1.bf16.msra.mxu0 0
  %2721 = vmatprep.subr.bf16.mxu0 0
  %2722 = vmatpush1.bf16.msra.mxu0 0
  %2723 = vmatprep.subr.bf16.mxu0 0
  %2724 = vmatpush1.bf16.msra.mxu0 0
  %2725 = vmatprep.subr.bf16.mxu0 0
  %2726 = vmatpush1.bf16.msra.mxu0 0
  %2727 = vmatprep.subr.bf16.mxu0 0
  %2728 = vmatpush1.bf16.msra.mxu0 0
  %2729 = vmatprep.subr.bf16.mxu0 0
  %2730 = vmatpush1.bf16.msra.mxu0 0
  %2731 = vmatprep.mubr.bf16.mxu0 0
  %2732 = vmatmul.mubr.bf16.gmra.mrb[0].mxu0 %v2697
  %v2733 = vpop.f32.mrb[0].mxu0
  %v2734 = vadd.f32 0.0, %v2733
  %v2735 = vpop.f32.mrb[0].mxu0
  %v2736 = vpop.f32.mrb[0].mxu0
  %v2737 = vadd.f32 0.0, %v2736
  %v2738 = vpop.f32.mrb[0].mxu0
  %2739 = vdwg.mxu0
  %2741 = vrot.lane.b32.xlu0 %v2397, 64
  %v2742 = vpop.permute.xlu0 %2741
  %v2745 = vsel %vm553, %v2689, 0
  %2747 = vmatprep.subr.bf16.mxu0 0
  %2748 = vmatpush1.bf16.msra.mxu0 %v2742
  %2749 = vmatprep.subr.bf16.mxu0 0
  %2750 = vmatpush1.bf16.msra.mxu0 0
  %2751 = vmatprep.subr.bf16.mxu0 0
  %2752 = vmatpush1.bf16.msra.mxu0 0
  %2753 = vmatprep.subr.bf16.mxu0 0
  %2754 = vmatpush1.bf16.msra.mxu0 0
  %2755 = vmatprep.subr.bf16.mxu0 0
  %2756 = vmatpush1.bf16.msra.mxu0 0
  %2757 = vmatprep.subr.bf16.mxu0 0
  %2758 = vmatpush1.bf16.msra.mxu0 0
  %2759 = vmatprep.subr.bf16.mxu0 0
  %2760 = vmatpush1.bf16.msra.mxu0 0
  %2761 = vmatprep.subr.bf16.mxu0 0
  %2762 = vmatpush1.bf16.msra.mxu0 0
  %2763 = vmatprep.subr.bf16.mxu0 0
  %2764 = vmatpush1.bf16.msra.mxu0 0
  %2765 = vmatprep.subr.bf16.mxu0 0
  %2766 = vmatpush1.bf16.msra.mxu0 0
  %2767 = vmatprep.subr.bf16.mxu0 0
  %2768 = vmatpush1.bf16.msra.mxu0 0
  %2769 = vmatprep.subr.bf16.mxu0 0
  %2770 = vmatpush1.bf16.msra.mxu0 0
  %2771 = vmatprep.subr.bf16.mxu0 0
  %2772 = vmatpush1.bf16.msra.mxu0 0
  %2773 = vmatprep.subr.bf16.mxu0 0
  %2774 = vmatpush1.bf16.msra.mxu0 0
  %2775 = vmatprep.subr.bf16.mxu0 0
  %2776 = vmatpush1.bf16.msra.mxu0 0
  %2777 = vmatprep.subr.bf16.mxu0 0
  %2778 = vmatpush1.bf16.msra.mxu0 0
  %2779 = vmatprep.mubr.bf16.mxu0 0
  %2780 = vmatmul.mubr.bf16.gmra.mrb[0].mxu0 %v2745
  %v2781 = vpop.f32.mrb[0].mxu0
  %v2782 = vadd.f32 0.0, %v2781
  %v2783 = vpop.f32.mrb[0].mxu0
  %v2784 = vpop.f32.mrb[0].mxu0
  %v2785 = vadd.f32 0.0, %v2784
  %v2786 = vpop.f32.mrb[0].mxu0
  %2787 = vdwg.mxu0
  %2789 = vrot.lane.b32.xlu0 %v2398, 64
  %v2790 = vpop.permute.xlu0 %2789
  %v2793 = vsel %vm553, %v2690, 0
  %2795 = vmatprep.subr.bf16.mxu0 0
  %2796 = vmatpush1.bf16.msra.mxu0 %v2790
  %2797 = vmatprep.subr.bf16.mxu0 0
  %2798 = vmatpush1.bf16.msra.mxu0 0
  %2799 = vmatprep.subr.bf16.mxu0 0
  %2800 = vmatpush1.bf16.msra.mxu0 0
  %2801 = vmatprep.subr.bf16.mxu0 0
  %2802 = vmatpush1.bf16.msra.mxu0 0
  %2803 = vmatprep.subr.bf16.mxu0 0
  %2804 = vmatpush1.bf16.msra.mxu0 0
  %2805 = vmatprep.subr.bf16.mxu0 0
  %2806 = vmatpush1.bf16.msra.mxu0 0
  %2807 = vmatprep.subr.bf16.mxu0 0
  %2808 = vmatpush1.bf16.msra.mxu0 0
  %2809 = vmatprep.subr.bf16.mxu0 0
  %2810 = vmatpush1.bf16.msra.mxu0 0
  %2811 = vmatprep.subr.bf16.mxu0 0
  %2812 = vmatpush1.bf16.msra.mxu0 0
  %2813 = vmatprep.subr.bf16.mxu0 0
  %2814 = vmatpush1.bf16.msra.mxu0 0
  %2815 = vmatprep.subr.bf16.mxu0 0
  %2816 = vmatpush1.bf16.msra.mxu0 0
  %2817 = vmatprep.subr.bf16.mxu0 0
  %2818 = vmatpush1.bf16.msra.mxu0 0
  %2819 = vmatprep.subr.bf16.mxu0 0
  %2820 = vmatpush1.bf16.msra.mxu0 0
  %2821 = vmatprep.subr.bf16.mxu0 0
  %2822 = vmatpush1.bf16.msra.mxu0 0
  %2823 = vmatprep.subr.bf16.mxu0 0
  %2824 = vmatpush1.bf16.msra.mxu0 0
  %2825 = vmatprep.subr.bf16.mxu0 0
  %2826 = vmatpush1.bf16.msra.mxu0 0
  %2827 = vmatprep.mubr.bf16.mxu0 0
  %2828 = vmatmul.mubr.bf16.gmra.mrb[0].mxu0 %v2793
  %v2829 = vpop.f32.mrb[0].mxu0
  %v2830 = vadd.f32 0.0, %v2829
  %v2831 = vpop.f32.mrb[0].mxu0
  %v2832 = vpop.f32.mrb[0].mxu0
  %v2833 = vadd.f32 0.0, %v2832
  %v2834 = vpop.f32.mrb[0].mxu0
  %2835 = vdwg.mxu0
  %2837 = vrot.lane.b32.xlu0 %v2399, 64
  %v2838 = vpop.permute.xlu0 %2837
  %v2841 = vsel %vm553, %v2691, 0
  %2843 = vmatprep.subr.bf16.mxu0 0
  %2844 = vmatpush1.bf16.msra.mxu0 %v2838
  %2845 = vmatprep.subr.bf16.mxu0 0
  %2846 = vmatpush1.bf16.msra.mxu0 0
  %2847 = vmatprep.subr.bf16.mxu0 0
  %2848 = vmatpush1.bf16.msra.mxu0 0
  %2849 = vmatprep.subr.bf16.mxu0 0
  %2850 = vmatpush1.bf16.msra.mxu0 0
  %2851 = vmatprep.subr.bf16.mxu0 0
  %2852 = vmatpush1.bf16.msra.mxu0 0
  %2853 = vmatprep.subr.bf16.mxu0 0
  %2854 = vmatpush1.bf16.msra.mxu0 0
  %2855 = vmatprep.subr.bf16.mxu0 0
  %2856 = vmatpush1.bf16.msra.mxu0 0
  %2857 = vmatprep.subr.bf16.mxu0 0
  %2858 = vmatpush1.bf16.msra.mxu0 0
  %2859 = vmatprep.subr.bf16.mxu0 0
  %2860 = vmatpush1.bf16.msra.mxu0 0
  %2861 = vmatprep.subr.bf16.mxu0 0
  %2862 = vmatpush1.bf16.msra.mxu0 0
  %2863 = vmatprep.subr.bf16.mxu0 0
  %2864 = vmatpush1.bf16.msra.mxu0 0
  %2865 = vmatprep.subr.bf16.mxu0 0
  %2866 = vmatpush1.bf16.msra.mxu0 0
  %2867 = vmatprep.subr.bf16.mxu0 0
  %2868 = vmatpush1.bf16.msra.mxu0 0
  %2869 = vmatprep.subr.bf16.mxu0 0
  %2870 = vmatpush1.bf16.msra.mxu0 0
  %2871 = vmatprep.subr.bf16.mxu0 0
  %2872 = vmatpush1.bf16.msra.mxu0 0
  %2873 = vmatprep.subr.bf16.mxu0 0
  %2874 = vmatpush1.bf16.msra.mxu0 0
  %2875 = vmatprep.mubr.bf16.mxu0 0
  %2876 = vmatmul.mubr.bf16.gmra.mrb[0].mxu0 %v2841
  %v2877 = vpop.f32.mrb[0].mxu0
  %v2878 = vadd.f32 0.0, %v2877
  %v2879 = vpop.f32.mrb[0].mxu0
  %v2880 = vpop.f32.mrb[0].mxu0
  %v2881 = vadd.f32 0.0, %v2880
  %v2882 = vpop.f32.mrb[0].mxu0
  %2883 = vdwg.mxu0
  %2885 = vrot.lane.b32.xlu0 %v2388, 112
  %v2886 = vpop.permute.xlu0 %2885
  %2887 = vrot.lane.b32.xlu0 %v2392, 80
  %v2888 = vpop.permute.xlu0 %2887
  %v2890 = vsel %vm553, %v2886, 0
  %v2893 = vsel %vm553, %v2888, 0
  %2895 = vmatprep.subr.bf16.mxu0 0
  %2896 = vmatpush1.bf16.xpose.msra.mxu0 %v2893
  %2897 = vmatprep.subr.bf16.mxu0 0
  %2898 = vmatpush1.bf16.xpose.msra.mxu0 0
  %2899 = vmatprep.subr.bf16.mxu0 0
  %2900 = vmatpush1.bf16.xpose.msra.mxu0 0
  %2901 = vmatprep.subr.bf16.mxu0 0
  %2902 = vmatpush1.bf16.xpose.msra.mxu0 0
  %2903 = vmatprep.subr.bf16.mxu0 0
  %2904 = vmatpush1.bf16.xpose.msra.mxu0 0
  %2905 = vmatprep.subr.bf16.mxu0 0
  %2906 = vmatpush1.bf16.xpose.msra.mxu0 0
  %2907 = vmatprep.subr.bf16.mxu0 0
  %2908 = vmatpush1.bf16.xpose.msra.mxu0 0
  %2909 = vmatprep.subr.bf16.mxu0 0
  %2910 = vmatpush1.bf16.xpose.msra.mxu0 0
  %2911 = vmatprep.subr.bf16.mxu0 0
  %2912 = vmatpush1.bf16.xpose.msra.mxu0 0
  %2913 = vmatprep.subr.bf16.mxu0 0
  %2914 = vmatpush1.bf16.xpose.msra.mxu0 0
  %2915 = vmatprep.subr.bf16.mxu0 0
  %2916 = vmatpush1.bf16.xpose.msra.mxu0 0
  %2917 = vmatprep.subr.bf16.mxu0 0
  %2918 = vmatpush1.bf16.xpose.msra.mxu0 0
  %2919 = vmatprep.subr.bf16.mxu0 0
  %2920 = vmatpush1.bf16.xpose.msra.mxu0 0
  %2921 = vmatprep.subr.bf16.mxu0 0
  %2922 = vmatpush1.bf16.xpose.msra.mxu0 0
  %2923 = vmatprep.subr.bf16.mxu0 0
  %2924 = vmatpush1.bf16.xpose.msra.mxu0 0
  %2925 = vmatprep.subr.bf16.mxu0 0
  %2926 = vmatpush1.bf16.xpose.msra.mxu0 0
  %2927 = vmatprep.mubr.bf16.mxu0 0
  %2928 = vmatmul.mubr.bf16.gmra.mrb[0].mxu0 %v2890
  %v2929 = vpop.f32.mrb[0].mxu0
  %v2930 = vadd.f32 0.0, %v2929
  %v2931 = vpop.f32.mrb[0].mxu0
  %v2932 = vpop.f32.mrb[0].mxu0
  %v2933 = vadd.f32 0.0, %v2932
  %v2934 = vpop.f32.mrb[0].mxu0
  %2935 = vdwg.mxu0
  %2937 = vrot.lane.b32.xlu0 %v2389, 112
  %v2938 = vpop.permute.xlu0 %2937
  %2939 = vrot.lane.b32.xlu0 %v2393, 80
  %v2940 = vpop.permute.xlu0 %2939
  %v2942 = vsel %vm553, %v2938, 0
  %v2945 = vsel %vm553, %v2940, 0
  %2947 = vmatprep.subr.bf16.mxu0 0
  %2948 = vmatpush1.bf16.xpose.msra.mxu0 %v2945
  %2949 = vmatprep.subr.bf16.mxu0 0
  %2950 = vmatpush1.bf16.xpose.msra.mxu0 0
  %2951 = vmatprep.subr.bf16.mxu0 0
  %2952 = vmatpush1.bf16.xpose.msra.mxu0 0
  %2953 = vmatprep.subr.bf16.mxu0 0
  %2954 = vmatpush1.bf16.xpose.msra.mxu0 0
  %2955 = vmatprep.subr.bf16.mxu0 0
  %2956 = vmatpush1.bf16.xpose.msra.mxu0 0
  %2957 = vmatprep.subr.bf16.mxu0 0
  %2958 = vmatpush1.bf16.xpose.msra.mxu0 0
  %2959 = vmatprep.subr.bf16.mxu0 0
  %2960 = vmatpush1.bf16.xpose.msra.mxu0 0
  %2961 = vmatprep.subr.bf16.mxu0 0
  %2962 = vmatpush1.bf16.xpose.msra.mxu0 0
  %2963 = vmatprep.subr.bf16.mxu0 0
  %2964 = vmatpush1.bf16.xpose.msra.mxu0 0
  %2965 = vmatprep.subr.bf16.mxu0 0
  %2966 = vmatpush1.bf16.xpose.msra.mxu0 0
  %2967 = vmatprep.subr.bf16.mxu0 0
  %2968 = vmatpush1.bf16.xpose.msra.mxu0 0
  %2969 = vmatprep.subr.bf16.mxu0 0
  %2970 = vmatpush1.bf16.xpose.msra.mxu0 0
  %2971 = vmatprep.subr.bf16.mxu0 0
  %2972 = vmatpush1.bf16.xpose.msra.mxu0 0
  %2973 = vmatprep.subr.bf16.mxu0 0
  %2974 = vmatpush1.bf16.xpose.msra.mxu0 0
  %2975 = vmatprep.subr.bf16.mxu0 0
  %2976 = vmatpush1.bf16.xpose.msra.mxu0 0
  %2977 = vmatprep.subr.bf16.mxu0 0
  %2978 = vmatpush1.bf16.xpose.msra.mxu0 0
  %2979 = vmatprep.mubr.bf16.mxu0 0
  %2980 = vmatmul.mubr.bf16.gmra.mrb[0].mxu0 %v2942
  %v2981 = vpop.f32.mrb[0].mxu0
  %v2982 = vadd.f32 0.0, %v2981
  %v2983 = vpop.f32.mrb[0].mxu0
  %v2984 = vpop.f32.mrb[0].mxu0
  %v2985 = vadd.f32 0.0, %v2984
  %v2986 = vpop.f32.mrb[0].mxu0
  %2987 = vdwg.mxu0
  %2989 = vrot.lane.b32.xlu0 %v2390, 112
  %v2990 = vpop.permute.xlu0 %2989
  %2991 = vrot.lane.b32.xlu0 %v2394, 80
  %v2992 = vpop.permute.xlu0 %2991
  %v2994 = vsel %vm553, %v2990, 0
  %v2997 = vsel %vm553, %v2992, 0
  %2999 = vmatprep.subr.bf16.mxu0 0
  %3000 = vmatpush1.bf16.xpose.msra.mxu0 %v2997
  %3001 = vmatprep.subr.bf16.mxu0 0
  %3002 = vmatpush1.bf16.xpose.msra.mxu0 0
  %3003 = vmatprep.subr.bf16.mxu0 0
  %3004 = vmatpush1.bf16.xpose.msra.mxu0 0
  %3005 = vmatprep.subr.bf16.mxu0 0
  %3006 = vmatpush1.bf16.xpose.msra.mxu0 0
  %3007 = vmatprep.subr.bf16.mxu0 0
  %3008 = vmatpush1.bf16.xpose.msra.mxu0 0
  %3009 = vmatprep.subr.bf16.mxu0 0
  %3010 = vmatpush1.bf16.xpose.msra.mxu0 0
  %3011 = vmatprep.subr.bf16.mxu0 0
  %3012 = vmatpush1.bf16.xpose.msra.mxu0 0
  %3013 = vmatprep.subr.bf16.mxu0 0
  %3014 = vmatpush1.bf16.xpose.msra.mxu0 0
  %3015 = vmatprep.subr.bf16.mxu0 0
  %3016 = vmatpush1.bf16.xpose.msra.mxu0 0
  %3017 = vmatprep.subr.bf16.mxu0 0
  %3018 = vmatpush1.bf16.xpose.msra.mxu0 0
  %3019 = vmatprep.subr.bf16.mxu0 0
  %3020 = vmatpush1.bf16.xpose.msra.mxu0 0
  %3021 = vmatprep.subr.bf16.mxu0 0
  %3022 = vmatpush1.bf16.xpose.msra.mxu0 0
  %3023 = vmatprep.subr.bf16.mxu0 0
  %3024 = vmatpush1.bf16.xpose.msra.mxu0 0
  %3025 = vmatprep.subr.bf16.mxu0 0
  %3026 = vmatpush1.bf16.xpose.msra.mxu0 0
  %3027 = vmatprep.subr.bf16.mxu0 0
  %3028 = vmatpush1.bf16.xpose.msra.mxu0 0
  %3029 = vmatprep.subr.bf16.mxu0 0
  %3030 = vmatpush1.bf16.xpose.msra.mxu0 0
  %3031 = vmatprep.mubr.bf16.mxu0 0
  %3032 = vmatmul.mubr.bf16.gmra.mrb[0].mxu0 %v2994
  %v3033 = vpop.f32.mrb[0].mxu0
  %v3034 = vadd.f32 0.0, %v3033
  %v3035 = vpop.f32.mrb[0].mxu0
  %v3036 = vpop.f32.mrb[0].mxu0
  %v3037 = vadd.f32 0.0, %v3036
  %v3038 = vpop.f32.mrb[0].mxu0
  %3039 = vdwg.mxu0
  %3041 = vrot.lane.b32.xlu0 %v2391, 112
  %v3042 = vpop.permute.xlu0 %3041
  %3043 = vrot.lane.b32.xlu0 %v2395, 80
  %v3044 = vpop.permute.xlu0 %3043
  %v3046 = vsel %vm553, %v3042, 0
  %v3049 = vsel %vm553, %v3044, 0
  %3051 = vmatprep.subr.bf16.mxu0 0
  %3052 = vmatpush1.bf16.xpose.msra.mxu0 %v3049
  %3053 = vmatprep.subr.bf16.mxu0 0
  %3054 = vmatpush1.bf16.xpose.msra.mxu0 0
  %3055 = vmatprep.subr.bf16.mxu0 0
  %3056 = vmatpush1.bf16.xpose.msra.mxu0 0
  %3057 = vmatprep.subr.bf16.mxu0 0
  %3058 = vmatpush1.bf16.xpose.msra.mxu0 0
  %3059 = vmatprep.subr.bf16.mxu0 0
  %3060 = vmatpush1.bf16.xpose.msra.mxu0 0
  %3061 = vmatprep.subr.bf16.mxu0 0
  %3062 = vmatpush1.bf16.xpose.msra.mxu0 0
  %3063 = vmatprep.subr.bf16.mxu0 0
  %3064 = vmatpush1.bf16.xpose.msra.mxu0 0
  %3065 = vmatprep.subr.bf16.mxu0 0
  %3066 = vmatpush1.bf16.xpose.msra.mxu0 0
  %3067 = vmatprep.subr.bf16.mxu0 0
  %3068 = vmatpush1.bf16.xpose.msra.mxu0 0
  %3069 = vmatprep.subr.bf16.mxu0 0
  %3070 = vmatpush1.bf16.xpose.msra.mxu0 0
  %3071 = vmatprep.subr.bf16.mxu0 0
  %3072 = vmatpush1.bf16.xpose.msra.mxu0 0
  %3073 = vmatprep.subr.bf16.mxu0 0
  %3074 = vmatpush1.bf16.xpose.msra.mxu0 0
  %3075 = vmatprep.subr.bf16.mxu0 0
  %3076 = vmatpush1.bf16.xpose.msra.mxu0 0
  %3077 = vmatprep.subr.bf16.mxu0 0
  %3078 = vmatpush1.bf16.xpose.msra.mxu0 0
  %3079 = vmatprep.subr.bf16.mxu0 0
  %3080 = vmatpush1.bf16.xpose.msra.mxu0 0
  %3081 = vmatprep.subr.bf16.mxu0 0
  %3082 = vmatpush1.bf16.xpose.msra.mxu0 0
  %3083 = vmatprep.mubr.bf16.mxu0 0
  %3084 = vmatmul.mubr.bf16.gmra.mrb[0].mxu0 %v3046
  %v3085 = vpop.f32.mrb[0].mxu0
  %v3086 = vadd.f32 0.0, %v3085
  %v3087 = vpop.f32.mrb[0].mxu0
  %v3088 = vpop.f32.mrb[0].mxu0
  %v3089 = vadd.f32 0.0, %v3088
  %v3090 = vpop.f32.mrb[0].mxu0
  %3091 = vdwg.mxu0
  %v3092 = vsel %vm553, %v2930, -inf
  %3093 = vmax.xlane.f32.xlu0 %v3092
  %v3094 = vpop.xlane.xlu0 %3093
  %v3095 = vsel %vm553, %v2933, -inf
  %3096 = vmax.xlane.f32.xlu0 %v3095
  %v3097 = vpop.xlane.xlu0 %3096
  %v3098 = vsel %vm553, %v2982, -inf
  %3099 = vmax.xlane.f32.xlu0 %v3098
  %v3100 = vpop.xlane.xlu0 %3099
  %v3101 = vsel %vm553, %v2985, -inf
  %3102 = vmax.xlane.f32.xlu0 %v3101
  %v3103 = vpop.xlane.xlu0 %3102
  %v3104 = vsel %vm553, %v3034, -inf
  %3105 = vmax.xlane.f32.xlu0 %v3104
  %v3106 = vpop.xlane.xlu0 %3105
  %v3107 = vsel %vm553, %v3037, -inf
  %3108 = vmax.xlane.f32.xlu0 %v3107
  %v3109 = vpop.xlane.xlu0 %3108
  %v3110 = vsel %vm553, %v3086, -inf
  %3111 = vmax.xlane.f32.xlu0 %v3110
  %v3112 = vpop.xlane.xlu0 %3111
  %v3113 = vsel %vm553, %v3089, -inf
  %3114 = vmax.xlane.f32.xlu0 %v3113
  %v3115 = vpop.xlane.xlu0 %3114
  %v3116 = vsub.f32 %v2930, %v3094
  %v3117 = vsub.f32 %v2933, %v3097
  %v3118 = vsub.f32 %v2982, %v3100
  %v3119 = vsub.f32 %v2985, %v3103
  %v3120 = vsub.f32 %v3034, %v3106
  %v3121 = vsub.f32 %v3037, %v3109
  %v3122 = vsub.f32 %v3086, %v3112
  %v3123 = vsub.f32 %v3089, %v3115
  %v3124 = vmul.f32 %v3116, 1.442695
  %v3125 = vpow.pop %v3124
  %v3126 = vmul.f32 %v3117, 1.442695
  %v3127 = vpow.pop %v3126
  %v3128 = vmul.f32 %v3118, 1.442695
  %v3129 = vpow.pop %v3128
  %v3130 = vmul.f32 %v3119, 1.442695
  %v3131 = vpow.pop %v3130
  %v3132 = vmul.f32 %v3120, 1.442695
  %v3133 = vpow.pop %v3132
  %v3134 = vmul.f32 %v3121, 1.442695
  %v3135 = vpow.pop %v3134
  %v3136 = vmul.f32 %v3122, 1.442695
  %v3137 = vpow.pop %v3136
  %v3138 = vmul.f32 %v3123, 1.442695
  %v3139 = vpow.pop %v3138
  %v3140 = vsel %vm553, %v3125, 0.0
  %3141 = vadd.xlane.f32.xlu0 %v3140
  %v3142 = vpop.xlane.xlu0 %3141
  %v3143 = vsel %vm553, %v3127, 0.0
  %3144 = vadd.xlane.f32.xlu0 %v3143
  %v3145 = vpop.xlane.xlu0 %3144
  %v3146 = vsel %vm553, %v3129, 0.0
  %3147 = vadd.xlane.f32.xlu0 %v3146
  %v3148 = vpop.xlane.xlu0 %3147
  %v3149 = vsel %vm553, %v3131, 0.0
  %3150 = vadd.xlane.f32.xlu0 %v3149
  %v3151 = vpop.xlane.xlu0 %3150
  %v3152 = vsel %vm553, %v3133, 0.0
  %3153 = vadd.xlane.f32.xlu0 %v3152
  %v3154 = vpop.xlane.xlu0 %3153
  %v3155 = vsel %vm553, %v3135, 0.0
  %3156 = vadd.xlane.f32.xlu0 %v3155
  %v3157 = vpop.xlane.xlu0 %3156
  %v3158 = vsel %vm553, %v3137, 0.0
  %3159 = vadd.xlane.f32.xlu0 %v3158
  %v3160 = vpop.xlane.xlu0 %3159
  %v3161 = vsel %vm553, %v3139, 0.0
  %3162 = vadd.xlane.f32.xlu0 %v3161
  %v3163 = vpop.xlane.xlu0 %3162
  %v3164 = vrcp.pop %v3142
  %v3165 = vrcp.pop %v3145
  %v3166 = vrcp.pop %v3148
  %v3167 = vrcp.pop %v3151
  %v3168 = vrcp.pop %v3154
  %v3169 = vrcp.pop %v3157
  %v3170 = vrcp.pop %v3160
  %v3171 = vrcp.pop %v3163
  %v3172 = vmul.f32 %v3125, %v3164
  %v3173 = vmul.f32 %v3127, %v3165
  %v3174 = vmul.f32 %v3129, %v3166
  %v3175 = vmul.f32 %v3131, %v3167
  %v3176 = vmul.f32 %v3133, %v3168
  %v3177 = vmul.f32 %v3135, %v3169
  %v3178 = vmul.f32 %v3137, %v3170
  %v3179 = vmul.f32 %v3139, %v3171
  %v3180 = vpack.c.bf16 %v3173, %v3172
  %v3181 = vpack.c.bf16 %v3175, %v3174
  %v3182 = vpack.c.bf16 %v3177, %v3176
  %v3183 = vpack.c.bf16 %v3179, %v3178
  %3184 = vrot.lane.b32.xlu0 %v2396, 48
  %v3185 = vpop.permute.xlu0 %3184
  %v3188 = vsel %vm553, %v3180, 0
  %3190 = vmatprep.subr.bf16.mxu0 0
  %3191 = vmatpush1.bf16.msra.mxu0 %v3185
  %3192 = vmatprep.subr.bf16.mxu0 0
  %3193 = vmatpush1.bf16.msra.mxu0 0
  %3194 = vmatprep.subr.bf16.mxu0 0
  %3195 = vmatpush1.bf16.msra.mxu0 0
  %3196 = vmatprep.subr.bf16.mxu0 0
  %3197 = vmatpush1.bf16.msra.mxu0 0
  %3198 = vmatprep.subr.bf16.mxu0 0
  %3199 = vmatpush1.bf16.msra.mxu0 0
  %3200 = vmatprep.subr.bf16.mxu0 0
  %3201 = vmatpush1.bf16.msra.mxu0 0
  %3202 = vmatprep.subr.bf16.mxu0 0
  %3203 = vmatpush1.bf16.msra.mxu0 0
  %3204 = vmatprep.subr.bf16.mxu0 0
  %3205 = vmatpush1.bf16.msra.mxu0 0
  %3206 = vmatprep.subr.bf16.mxu0 0
  %3207 = vmatpush1.bf16.msra.mxu0 0
  %3208 = vmatprep.subr.bf16.mxu0 0
  %3209 = vmatpush1.bf16.msra.mxu0 0
  %3210 = vmatprep.subr.bf16.mxu0 0
  %3211 = vmatpush1.bf16.msra.mxu0 0
  %3212 = vmatprep.subr.bf16.mxu0 0
  %3213 = vmatpush1.bf16.msra.mxu0 0
  %3214 = vmatprep.subr.bf16.mxu0 0
  %3215 = vmatpush1.bf16.msra.mxu0 0
  %3216 = vmatprep.subr.bf16.mxu0 0
  %3217 = vmatpush1.bf16.msra.mxu0 0
  %3218 = vmatprep.subr.bf16.mxu0 0
  %3219 = vmatpush1.bf16.msra.mxu0 0
  %3220 = vmatprep.subr.bf16.mxu0 0
  %3221 = vmatpush1.bf16.msra.mxu0 0
  %3222 = vmatprep.mubr.bf16.mxu0 0
  %3223 = vmatmul.mubr.bf16.gmra.mrb[0].mxu0 %v3188
  %v3224 = vpop.f32.mrb[0].mxu0
  %v3225 = vadd.f32 0.0, %v3224
  %v3226 = vpop.f32.mrb[0].mxu0
  %v3227 = vpop.f32.mrb[0].mxu0
  %v3228 = vadd.f32 0.0, %v3227
  %v3229 = vpop.f32.mrb[0].mxu0
  %3230 = vdwg.mxu0
  %3231 = vrot.lane.b32.xlu0 %v2397, 48
  %v3232 = vpop.permute.xlu0 %3231
  %v3235 = vsel %vm553, %v3181, 0
  %3237 = vmatprep.subr.bf16.mxu0 0
  %3238 = vmatpush1.bf16.msra.mxu0 %v3232
  %3239 = vmatprep.subr.bf16.mxu0 0
  %3240 = vmatpush1.bf16.msra.mxu0 0
  %3241 = vmatprep.subr.bf16.mxu0 0
  %3242 = vmatpush1.bf16.msra.mxu0 0
  %3243 = vmatprep.subr.bf16.mxu0 0
  %3244 = vmatpush1.bf16.msra.mxu0 0
  %3245 = vmatprep.subr.bf16.mxu0 0
  %3246 = vmatpush1.bf16.msra.mxu0 0
  %3247 = vmatprep.subr.bf16.mxu0 0
  %3248 = vmatpush1.bf16.msra.mxu0 0
  %3249 = vmatprep.subr.bf16.mxu0 0
  %3250 = vmatpush1.bf16.msra.mxu0 0
  %3251 = vmatprep.subr.bf16.mxu0 0
  %3252 = vmatpush1.bf16.msra.mxu0 0
  %3253 = vmatprep.subr.bf16.mxu0 0
  %3254 = vmatpush1.bf16.msra.mxu0 0
  %3255 = vmatprep.subr.bf16.mxu0 0
  %3256 = vmatpush1.bf16.msra.mxu0 0
  %3257 = vmatprep.subr.bf16.mxu0 0
  %3258 = vmatpush1.bf16.msra.mxu0 0
  %3259 = vmatprep.subr.bf16.mxu0 0
  %3260 = vmatpush1.bf16.msra.mxu0 0
  %3261 = vmatprep.subr.bf16.mxu0 0
  %3262 = vmatpush1.bf16.msra.mxu0 0
  %3263 = vmatprep.subr.bf16.mxu0 0
  %3264 = vmatpush1.bf16.msra.mxu0 0
  %3265 = vmatprep.subr.bf16.mxu0 0
  %3266 = vmatpush1.bf16.msra.mxu0 0
  %3267 = vmatprep.subr.bf16.mxu0 0
  %3268 = vmatpush1.bf16.msra.mxu0 0
  %3269 = vmatprep.mubr.bf16.mxu0 0
  %3270 = vmatmul.mubr.bf16.gmra.mrb[0].mxu0 %v3235
  %v3271 = vpop.f32.mrb[0].mxu0
  %v3272 = vadd.f32 0.0, %v3271
  %v3273 = vpop.f32.mrb[0].mxu0
  %v3274 = vpop.f32.mrb[0].mxu0
  %v3275 = vadd.f32 0.0, %v3274
  %v3276 = vpop.f32.mrb[0].mxu0
  %3277 = vdwg.mxu0
  %3278 = vrot.lane.b32.xlu0 %v2398, 48
  %v3279 = vpop.permute.xlu0 %3278
  %v3282 = vsel %vm553, %v3182, 0
  %3284 = vmatprep.subr.bf16.mxu0 0
  %3285 = vmatpush1.bf16.msra.mxu0 %v3279
  %3286 = vmatprep.subr.bf16.mxu0 0
  %3287 = vmatpush1.bf16.msra.mxu0 0
  %3288 = vmatprep.subr.bf16.mxu0 0
  %3289 = vmatpush1.bf16.msra.mxu0 0
  %3290 = vmatprep.subr.bf16.mxu0 0
  %3291 = vmatpush1.bf16.msra.mxu0 0
  %3292 = vmatprep.subr.bf16.mxu0 0
  %3293 = vmatpush1.bf16.msra.mxu0 0
  %3294 = vmatprep.subr.bf16.mxu0 0
  %3295 = vmatpush1.bf16.msra.mxu0 0
  %3296 = vmatprep.subr.bf16.mxu0 0
  %3297 = vmatpush1.bf16.msra.mxu0 0
  %3298 = vmatprep.subr.bf16.mxu0 0
  %3299 = vmatpush1.bf16.msra.mxu0 0
  %3300 = vmatprep.subr.bf16.mxu0 0
  %3301 = vmatpush1.bf16.msra.mxu0 0
  %3302 = vmatprep.subr.bf16.mxu0 0
  %3303 = vmatpush1.bf16.msra.mxu0 0
  %3304 = vmatprep.subr.bf16.mxu0 0
  %3305 = vmatpush1.bf16.msra.mxu0 0
  %3306 = vmatprep.subr.bf16.mxu0 0
  %3307 = vmatpush1.bf16.msra.mxu0 0
  %3308 = vmatprep.subr.bf16.mxu0 0
  %3309 = vmatpush1.bf16.msra.mxu0 0
  %3310 = vmatprep.subr.bf16.mxu0 0
  %3311 = vmatpush1.bf16.msra.mxu0 0
  %3312 = vmatprep.subr.bf16.mxu0 0
  %3313 = vmatpush1.bf16.msra.mxu0 0
  %3314 = vmatprep.subr.bf16.mxu0 0
  %3315 = vmatpush1.bf16.msra.mxu0 0
  %3316 = vmatprep.mubr.bf16.mxu0 0
  %3317 = vmatmul.mubr.bf16.gmra.mrb[0].mxu0 %v3282
  %v3318 = vpop.f32.mrb[0].mxu0
  %v3319 = vadd.f32 0.0, %v3318
  %v3320 = vpop.f32.mrb[0].mxu0
  %v3321 = vpop.f32.mrb[0].mxu0
  %v3322 = vadd.f32 0.0, %v3321
  %v3323 = vpop.f32.mrb[0].mxu0
  %3324 = vdwg.mxu0
  %3325 = vrot.lane.b32.xlu0 %v2399, 48
  %v3326 = vpop.permute.xlu0 %3325
  %v3329 = vsel %vm553, %v3183, 0
  %3331 = vmatprep.subr.bf16.mxu0 0
  %3332 = vmatpush1.bf16.msra.mxu0 %v3326
  %3333 = vmatprep.subr.bf16.mxu0 0
  %3334 = vmatpush1.bf16.msra.mxu0 0
  %3335 = vmatprep.subr.bf16.mxu0 0
  %3336 = vmatpush1.bf16.msra.mxu0 0
  %3337 = vmatprep.subr.bf16.mxu0 0
  %3338 = vmatpush1.bf16.msra.mxu0 0
  %3339 = vmatprep.subr.bf16.mxu0 0
  %3340 = vmatpush1.bf16.msra.mxu0 0
  %3341 = vmatprep.subr.bf16.mxu0 0
  %3342 = vmatpush1.bf16.msra.mxu0 0
  %3343 = vmatprep.subr.bf16.mxu0 0
  %3344 = vmatpush1.bf16.msra.mxu0 0
  %3345 = vmatprep.subr.bf16.mxu0 0
  %3346 = vmatpush1.bf16.msra.mxu0 0
  %3347 = vmatprep.subr.bf16.mxu0 0
  %3348 = vmatpush1.bf16.msra.mxu0 0
  %3349 = vmatprep.subr.bf16.mxu0 0
  %3350 = vmatpush1.bf16.msra.mxu0 0
  %3351 = vmatprep.subr.bf16.mxu0 0
  %3352 = vmatpush1.bf16.msra.mxu0 0
  %3353 = vmatprep.subr.bf16.mxu0 0
  %3354 = vmatpush1.bf16.msra.mxu0 0
  %3355 = vmatprep.subr.bf16.mxu0 0
  %3356 = vmatpush1.bf16.msra.mxu0 0
  %3357 = vmatprep.subr.bf16.mxu0 0
  %3358 = vmatpush1.bf16.msra.mxu0 0
  %3359 = vmatprep.subr.bf16.mxu0 0
  %3360 = vmatpush1.bf16.msra.mxu0 0
  %3361 = vmatprep.subr.bf16.mxu0 0
  %3362 = vmatpush1.bf16.msra.mxu0 0
  %3363 = vmatprep.mubr.bf16.mxu0 0
  %3364 = vmatmul.mubr.bf16.gmra.mrb[0].mxu0 %v3329
  %v3365 = vpop.f32.mrb[0].mxu0
  %v3366 = vadd.f32 0.0, %v3365
  %v3367 = vpop.f32.mrb[0].mxu0
  %v3368 = vpop.f32.mrb[0].mxu0
  %v3369 = vadd.f32 0.0, %v3368
  %v3370 = vpop.f32.mrb[0].mxu0
  %3371 = vdwg.mxu0
  %3380 = vrot.lane.b32.xlu0 %v3225, 16
  %v3381 = vpop.permute.xlu0 %3380
  %3382 = vrot.lane.b32.xlu0 %v3228, 16
  %v3383 = vpop.permute.xlu0 %3382
  %3384 = vrot.lane.b32.xlu0 %v3272, 16
  %v3385 = vpop.permute.xlu0 %3384
  %3386 = vrot.lane.b32.xlu0 %v3275, 16
  %v3387 = vpop.permute.xlu0 %3386
  %3388 = vrot.lane.b32.xlu0 %v3319, 16
  %v3389 = vpop.permute.xlu0 %3388
  %3390 = vrot.lane.b32.xlu0 %v3322, 16
  %v3391 = vpop.permute.xlu0 %3390
  %3392 = vrot.lane.b32.xlu0 %v3366, 16
  %v3393 = vpop.permute.xlu0 %3392
  %3394 = vrot.lane.b32.xlu0 %v3369, 16
  %v3395 = vpop.permute.xlu0 %3394
  %v3404 = vsel %vm553, %v2734, %v3381
  %v3405 = vsel %vm553, %v2737, %v3383
  %v3406 = vsel %vm553, %v2782, %v3385
  %v3407 = vsel %vm553, %v2785, %v3387
  %v3408 = vsel %vm553, %v2830, %v3389
  %v3409 = vsel %vm553, %v2833, %v3391
  %v3410 = vsel %vm553, %v2878, %v3393
  %v3411 = vsel %vm553, %v2881, %v3395
  %v3412 = vpack.c.bf16 %v3405, %v3404
  %v3413 = vpack.c.bf16 %v3407, %v3406
  %v3414 = vpack.c.bf16 %v3409, %v3408
  %v3415 = vpack.c.bf16 %v3411, %v3410
  %s3416 = scalar_lea.vmem %s3, 16
  %v3417 = vld [vmem:[%s3416] sm:$0xf]
  %v3418 = vld [vmem:[%s3416 + $0x4] sm:$0xf]
  %v3419 = vld [vmem:[%s3416 + $0x8] sm:$0xf]
  %v3420 = vld [vmem:[%s3416 + $0xc] sm:$0xf]
  %v3425 = vunpack.c.l.b16 %v3417
  %v3426 = vunpack.c.l.b16 %v3418
  %v3427 = vunpack.c.l.b16 %v3419
  %v3428 = vunpack.c.l.b16 %v3420
  %v3429 = vpack.c.b16 %v3426, %v3425
  %v3430 = vpack.c.b16 %v3428, %v3427
  %v3434 = vsel %vm267, %v3412, 0
  %v3437 = vsel %vm267, %v3413, 0
  %v3440 = vsel %vm267, %v3414, 0
  %v3443 = vsel %vm267, %v3415, 0
  %3445 = vmatprep.subr.bf16.mxu0 0
  %3446 = vmatpush1.bf16.msra.mxu0 %v3429
  %3447 = vmatprep.subr.bf16.mxu0 0
  %3448 = vmatpush1.bf16.msra.mxu0 %v3430
  %3449 = vmatprep.subr.bf16.mxu0 0
  %3450 = vmatpush1.bf16.msra.mxu0 0
  %3451 = vmatprep.subr.bf16.mxu0 0
  %3452 = vmatpush1.bf16.msra.mxu0 0
  %3453 = vmatprep.subr.bf16.mxu0 0
  %3454 = vmatpush1.bf16.msra.mxu0 0
  %3455 = vmatprep.subr.bf16.mxu0 0
  %3456 = vmatpush1.bf16.msra.mxu0 0
  %3457 = vmatprep.subr.bf16.mxu0 0
  %3458 = vmatpush1.bf16.msra.mxu0 0
  %3459 = vmatprep.subr.bf16.mxu0 0
  %3460 = vmatpush1.bf16.msra.mxu0 0
  %3461 = vmatprep.subr.bf16.mxu0 0
  %3462 = vmatpush1.bf16.msra.mxu0 0
  %3463 = vmatprep.subr.bf16.mxu0 0
  %3464 = vmatpush1.bf16.msra.mxu0 0
  %3465 = vmatprep.subr.bf16.mxu0 0
  %3466 = vmatpush1.bf16.msra.mxu0 0
  %3467 = vmatprep.subr.bf16.mxu0 0
  %3468 = vmatpush1.bf16.msra.mxu0 0
  %3469 = vmatprep.subr.bf16.mxu0 0
  %3470 = vmatpush1.bf16.msra.mxu0 0
  %3471 = vmatprep.subr.bf16.mxu0 0
  %3472 = vmatpush1.bf16.msra.mxu0 0
  %3473 = vmatprep.subr.bf16.mxu0 0
  %3474 = vmatpush1.bf16.msra.mxu0 0
  %3475 = vmatprep.subr.bf16.mxu0 0
  %3476 = vmatpush1.bf16.msra.mxu0 0
  %3477 = vmatprep.mubr.bf16.mxu0 0
  %3478 = vmatmul.mubr.bf16.gmra.mrb[0].mxu0 %v3434
  %v3479 = vpop.f32.mrb[0].mxu0
  %v3480 = vadd.f32 0.0, %v3479
  %v3481 = vpop.f32.mrb[0].mxu0
  %v3482 = vpop.f32.mrb[0].mxu0
  %v3483 = vadd.f32 0.0, %v3482
  %v3484 = vpop.f32.mrb[0].mxu0
  %3485 = vmatprep.mubr.bf16.mxu0 0
  %3486 = vmatmul.mubr.bf16.gmra.mrb[0].mxu0 %v3437
  %v3487 = vpop.f32.mrb[0].mxu0
  %v3488 = vadd.f32 0.0, %v3487
  %v3489 = vpop.f32.mrb[0].mxu0
  %v3490 = vpop.f32.mrb[0].mxu0
  %v3491 = vadd.f32 0.0, %v3490
  %v3492 = vpop.f32.mrb[0].mxu0
  %3493 = vmatprep.mubr.bf16.mxu0 0
  %3494 = vmatmul.mubr.bf16.gmra.mrb[0].mxu0 %v3440
  %v3495 = vpop.f32.mrb[0].mxu0
  %v3496 = vadd.f32 0.0, %v3495
  %v3497 = vpop.f32.mrb[0].mxu0
  %v3498 = vpop.f32.mrb[0].mxu0
  %v3499 = vadd.f32 0.0, %v3498
  %v3500 = vpop.f32.mrb[0].mxu0
  %3501 = vmatprep.mubr.bf16.mxu0 0
  %3502 = vmatmul.mubr.bf16.gmra.mrb[0].mxu0 %v3443
  %v3503 = vpop.f32.mrb[0].mxu0
  %v3504 = vadd.f32 0.0, %v3503
  %v3505 = vpop.f32.mrb[0].mxu0
  %v3506 = vpop.f32.mrb[0].mxu0
  %v3507 = vadd.f32 0.0, %v3506
  %v3508 = vpop.f32.mrb[0].mxu0
  %3509 = vdwg.mxu0
  %v3510 = vadd.f32 %v2107, %v3480
  %v3511 = vadd.f32 %v2108, %v3483
  %v3512 = vadd.f32 %v2109, %v3488
  %v3513 = vadd.f32 %v2110, %v3491
  %v3514 = vadd.f32 %v2111, %v3496
  %v3515 = vadd.f32 %v2112, %v3499
  %v3516 = vadd.f32 %v2113, %v3504
  %v3517 = vadd.f32 %v2114, %v3507
  %v3518 = vlaneseq
  %v3519 = vshrl.u32 %v3518, 7
  %v3520 = vsub.s32 5, %v3519
  %v3521 = vrot.slane %v2116, %v3520
  %v3522 = vadd.f32 %v3510, %v3521
  %v3523 = vadd.f32 %v3511, %v3521
  %v3524 = vadd.f32 %v3512, %v3521
  %v3525 = vadd.f32 %v3513, %v3521
  %v3526 = vadd.f32 %v3514, %v3521
  %v3527 = vadd.f32 %v3515, %v3521
  %v3528 = vadd.f32 %v3516, %v3521
  %v3529 = vadd.f32 %v3517, %v3521
  %v3530 = vsel %vm267, %v3522, 0.0
  %3531 = vadd.xlane.f32.xlu0 %v3530
  %v3532 = vpop.xlane.xlu0 %3531
  %v3533 = vsel %vm267, %v3523, 0.0
  %3534 = vadd.xlane.f32.xlu0 %v3533
  %v3535 = vpop.xlane.xlu0 %3534
  %v3536 = vsel %vm267, %v3524, 0.0
  %3537 = vadd.xlane.f32.xlu0 %v3536
  %v3538 = vpop.xlane.xlu0 %3537
  %v3539 = vsel %vm267, %v3525, 0.0
  %3540 = vadd.xlane.f32.xlu0 %v3539
  %v3541 = vpop.xlane.xlu0 %3540
  %v3542 = vsel %vm267, %v3526, 0.0
  %3543 = vadd.xlane.f32.xlu0 %v3542
  %v3544 = vpop.xlane.xlu0 %3543
  %v3545 = vsel %vm267, %v3527, 0.0
  %3546 = vadd.xlane.f32.xlu0 %v3545
  %v3547 = vpop.xlane.xlu0 %3546
  %v3548 = vsel %vm267, %v3528, 0.0
  %3549 = vadd.xlane.f32.xlu0 %v3548
  %v3550 = vpop.xlane.xlu0 %3549
  %v3551 = vsel %vm267, %v3529, 0.0
  %3552 = vadd.xlane.f32.xlu0 %v3551
  %v3553 = vpop.xlane.xlu0 %3552
  %v3554 = vmul.f32 %v3532, %v292
  %v3555 = vmul.f32 %v3535, %v292
  %v3556 = vmul.f32 %v3538, %v292
  %v3557 = vmul.f32 %v3541, %v292
  %v3558 = vmul.f32 %v3544, %v292
  %v3559 = vmul.f32 %v3547, %v292
  %v3560 = vmul.f32 %v3550, %v292
  %v3561 = vmul.f32 %v3553, %v292
  %v3562 = vsub.f32 %v3522, %v3554
  %v3563 = vsub.f32 %v3523, %v3555
  %v3564 = vsub.f32 %v3524, %v3556
  %v3565 = vsub.f32 %v3525, %v3557
  %v3566 = vsub.f32 %v3526, %v3558
  %v3567 = vsub.f32 %v3527, %v3559
  %v3568 = vsub.f32 %v3528, %v3560
  %v3569 = vsub.f32 %v3529, %v3561
  %v3570 = vmul.f32 %v3562, %v3562
  %v3571 = vmul.f32 %v3563, %v3563
  %v3572 = vmul.f32 %v3564, %v3564
  %v3573 = vmul.f32 %v3565, %v3565
  %v3574 = vmul.f32 %v3566, %v3566
  %v3575 = vmul.f32 %v3567, %v3567
  %v3576 = vmul.f32 %v3568, %v3568
  %v3577 = vmul.f32 %v3569, %v3569
  %v3578 = vsel %vm267, %v3570, 0.0
  %3579 = vadd.xlane.f32.xlu0 %v3578
  %v3580 = vpop.xlane.xlu0 %3579
  %v3581 = vsel %vm267, %v3571, 0.0
  %3582 = vadd.xlane.f32.xlu0 %v3581
  %v3583 = vpop.xlane.xlu0 %3582
  %v3584 = vsel %vm267, %v3572, 0.0
  %3585 = vadd.xlane.f32.xlu0 %v3584
  %v3586 = vpop.xlane.xlu0 %3585
  %v3587 = vsel %vm267, %v3573, 0.0
  %3588 = vadd.xlane.f32.xlu0 %v3587
  %v3589 = vpop.xlane.xlu0 %3588
  %v3590 = vsel %vm267, %v3574, 0.0
  %3591 = vadd.xlane.f32.xlu0 %v3590
  %v3592 = vpop.xlane.xlu0 %3591
  %v3593 = vsel %vm267, %v3575, 0.0
  %3594 = vadd.xlane.f32.xlu0 %v3593
  %v3595 = vpop.xlane.xlu0 %3594
  %v3596 = vsel %vm267, %v3576, 0.0
  %3597 = vadd.xlane.f32.xlu0 %v3596
  %v3598 = vpop.xlane.xlu0 %3597
  %v3599 = vsel %vm267, %v3577, 0.0
  %3600 = vadd.xlane.f32.xlu0 %v3599
  %v3601 = vpop.xlane.xlu0 %3600
  %v3602 = vmul.f32 %v3580, %v292
  %v3603 = vmul.f32 %v3583, %v292
  %v3604 = vmul.f32 %v3586, %v292
  %v3605 = vmul.f32 %v3589, %v292
  %v3606 = vmul.f32 %v3592, %v292
  %v3607 = vmul.f32 %v3595, %v292
  %v3608 = vmul.f32 %v3598, %v292
  %v3609 = vmul.f32 %v3601, %v292
  %v3610 = vadd.f32 %v3602, 1e-06
  %v3611 = vadd.f32 %v3603, 1e-06
  %v3612 = vadd.f32 %v3604, 1e-06
  %v3613 = vadd.f32 %v3605, 1e-06
  %v3614 = vadd.f32 %v3606, 1e-06
  %v3615 = vadd.f32 %v3607, 1e-06
  %v3616 = vadd.f32 %v3608, 1e-06
  %v3617 = vadd.f32 %v3609, 1e-06
  %v3618 = vrsqrt.pop %v3610
  %v3619 = vrsqrt.pop %v3611
  %v3620 = vrsqrt.pop %v3612
  %v3621 = vrsqrt.pop %v3613
  %v3622 = vrsqrt.pop %v3614
  %v3623 = vrsqrt.pop %v3615
  %v3624 = vrsqrt.pop %v3616
  %v3625 = vrsqrt.pop %v3617
  %v3626 = vmul.f32 %v3562, %v3618
  %v3627 = vmul.f32 %v3563, %v3619
  %v3628 = vmul.f32 %v3564, %v3620
  %v3629 = vmul.f32 %v3565, %v3621
  %v3630 = vmul.f32 %v3566, %v3622
  %v3631 = vmul.f32 %v3567, %v3623
  %v3632 = vmul.f32 %v3568, %v3624
  %v3633 = vmul.f32 %v3569, %v3625
  %v3634 = vlaneseq
  %v3635 = vshrl.u32 %v3634, 7
  %v3636 = vsub.s32 6, %v3635
  %v3637 = vrot.slane %v2116, %v3636
  %v3638 = vmul.f32 %v3626, %v3637
  %v3639 = vmul.f32 %v3627, %v3637
  %v3640 = vmul.f32 %v3628, %v3637
  %v3641 = vmul.f32 %v3629, %v3637
  %v3642 = vmul.f32 %v3630, %v3637
  %v3643 = vmul.f32 %v3631, %v3637
  %v3644 = vmul.f32 %v3632, %v3637
  %v3645 = vmul.f32 %v3633, %v3637
  %v3646 = vlaneseq
  %v3647 = vshrl.u32 %v3646, 7
  %v3648 = vsub.s32 7, %v3647
  %v3649 = vrot.slane %v2116, %v3648
  %v3650 = vadd.f32 %v3638, %v3649
  %v3651 = vadd.f32 %v3639, %v3649
  %v3652 = vadd.f32 %v3640, %v3649
  %v3653 = vadd.f32 %v3641, %v3649
  %v3654 = vadd.f32 %v3642, %v3649
  %v3655 = vadd.f32 %v3643, %v3649
  %v3656 = vadd.f32 %v3644, %v3649
  %v3657 = vadd.f32 %v3645, %v3649
  %v3658 = vpack.c.bf16 %v3651, %v3650
  %v3659 = vpack.c.bf16 %v3653, %v3652
  %v3660 = vpack.c.bf16 %v3655, %v3654
  %v3661 = vpack.c.bf16 %v3657, %v3656
  %s3662 = scalar_lea.vmem %s4, 16
  %v3663 = vld [vmem:[%s3662] sm:$0xf]
  %v3664 = vld [vmem:[%s3662 + $0x4] sm:$0xf]
  %v3665 = vld [vmem:[%s3662 + $0x8] sm:$0xf]
  %v3666 = vld [vmem:[%s3662 + $0xc] sm:$0xf]
  %v3667 = vlaneseq
  %v3668 = vshrl.u32 %v3667, 7
  %v3669 = vsub.s32 0, %v3668
  %v3670 = vrot.slane %v2117, %v3669
  %v3675 = vunpack.c.l.b16 %v3663
  %v3676 = vunpack.c.l.b16 %v3664
  %v3677 = vunpack.c.l.b16 %v3665
  %v3678 = vunpack.c.l.b16 %v3666
  %v3679 = vpack.c.b16 %v3676, %v3675
  %v3680 = vpack.c.b16 %v3678, %v3677
  %v3684 = vsel %vm267, %v3658, 0
  %v3687 = vsel %vm267, %v3659, 0
  %v3690 = vsel %vm267, %v3660, 0
  %v3693 = vsel %vm267, %v3661, 0
  %3695 = vmatprep.subr.bf16.mxu0 0
  %3696 = vmatpush1.bf16.msra.mxu0 %v3679
  %3697 = vmatprep.subr.bf16.mxu0 0
  %3698 = vmatpush1.bf16.msra.mxu0 %v3680
  %3699 = vmatprep.subr.bf16.mxu0 0
  %3700 = vmatpush1.bf16.msra.mxu0 0
  %3701 = vmatprep.subr.bf16.mxu0 0
  %3702 = vmatpush1.bf16.msra.mxu0 0
  %3703 = vmatprep.subr.bf16.mxu0 0
  %3704 = vmatpush1.bf16.msra.mxu0 0
  %3705 = vmatprep.subr.bf16.mxu0 0
  %3706 = vmatpush1.bf16.msra.mxu0 0
  %3707 = vmatprep.subr.bf16.mxu0 0
  %3708 = vmatpush1.bf16.msra.mxu0 0
  %3709 = vmatprep.subr.bf16.mxu0 0
  %3710 = vmatpush1.bf16.msra.mxu0 0
  %3711 = vmatprep.subr.bf16.mxu0 0
  %3712 = vmatpush1.bf16.msra.mxu0 0
  %3713 = vmatprep.subr.bf16.mxu0 0
  %3714 = vmatpush1.bf16.msra.mxu0 0
  %3715 = vmatprep.subr.bf16.mxu0 0
  %3716 = vmatpush1.bf16.msra.mxu0 0
  %3717 = vmatprep.subr.bf16.mxu0 0
  %3718 = vmatpush1.bf16.msra.mxu0 0
  %3719 = vmatprep.subr.bf16.mxu0 0
  %3720 = vmatpush1.bf16.msra.mxu0 0
  %3721 = vmatprep.subr.bf16.mxu0 0
  %3722 = vmatpush1.bf16.msra.mxu0 0
  %3723 = vmatprep.subr.bf16.mxu0 0
  %3724 = vmatpush1.bf16.msra.mxu0 0
  %3725 = vmatprep.subr.bf16.mxu0 0
  %3726 = vmatpush1.bf16.msra.mxu0 0
  %3727 = vmatprep.mubr.bf16.mxu0 0
  %3728 = vmatmul.mubr.bf16.gmra.mrb[0].mxu0 %v3684
  %v3729 = vpop.f32.mrb[0].mxu0
  %v3730 = vadd.f32 %v3670, %v3729
  %v3731 = vpop.f32.mrb[0].mxu0
  %v3732 = vpop.f32.mrb[0].mxu0
  %v3733 = vadd.f32 %v3670, %v3732
  %v3734 = vpop.f32.mrb[0].mxu0
  %3735 = vmatprep.mubr.bf16.mxu0 0
  %3736 = vmatmul.mubr.bf16.gmra.mrb[0].mxu0 %v3687
  %v3737 = vpop.f32.mrb[0].mxu0
  %v3738 = vadd.f32 %v3670, %v3737
  %v3739 = vpop.f32.mrb[0].mxu0
  %v3740 = vpop.f32.mrb[0].mxu0
  %v3741 = vadd.f32 %v3670, %v3740
  %v3742 = vpop.f32.mrb[0].mxu0
  %3743 = vmatprep.mubr.bf16.mxu0 0
  %3744 = vmatmul.mubr.bf16.gmra.mrb[0].mxu0 %v3690
  %v3745 = vpop.f32.mrb[0].mxu0
  %v3746 = vadd.f32 %v3670, %v3745
  %v3747 = vpop.f32.mrb[0].mxu0
  %v3748 = vpop.f32.mrb[0].mxu0
  %v3749 = vadd.f32 %v3670, %v3748
  %v3750 = vpop.f32.mrb[0].mxu0
  %3751 = vmatprep.mubr.bf16.mxu0 0
  %3752 = vmatmul.mubr.bf16.gmra.mrb[0].mxu0 %v3693
  %v3753 = vpop.f32.mrb[0].mxu0
  %v3754 = vadd.f32 %v3670, %v3753
  %v3755 = vpop.f32.mrb[0].mxu0
  %v3756 = vpop.f32.mrb[0].mxu0
  %v3757 = vadd.f32 %v3670, %v3756
  %v3758 = vpop.f32.mrb[0].mxu0
  %3759 = vdwg.mxu0
  %v3760 = vmul.f32 %v3730, %v3730
  %v3761 = vmul.f32 %v3733, %v3733
  %v3762 = vmul.f32 %v3738, %v3738
  %v3763 = vmul.f32 %v3741, %v3741
  %v3764 = vmul.f32 %v3746, %v3746
  %v3765 = vmul.f32 %v3749, %v3749
  %v3766 = vmul.f32 %v3754, %v3754
  %v3767 = vmul.f32 %v3757, %v3757
  %v3768 = vmul.f32 %v3730, %v3760
  %v3769 = vmul.f32 %v3733, %v3761
  %v3770 = vmul.f32 %v3738, %v3762
  %v3771 = vmul.f32 %v3741, %v3763
  %v3772 = vmul.f32 %v3746, %v3764
  %v3773 = vmul.f32 %v3749, %v3765
  %v3774 = vmul.f32 %v3754, %v3766
  %v3775 = vmul.f32 %v3757, %v3767
  %v3776 = vmul.f32 %v3768, 0.044715
  %v3777 = vmul.f32 %v3769, 0.044715
  %v3778 = vmul.f32 %v3770, 0.044715
  %v3779 = vmul.f32 %v3771, 0.044715
  %v3780 = vmul.f32 %v3772, 0.044715
  %v3781 = vmul.f32 %v3773, 0.044715
  %v3782 = vmul.f32 %v3774, 0.044715
  %v3783 = vmul.f32 %v3775, 0.044715
  %v3784 = vadd.f32 %v3730, %v3776
  %v3785 = vadd.f32 %v3733, %v3777
  %v3786 = vadd.f32 %v3738, %v3778
  %v3787 = vadd.f32 %v3741, %v3779
  %v3788 = vadd.f32 %v3746, %v3780
  %v3789 = vadd.f32 %v3749, %v3781
  %v3790 = vadd.f32 %v3754, %v3782
  %v3791 = vadd.f32 %v3757, %v3783
  %v3792 = vmul.f32 %v3784, 0.7978846
  %v3793 = vmul.f32 %v3785, 0.7978846
  %v3794 = vmul.f32 %v3786, 0.7978846
  %v3795 = vmul.f32 %v3787, 0.7978846
  %v3796 = vmul.f32 %v3788, 0.7978846
  %v3797 = vmul.f32 %v3789, 0.7978846
  %v3798 = vmul.f32 %v3790, 0.7978846
  %v3799 = vmul.f32 %v3791, 0.7978846
  %v3800 = vtanh.pop %v3792
  %v3801 = vtanh.pop %v3793
  %v3802 = vtanh.pop %v3794
  %v3803 = vtanh.pop %v3795
  %v3804 = vtanh.pop %v3796
  %v3805 = vtanh.pop %v3797
  %v3806 = vtanh.pop %v3798
  %v3807 = vtanh.pop %v3799
  %v3808 = vadd.f32 %v3800, 1.0
  %v3809 = vadd.f32 %v3801, 1.0
  %v3810 = vadd.f32 %v3802, 1.0
  %v3811 = vadd.f32 %v3803, 1.0
  %v3812 = vadd.f32 %v3804, 1.0
  %v3813 = vadd.f32 %v3805, 1.0
  %v3814 = vadd.f32 %v3806, 1.0
  %v3815 = vadd.f32 %v3807, 1.0
  %v3816 = vmul.f32 %v3808, 0.5
  %v3817 = vmul.f32 %v3809, 0.5
  %v3818 = vmul.f32 %v3810, 0.5
  %v3819 = vmul.f32 %v3811, 0.5
  %v3820 = vmul.f32 %v3812, 0.5
  %v3821 = vmul.f32 %v3813, 0.5
  %v3822 = vmul.f32 %v3814, 0.5
  %v3823 = vmul.f32 %v3815, 0.5
  %v3824 = vmul.f32 %v3730, %v3816
  %v3825 = vmul.f32 %v3733, %v3817
  %v3826 = vmul.f32 %v3738, %v3818
  %v3827 = vmul.f32 %v3741, %v3819
  %v3828 = vmul.f32 %v3746, %v3820
  %v3829 = vmul.f32 %v3749, %v3821
  %v3830 = vmul.f32 %v3754, %v3822
  %v3831 = vmul.f32 %v3757, %v3823
  %v3832 = vpack.c.bf16 %v3825, %v3824
  %v3833 = vpack.c.bf16 %v3827, %v3826
  %v3834 = vpack.c.bf16 %v3829, %v3828
  %v3835 = vpack.c.bf16 %v3831, %v3830
  %s3836 = scalar_lea.vmem %s5, 32
  %v3837 = vld [vmem:[%s3836] sm:$0xf]
  %v3838 = vld [vmem:[%s3836 + $0x4] sm:$0xf]
  %v3839 = vld [vmem:[%s3836 + $0x8] sm:$0xf]
  %v3840 = vld [vmem:[%s3836 + $0xc] sm:$0xf]
  %v3841 = vld [vmem:[%s3836 + $0x10] sm:$0xf]
  %v3842 = vld [vmem:[%s3836 + $0x14] sm:$0xf]
  %v3843 = vld [vmem:[%s3836 + $0x18] sm:$0xf]
  %v3844 = vld [vmem:[%s3836 + $0x1c] sm:$0xf]
  %v3853 = vunpack.c.l.b16 %v3837
  %v3854 = vunpack.c.l.b16 %v3838
  %v3855 = vunpack.c.l.b16 %v3839
  %v3856 = vunpack.c.l.b16 %v3840
  %v3857 = vunpack.c.l.b16 %v3841
  %v3858 = vunpack.c.l.b16 %v3842
  %v3859 = vunpack.c.l.b16 %v3843
  %v3860 = vunpack.c.l.b16 %v3844
  %v3861 = vpack.c.b16 %v3854, %v3853
  %v3862 = vpack.c.b16 %v3856, %v3855
  %v3863 = vpack.c.b16 %v3858, %v3857
  %v3864 = vpack.c.b16 %v3860, %v3859
  %v3870 = vsel %vm2017, %v3832, 0
  %v3873 = vsel %vm2017, %v3833, 0
  %v3876 = vsel %vm2017, %v3834, 0
  %v3879 = vsel %vm2017, %v3835, 0
  %3881 = vmatprep.subr.bf16.mxu0 0
  %3882 = vmatpush1.bf16.msra.mxu0 %v3861
  %3883 = vmatprep.subr.bf16.mxu0 0
  %3884 = vmatpush1.bf16.msra.mxu0 %v3862
  %3885 = vmatprep.subr.bf16.mxu0 0
  %3886 = vmatpush1.bf16.msra.mxu0 %v3863
  %3887 = vmatprep.subr.bf16.mxu0 0
  %3888 = vmatpush1.bf16.msra.mxu0 %v3864
  %3889 = vmatprep.subr.bf16.mxu0 0
  %3890 = vmatpush1.bf16.msra.mxu0 0
  %3891 = vmatprep.subr.bf16.mxu0 0
  %3892 = vmatpush1.bf16.msra.mxu0 0
  %3893 = vmatprep.subr.bf16.mxu0 0
  %3894 = vmatpush1.bf16.msra.mxu0 0
  %3895 = vmatprep.subr.bf16.mxu0 0
  %3896 = vmatpush1.bf16.msra.mxu0 0
  %3897 = vmatprep.subr.bf16.mxu0 0
  %3898 = vmatpush1.bf16.msra.mxu0 0
  %3899 = vmatprep.subr.bf16.mxu0 0
  %3900 = vmatpush1.bf16.msra.mxu0 0
  %3901 = vmatprep.subr.bf16.mxu0 0
  %3902 = vmatpush1.bf16.msra.mxu0 0
  %3903 = vmatprep.subr.bf16.mxu0 0
  %3904 = vmatpush1.bf16.msra.mxu0 0
  %3905 = vmatprep.subr.bf16.mxu0 0
  %3906 = vmatpush1.bf16.msra.mxu0 0
  %3907 = vmatprep.subr.bf16.mxu0 0
  %3908 = vmatpush1.bf16.msra.mxu0 0
  %3909 = vmatprep.subr.bf16.mxu0 0
  %3910 = vmatpush1.bf16.msra.mxu0 0
  %3911 = vmatprep.subr.bf16.mxu0 0
  %3912 = vmatpush1.bf16.msra.mxu0 0
  %3913 = vmatprep.mubr.bf16.mxu0 0
  %3914 = vmatmul.mubr.bf16.gmra.mrb[0].mxu0 %v3870
  %v3915 = vpop.f32.mrb[0].mxu0
  %v3916 = vadd.f32 0.0, %v3915
  %v3917 = vpop.f32.mrb[0].mxu0
  %v3918 = vpop.f32.mrb[0].mxu0
  %v3919 = vadd.f32 0.0, %v3918
  %v3920 = vpop.f32.mrb[0].mxu0
  %3921 = vmatprep.mubr.bf16.mxu0 0
  %3922 = vmatmul.mubr.bf16.gmra.mrb[0].mxu0 %v3873
  %v3923 = vpop.f32.mrb[0].mxu0
  %v3924 = vadd.f32 0.0, %v3923
  %v3925 = vpop.f32.mrb[0].mxu0
  %v3926 = vpop.f32.mrb[0].mxu0
  %v3927 = vadd.f32 0.0, %v3926
  %v3928 = vpop.f32.mrb[0].mxu0
  %3929 = vmatprep.mubr.bf16.mxu0 0
  %3930 = vmatmul.mubr.bf16.gmra.mrb[0].mxu0 %v3876
  %v3931 = vpop.f32.mrb[0].mxu0
  %v3932 = vadd.f32 0.0, %v3931
  %v3933 = vpop.f32.mrb[0].mxu0
  %v3934 = vpop.f32.mrb[0].mxu0
  %v3935 = vadd.f32 0.0, %v3934
  %v3936 = vpop.f32.mrb[0].mxu0
  %3937 = vmatprep.mubr.bf16.mxu0 0
  %3938 = vmatmul.mubr.bf16.gmra.mrb[0].mxu0 %v3879
  %v3939 = vpop.f32.mrb[0].mxu0
  %v3940 = vadd.f32 0.0, %v3939
  %v3941 = vpop.f32.mrb[0].mxu0
  %v3942 = vpop.f32.mrb[0].mxu0
  %v3943 = vadd.f32 0.0, %v3942
  %v3944 = vpop.f32.mrb[0].mxu0
  %3945 = vdwg.mxu0
  %v3946 = vadd.f32 %v3522, %v3916
  %v3947 = vadd.f32 %v3523, %v3919
  %v3948 = vadd.f32 %v3524, %v3924
  %v3949 = vadd.f32 %v3525, %v3927
  %v3950 = vadd.f32 %v3526, %v3932
  %v3951 = vadd.f32 %v3527, %v3935
  %v3952 = vadd.f32 %v3528, %v3940
  %v3953 = vadd.f32 %v3529, %v3943
  %v3954 = vlaneseq
  %v3955 = vshrl.u32 %v3954, 7
  %v3956 = vsub.s32 1, %v3955
  %v3957 = vrot.slane %v2117, %v3956
  %v3958 = vadd.f32 %v3946, %v3957
  %v3959 = vadd.f32 %v3947, %v3957
  %v3960 = vadd.f32 %v3948, %v3957
  %v3961 = vadd.f32 %v3949, %v3957
  %v3962 = vadd.f32 %v3950, %v3957
  %v3963 = vadd.f32 %v3951, %v3957
  %v3964 = vadd.f32 %v3952, %v3957
  %v3965 = vadd.f32 %v3953, %v3957
  %v3966 = vld [vmem:[%s10] sm:$0x1f]
  %v3967 = vsel %vm267, %v3958, 0.0
  %3968 = vadd.xlane.f32.xlu0 %v3967
  %v3969 = vpop.xlane.xlu0 %3968
  %v3970 = vsel %vm267, %v3959, 0.0
  %3971 = vadd.xlane.f32.xlu0 %v3970
  %v3972 = vpop.xlane.xlu0 %3971
  %v3973 = vsel %vm267, %v3960, 0.0
  %3974 = vadd.xlane.f32.xlu0 %v3973
  %v3975 = vpop.xlane.xlu0 %3974
  %v3976 = vsel %vm267, %v3961, 0.0
  %3977 = vadd.xlane.f32.xlu0 %v3976
  %v3978 = vpop.xlane.xlu0 %3977
  %v3979 = vsel %vm267, %v3962, 0.0
  %3980 = vadd.xlane.f32.xlu0 %v3979
  %v3981 = vpop.xlane.xlu0 %3980
  %v3982 = vsel %vm267, %v3963, 0.0
  %3983 = vadd.xlane.f32.xlu0 %v3982
  %v3984 = vpop.xlane.xlu0 %3983
  %v3985 = vsel %vm267, %v3964, 0.0
  %3986 = vadd.xlane.f32.xlu0 %v3985
  %v3987 = vpop.xlane.xlu0 %3986
  %v3988 = vsel %vm267, %v3965, 0.0
  %3989 = vadd.xlane.f32.xlu0 %v3988
  %v3990 = vpop.xlane.xlu0 %3989
  %v3991 = vmul.f32 %v3969, %v292
  %v3992 = vmul.f32 %v3972, %v292
  %v3993 = vmul.f32 %v3975, %v292
  %v3994 = vmul.f32 %v3978, %v292
  %v3995 = vmul.f32 %v3981, %v292
  %v3996 = vmul.f32 %v3984, %v292
  %v3997 = vmul.f32 %v3987, %v292
  %v3998 = vmul.f32 %v3990, %v292
  %v3999 = vsub.f32 %v3958, %v3991
  %v4000 = vsub.f32 %v3959, %v3992
  %v4001 = vsub.f32 %v3960, %v3993
  %v4002 = vsub.f32 %v3961, %v3994
  %v4003 = vsub.f32 %v3962, %v3995
  %v4004 = vsub.f32 %v3963, %v3996
  %v4005 = vsub.f32 %v3964, %v3997
  %v4006 = vsub.f32 %v3965, %v3998
  %v4007 = vmul.f32 %v3999, %v3999
  %v4008 = vmul.f32 %v4000, %v4000
  %v4009 = vmul.f32 %v4001, %v4001
  %v4010 = vmul.f32 %v4002, %v4002
  %v4011 = vmul.f32 %v4003, %v4003
  %v4012 = vmul.f32 %v4004, %v4004
  %v4013 = vmul.f32 %v4005, %v4005
  %v4014 = vmul.f32 %v4006, %v4006
  %v4015 = vsel %vm267, %v4007, 0.0
  %4016 = vadd.xlane.f32.xlu0 %v4015
  %v4017 = vpop.xlane.xlu0 %4016
  %v4018 = vsel %vm267, %v4008, 0.0
  %4019 = vadd.xlane.f32.xlu0 %v4018
  %v4020 = vpop.xlane.xlu0 %4019
  %v4021 = vsel %vm267, %v4009, 0.0
  %4022 = vadd.xlane.f32.xlu0 %v4021
  %v4023 = vpop.xlane.xlu0 %4022
  %v4024 = vsel %vm267, %v4010, 0.0
  %4025 = vadd.xlane.f32.xlu0 %v4024
  %v4026 = vpop.xlane.xlu0 %4025
  %v4027 = vsel %vm267, %v4011, 0.0
  %4028 = vadd.xlane.f32.xlu0 %v4027
  %v4029 = vpop.xlane.xlu0 %4028
  %v4030 = vsel %vm267, %v4012, 0.0
  %4031 = vadd.xlane.f32.xlu0 %v4030
  %v4032 = vpop.xlane.xlu0 %4031
  %v4033 = vsel %vm267, %v4013, 0.0
  %4034 = vadd.xlane.f32.xlu0 %v4033
  %v4035 = vpop.xlane.xlu0 %4034
  %v4036 = vsel %vm267, %v4014, 0.0
  %4037 = vadd.xlane.f32.xlu0 %v4036
  %v4038 = vpop.xlane.xlu0 %4037
  %v4039 = vmul.f32 %v4017, %v292
  %v4040 = vmul.f32 %v4020, %v292
  %v4041 = vmul.f32 %v4023, %v292
  %v4042 = vmul.f32 %v4026, %v292
  %v4043 = vmul.f32 %v4029, %v292
  %v4044 = vmul.f32 %v4032, %v292
  %v4045 = vmul.f32 %v4035, %v292
  %v4046 = vmul.f32 %v4038, %v292
  %v4047 = vadd.f32 %v4039, 1e-06
  %v4048 = vadd.f32 %v4040, 1e-06
  %v4049 = vadd.f32 %v4041, 1e-06
  %v4050 = vadd.f32 %v4042, 1e-06
  %v4051 = vadd.f32 %v4043, 1e-06
  %v4052 = vadd.f32 %v4044, 1e-06
  %v4053 = vadd.f32 %v4045, 1e-06
  %v4054 = vadd.f32 %v4046, 1e-06
  %v4055 = vrsqrt.pop %v4047
  %v4056 = vrsqrt.pop %v4048
  %v4057 = vrsqrt.pop %v4049
  %v4058 = vrsqrt.pop %v4050
  %v4059 = vrsqrt.pop %v4051
  %v4060 = vrsqrt.pop %v4052
  %v4061 = vrsqrt.pop %v4053
  %v4062 = vrsqrt.pop %v4054
  %v4063 = vmul.f32 %v3999, %v4055
  %v4064 = vmul.f32 %v4000, %v4056
  %v4065 = vmul.f32 %v4001, %v4057
  %v4066 = vmul.f32 %v4002, %v4058
  %v4067 = vmul.f32 %v4003, %v4059
  %v4068 = vmul.f32 %v4004, %v4060
  %v4069 = vmul.f32 %v4005, %v4061
  %v4070 = vmul.f32 %v4006, %v4062
  %v4071 = vlaneseq
  %v4072 = vshrl.u32 %v4071, 7
  %v4073 = vsub.s32 0, %v4072
  %v4074 = vrot.slane %v3966, %v4073
  %v4075 = vmul.f32 %v4063, %v4074
  %v4076 = vmul.f32 %v4064, %v4074
  %v4077 = vmul.f32 %v4065, %v4074
  %v4078 = vmul.f32 %v4066, %v4074
  %v4079 = vmul.f32 %v4067, %v4074
  %v4080 = vmul.f32 %v4068, %v4074
  %v4081 = vmul.f32 %v4069, %v4074
  %v4082 = vmul.f32 %v4070, %v4074
  %v4083 = vlaneseq
  %v4084 = vshrl.u32 %v4083, 7
  %v4085 = vsub.s32 1, %v4084
  %v4086 = vrot.slane %v3966, %v4085
  %v4087 = vadd.f32 %v4075, %v4086
  %v4088 = vadd.f32 %v4076, %v4086
  %v4089 = vadd.f32 %v4077, %v4086
  %v4090 = vadd.f32 %v4078, %v4086
  %v4091 = vadd.f32 %v4079, %v4086
  %v4092 = vadd.f32 %v4080, %v4086
  %v4093 = vadd.f32 %v4081, %v4086
  %v4094 = vadd.f32 %v4082, %v4086
  %v4095 = vpack.c.bf16 %v4088, %v4087
  %v4096 = vpack.c.bf16 %v4090, %v4089
  %v4097 = vpack.c.bf16 %v4092, %v4091
  %v4098 = vpack.c.bf16 %v4094, %v4093
  %v4099 = vld [vmem:[%s7] sm:$0xf]
  %v4100 = vld [vmem:[%s7 + $0x4] sm:$0xf]
  %v4101 = vld [vmem:[%s7 + $0x8] sm:$0xf]
  %v4102 = vld [vmem:[%s7 + $0xc] sm:$0xf]
  %v4103 = vlaneseq
  %v4104 = vshrl.u32 %v4103, 7
  %v4105 = vsub.s32 3, %v4104
  %v4106 = vrot.slane %v3966, %v4105
  %v4111 = vunpack.c.l.b16 %v4099
  %v4112 = vunpack.c.l.b16 %v4100
  %v4113 = vunpack.c.l.b16 %v4101
  %v4114 = vunpack.c.l.b16 %v4102
  %v4115 = vpack.c.b16 %v4112, %v4111
  %v4116 = vpack.c.b16 %v4114, %v4113
  %v4120 = vsel %vm267, %v4095, 0
  %v4123 = vsel %vm267, %v4096, 0
  %v4126 = vsel %vm267, %v4097, 0
  %v4129 = vsel %vm267, %v4098, 0
  %4131 = vmatprep.subr.bf16.mxu0 0
  %4132 = vmatpush1.bf16.msra.mxu0 %v4115
  %4133 = vmatprep.subr.bf16.mxu0 0
  %4134 = vmatpush1.bf16.msra.mxu0 %v4116
  %4135 = vmatprep.subr.bf16.mxu0 0
  %4136 = vmatpush1.bf16.msra.mxu0 0
  %4137 = vmatprep.subr.bf16.mxu0 0
  %4138 = vmatpush1.bf16.msra.mxu0 0
  %4139 = vmatprep.subr.bf16.mxu0 0
  %4140 = vmatpush1.bf16.msra.mxu0 0
  %4141 = vmatprep.subr.bf16.mxu0 0
  %4142 = vmatpush1.bf16.msra.mxu0 0
  %4143 = vmatprep.subr.bf16.mxu0 0
  %4144 = vmatpush1.bf16.msra.mxu0 0
  %4145 = vmatprep.subr.bf16.mxu0 0
  %4146 = vmatpush1.bf16.msra.mxu0 0
  %4147 = vmatprep.subr.bf16.mxu0 0
  %4148 = vmatpush1.bf16.msra.mxu0 0
  %4149 = vmatprep.subr.bf16.mxu0 0
  %4150 = vmatpush1.bf16.msra.mxu0 0
  %4151 = vmatprep.subr.bf16.mxu0 0
  %4152 = vmatpush1.bf16.msra.mxu0 0
  %4153 = vmatprep.subr.bf16.mxu0 0
  %4154 = vmatpush1.bf16.msra.mxu0 0
  %4155 = vmatprep.subr.bf16.mxu0 0
  %4156 = vmatpush1.bf16.msra.mxu0 0
  %4157 = vmatprep.subr.bf16.mxu0 0
  %4158 = vmatpush1.bf16.msra.mxu0 0
  %4159 = vmatprep.subr.bf16.mxu0 0
  %4160 = vmatpush1.bf16.msra.mxu0 0
  %4161 = vmatprep.subr.bf16.mxu0 0
  %4162 = vmatpush1.bf16.msra.mxu0 0
  %4163 = vmatprep.mubr.bf16.mxu0 0
  %4164 = vmatmul.mubr.bf16.gmra.mrb[0].mxu0 %v4120
  %v4165 = vpop.f32.mrb[0].mxu0
  %v4166 = vadd.f32 %v4106, %v4165
  %v4167 = vpop.f32.mrb[0].mxu0
  %v4168 = vpop.f32.mrb[0].mxu0
  %v4169 = vadd.f32 %v4106, %v4168
  %v4170 = vpop.f32.mrb[0].mxu0
  %4171 = vmatprep.mubr.bf16.mxu0 0
  %4172 = vmatmul.mubr.bf16.gmra.mrb[0].mxu0 %v4123
  %v4173 = vpop.f32.mrb[0].mxu0
  %v4174 = vadd.f32 %v4106, %v4173
  %v4175 = vpop.f32.mrb[0].mxu0
  %v4176 = vpop.f32.mrb[0].mxu0
  %v4177 = vadd.f32 %v4106, %v4176
  %v4178 = vpop.f32.mrb[0].mxu0
  %4179 = vmatprep.mubr.bf16.mxu0 0
  %4180 = vmatmul.mubr.bf16.gmra.mrb[0].mxu0 %v4126
  %v4181 = vpop.f32.mrb[0].mxu0
  %v4182 = vadd.f32 %v4106, %v4181
  %v4183 = vpop.f32.mrb[0].mxu0
  %v4184 = vpop.f32.mrb[0].mxu0
  %v4185 = vadd.f32 %v4106, %v4184
  %v4186 = vpop.f32.mrb[0].mxu0
  %4187 = vmatprep.mubr.bf16.mxu0 0
  %4188 = vmatmul.mubr.bf16.gmra.mrb[0].mxu0 %v4129
  %v4189 = vpop.f32.mrb[0].mxu0
  %v4190 = vadd.f32 %v4106, %v4189
  %v4191 = vpop.f32.mrb[0].mxu0
  %v4192 = vpop.f32.mrb[0].mxu0
  %v4193 = vadd.f32 %v4106, %v4192
  %v4194 = vpop.f32.mrb[0].mxu0
  %4195 = vdwg.mxu0
  %v4196 = vld [vmem:[%s8] sm:$0xf]
  %v4197 = vld [vmem:[%s8 + $0x4] sm:$0xf]
  %v4198 = vld [vmem:[%s8 + $0x8] sm:$0xf]
  %v4199 = vld [vmem:[%s8 + $0xc] sm:$0xf]
  %v4200 = vlaneseq
  %v4201 = vshrl.u32 %v4200, 7
  %v4202 = vsub.s32 2, %v4201
  %v4203 = vrot.slane %v3966, %v4202
  %v4208 = vunpack.c.l.b16 %v4196
  %v4209 = vunpack.c.l.b16 %v4197
  %v4210 = vunpack.c.l.b16 %v4198
  %v4211 = vunpack.c.l.b16 %v4199
  %v4212 = vpack.c.b16 %v4209, %v4208
  %v4213 = vpack.c.b16 %v4211, %v4210
  %4216 = vmatprep.subr.bf16.mxu0 0
  %4217 = vmatpush1.bf16.msra.mxu0 %v4212
  %4218 = vmatprep.subr.bf16.mxu0 0
  %4219 = vmatpush1.bf16.msra.mxu0 %v4213
  %4220 = vmatprep.subr.bf16.mxu0 0
  %4221 = vmatpush1.bf16.msra.mxu0 0
  %4222 = vmatprep.subr.bf16.mxu0 0
  %4223 = vmatpush1.bf16.msra.mxu0 0
  %4224 = vmatprep.subr.bf16.mxu0 0
  %4225 = vmatpush1.bf16.msra.mxu0 0
  %4226 = vmatprep.subr.bf16.mxu0 0
  %4227 = vmatpush1.bf16.msra.mxu0 0
  %4228 = vmatprep.subr.bf16.mxu0 0
  %4229 = vmatpush1.bf16.msra.mxu0 0
  %4230 = vmatprep.subr.bf16.mxu0 0
  %4231 = vmatpush1.bf16.msra.mxu0 0
  %4232 = vmatprep.subr.bf16.mxu0 0
  %4233 = vmatpush1.bf16.msra.mxu0 0
  %4234 = vmatprep.subr.bf16.mxu0 0
  %4235 = vmatpush1.bf16.msra.mxu0 0
  %4236 = vmatprep.subr.bf16.mxu0 0
  %4237 = vmatpush1.bf16.msra.mxu0 0
  %4238 = vmatprep.subr.bf16.mxu0 0
  %4239 = vmatpush1.bf16.msra.mxu0 0
  %4240 = vmatprep.subr.bf16.mxu0 0
  %4241 = vmatpush1.bf16.msra.mxu0 0
  %4242 = vmatprep.subr.bf16.mxu0 0
  %4243 = vmatpush1.bf16.msra.mxu0 0
  %4244 = vmatprep.subr.bf16.mxu0 0
  %4245 = vmatpush1.bf16.msra.mxu0 0
  %4246 = vmatprep.subr.bf16.mxu0 0
  %4247 = vmatpush1.bf16.msra.mxu0 0
  %4248 = vmatprep.mubr.bf16.mxu0 0
  %4249 = vmatmul.mubr.bf16.gmra.mrb[0].mxu0 %v4120
  %v4250 = vpop.f32.mrb[0].mxu0
  %v4251 = vadd.f32 %v4203, %v4250
  %v4252 = vpop.f32.mrb[0].mxu0
  %v4253 = vpop.f32.mrb[0].mxu0
  %v4254 = vadd.f32 %v4203, %v4253
  %v4255 = vpop.f32.mrb[0].mxu0
  %4256 = vmatprep.mubr.bf16.mxu0 0
  %4257 = vmatmul.mubr.bf16.gmra.mrb[0].mxu0 %v4123
  %v4258 = vpop.f32.mrb[0].mxu0
  %v4259 = vadd.f32 %v4203, %v4258
  %v4260 = vpop.f32.mrb[0].mxu0
  %v4261 = vpop.f32.mrb[0].mxu0
  %v4262 = vadd.f32 %v4203, %v4261
  %v4263 = vpop.f32.mrb[0].mxu0
  %4264 = vmatprep.mubr.bf16.mxu0 0
  %4265 = vmatmul.mubr.bf16.gmra.mrb[0].mxu0 %v4126
  %v4266 = vpop.f32.mrb[0].mxu0
  %v4267 = vadd.f32 %v4203, %v4266
  %v4268 = vpop.f32.mrb[0].mxu0
  %v4269 = vpop.f32.mrb[0].mxu0
  %v4270 = vadd.f32 %v4203, %v4269
  %v4271 = vpop.f32.mrb[0].mxu0
  %4272 = vmatprep.mubr.bf16.mxu0 0
  %4273 = vmatmul.mubr.bf16.gmra.mrb[0].mxu0 %v4129
  %v4274 = vpop.f32.mrb[0].mxu0
  %v4275 = vadd.f32 %v4203, %v4274
  %v4276 = vpop.f32.mrb[0].mxu0
  %v4277 = vpop.f32.mrb[0].mxu0
  %v4278 = vadd.f32 %v4203, %v4277
  %v4279 = vpop.f32.mrb[0].mxu0
  %4280 = vdwg.mxu0
  %v4281 = vmax.f32 %v4251, 0.0
  %v4282 = vmax.f32 %v4254, 0.0
  %v4283 = vmax.f32 %v4259, 0.0
  %v4284 = vmax.f32 %v4262, 0.0
  %v4285 = vmax.f32 %v4267, 0.0
  %v4286 = vmax.f32 %v4270, 0.0
  %v4287 = vmax.f32 %v4275, 0.0
  %v4288 = vmax.f32 %v4278, 0.0
  %v4289 = vpack.c.bf16 %v4282, %v4281
  %v4290 = vpack.c.bf16 %v4284, %v4283
  %v4291 = vpack.c.bf16 %v4286, %v4285
  %v4292 = vpack.c.bf16 %v4288, %v4287
  %v4293 = vld [vmem:[%s9] sm:$0xf]
  %v4294 = vld [vmem:[%s9 + $0x4] sm:$0xf]
  %v4295 = vld [vmem:[%s9 + $0x8] sm:$0xf]
  %v4296 = vld [vmem:[%s9 + $0xc] sm:$0xf]
  %v4297 = vlaneseq
  %v4298 = vshrl.u32 %v4297, 7
  %v4299 = vsub.s32 4, %v4298
  %v4300 = vrot.slane %v3966, %v4299
  %v4305 = vunpack.c.l.b16 %v4293
  %v4306 = vunpack.c.l.b16 %v4294
  %v4307 = vunpack.c.l.b16 %v4295
  %v4308 = vunpack.c.l.b16 %v4296
  %v4309 = vpack.c.b16 %v4306, %v4305
  %v4310 = vpack.c.b16 %v4308, %v4307
  %v4314 = vsel %vm267, %v4289, 0
  %v4317 = vsel %vm267, %v4290, 0
  %v4320 = vsel %vm267, %v4291, 0
  %v4323 = vsel %vm267, %v4292, 0
  %4325 = vmatprep.subr.bf16.mxu0 0
  %4326 = vmatpush1.bf16.msra.mxu0 %v4309
  %4327 = vmatprep.subr.bf16.mxu0 0
  %4328 = vmatpush1.bf16.msra.mxu0 %v4310
  %4329 = vmatprep.subr.bf16.mxu0 0
  %4330 = vmatpush1.bf16.msra.mxu0 0
  %4331 = vmatprep.subr.bf16.mxu0 0
  %4332 = vmatpush1.bf16.msra.mxu0 0
  %4333 = vmatprep.subr.bf16.mxu0 0
  %4334 = vmatpush1.bf16.msra.mxu0 0
  %4335 = vmatprep.subr.bf16.mxu0 0
  %4336 = vmatpush1.bf16.msra.mxu0 0
  %4337 = vmatprep.subr.bf16.mxu0 0
  %4338 = vmatpush1.bf16.msra.mxu0 0
  %4339 = vmatprep.subr.bf16.mxu0 0
  %4340 = vmatpush1.bf16.msra.mxu0 0
  %4341 = vmatprep.subr.bf16.mxu0 0
  %4342 = vmatpush1.bf16.msra.mxu0 0
  %4343 = vmatprep.subr.bf16.mxu0 0
  %4344 = vmatpush1.bf16.msra.mxu0 0
  %4345 = vmatprep.subr.bf16.mxu0 0
  %4346 = vmatpush1.bf16.msra.mxu0 0
  %4347 = vmatprep.subr.bf16.mxu0 0
  %4348 = vmatpush1.bf16.msra.mxu0 0
  %4349 = vmatprep.subr.bf16.mxu0 0
  %4350 = vmatpush1.bf16.msra.mxu0 0
  %4351 = vmatprep.subr.bf16.mxu0 0
  %4352 = vmatpush1.bf16.msra.mxu0 0
  %4353 = vmatprep.subr.bf16.mxu0 0
  %4354 = vmatpush1.bf16.msra.mxu0 0
  %4355 = vmatprep.subr.bf16.mxu0 0
  %4356 = vmatpush1.bf16.msra.mxu0 0
  %4357 = vmatprep.mubr.bf16.mxu0 0
  %4358 = vmatmul.mubr.bf16.gmra.mrb[0].mxu0 %v4314
  %v4359 = vpop.f32.mrb[0].mxu0
  %v4360 = vadd.f32 %v4300, %v4359
  %v4361 = vpop.f32.mrb[0].mxu0
  %v4362 = vpop.f32.mrb[0].mxu0
  %v4363 = vadd.f32 %v4300, %v4362
  %v4364 = vpop.f32.mrb[0].mxu0
  %4365 = vmatprep.mubr.bf16.mxu0 0
  %4366 = vmatmul.mubr.bf16.gmra.mrb[0].mxu0 %v4317
  %v4367 = vpop.f32.mrb[0].mxu0
  %v4368 = vadd.f32 %v4300, %v4367
  %v4369 = vpop.f32.mrb[0].mxu0
  %v4370 = vpop.f32.mrb[0].mxu0
  %v4371 = vadd.f32 %v4300, %v4370
  %v4372 = vpop.f32.mrb[0].mxu0
  %4373 = vmatprep.mubr.bf16.mxu0 0
  %4374 = vmatmul.mubr.bf16.gmra.mrb[0].mxu0 %v4320
  %v4375 = vpop.f32.mrb[0].mxu0
  %v4376 = vadd.f32 %v4300, %v4375
  %v4377 = vpop.f32.mrb[0].mxu0
  %v4378 = vpop.f32.mrb[0].mxu0
  %v4379 = vadd.f32 %v4300, %v4378
  %v4380 = vpop.f32.mrb[0].mxu0
  %4381 = vmatprep.mubr.bf16.mxu0 0
  %4382 = vmatmul.mubr.bf16.gmra.mrb[0].mxu0 %v4323
  %v4383 = vpop.f32.mrb[0].mxu0
  %v4384 = vadd.f32 %v4300, %v4383
  %v4385 = vpop.f32.mrb[0].mxu0
  %v4386 = vpop.f32.mrb[0].mxu0
  %v4387 = vadd.f32 %v4300, %v4386
  %v4388 = vpop.f32.mrb[0].mxu0
  %4389 = vdwg.mxu0
  %v4390 = vadd.f32 %v4166, %v4360
  %v4391 = vadd.f32 %v4169, %v4363
  %v4392 = vadd.f32 %v4174, %v4368
  %v4393 = vadd.f32 %v4177, %v4371
  %v4394 = vadd.f32 %v4182, %v4376
  %v4395 = vadd.f32 %v4185, %v4379
  %v4396 = vadd.f32 %v4190, %v4384
  %v4397 = vadd.f32 %v4193, %v4387
  %4398 = vst [vmem:[%s11] sm:$0xff] %v4390
  %4399 = vst [vmem:[%s11 + $0x8] sm:$0xff] %v4391
  %4400 = vst [vmem:[%s11 + $0x10] sm:$0xff] %v4392
  %4401 = vst [vmem:[%s11 + $0x18] sm:$0xff] %v4393
  %4402 = vst [vmem:[%s11 + $0x20] sm:$0xff] %v4394
  %4403 = vst [vmem:[%s11 + $0x28] sm:$0xff] %v4395
  %4404 = vst [vmem:[%s11 + $0x30] sm:$0xff] %v4396
  %4405 = vst [vmem:[%s11 + $0x38] sm:$0xff] %v4397
  // Predicated region
  $region46: #{dino_with_lora_forward.1} parent=0 // pred_check
    _
  $region47: #{dino_with_lora_forward.1} parent=0 // pred_check_branch
    %4407 = sbr.rel (0) target = $region49
  $region48: #{dino_with_lora_forward.1} parent=0 // pred_region
    _
  $region49: #{dino_with_lora_forward.1} parent=0 // pred_fallthru
    _
  // Predicated region
  $region50: #{dino_with_lora_forward.1} parent=0 // pred_check
    _
  $region51: #{dino_with_lora_forward.1} parent=0 // pred_check_branch
    %4409 = sbr.rel (0) target = $region53
  $region52: #{dino_with_lora_forward.1} parent=0 // pred_region
    _
  $region53: #{dino_with_lora_forward.1} parent=0 // pred_fallthru
    _

</llo_original>
